<compile_context>
chip_gen: v7x
topology: tpu7x:2x2x1
jax: 0.10.0
libtpu: 0.0.40
codegen_flags: <defaults>
</compile_context>

<pallas_src>
import functools

import jax
import jax.numpy as jnp
from jax import lax
from jax.experimental import pallas as pl
from jax.experimental.pallas import tpu as pltpu

KH = KW = 3   # kernel_size=3
PAD = 1       # padding=1


def _conv_relu_kernel(x_ref, w_ref, o_ref, acc_ref):
    # x_ref:   (1, 1, TH+2, W+2, Cin)  bf16 input row-tile (with halo rows/cols)
    # w_ref:   (KH*KW, Cin, CO_TILE)   bf16 weights for this Cout tile
    # o_ref:   (1, TH, W, CO_TILE)     output tile (lane-dense: CO_TILE >= 128)
    # acc_ref: (TH*W, CO_TILE) f32     VMEM accumulator scratch
    TH = o_ref.shape[1]
    W = o_ref.shape[2]
    Cin = x_ref.shape[-1]

    acc_ref[...] = jnp.zeros_like(acc_ref)
    # 3x3 conv as 9 shifted-window matmuls, f32 accumulation on the MXU.
    # TODO(synk): for very small Cin a K-packed (K = 9*Cin) im2col matmul would
    # fill the MXU better; kept as 9 taps here for robust lowering.
    for kh in range(KH):
        for kw in range(KW):
            patch = x_ref[0, 0, kh:kh + TH, kw:kw + W, :].reshape(TH * W, Cin)
            acc_ref[...] += jnp.dot(patch, w_ref[kh * KW + kw],
                                    preferred_element_type=jnp.float32)
    # is_relu=True in the default module config -> fused ReLU.
    out = jnp.maximum(acc_ref[...], 0.0)
    o_ref[...] = out.reshape(o_ref.shape).astype(o_ref.dtype)


def _round_up(x, m):
    return (x + m - 1) // m * m


def _pick_row_tile(H, W, target_rows=512):
    """Largest divisor of H so the spatial tile has <= target_rows output rows."""
    cap = max(1, target_rows // max(W, 1))
    best = 1
    for th in range(1, H + 1):
        if H % th == 0 and th <= cap:
            best = th
    return best


@functools.partial(jax.jit,
                   static_argnames=("row_tile", "co_tile", "compute_dtype"))
def conv_bn_relu_2d(x_nchw, weight_oihw, *, row_tile=None, co_tile=128,
                    compute_dtype=jnp.bfloat16):
    """ConvBnRelu2d default path: conv3x3 (pad=1, stride=1, no bias) + ReLU."""
    N, Cin, H, W = x_nchw.shape
    Cout = weight_oihw.shape[0]
    assert weight_oihw.shape[1] == Cin
    assert weight_oihw.shape[2] == KH and weight_oihw.shape[3] == KW
    out_dtype = x_nchw.dtype

    assert co_tile % 128 == 0, "co_tile must be lane-dense (multiple of 128)"
    if row_tile is None:
        row_tile = _pick_row_tile(H, W)
    assert H % row_tile == 0, "row_tile must divide H"
    TH = row_tile
    nH = H // TH
    CO_P = _round_up(max(Cout, co_tile), co_tile)
    nCo = CO_P // co_tile
    Wp = W + 2 * PAD
    THp = TH + 2 * PAD

    # ---- glue (plain JAX; fused by XLA under jit) --------------------------
    x_nhwc = jnp.transpose(x_nchw, (0, 2, 3, 1)).astype(compute_dtype)
    x_pad = jnp.pad(x_nhwc, ((0, 0), (PAD, PAD), (PAD, PAD), (0, 0)))
    # Overlapping row tiles (2*PAD halo rows each) so each grid step only
    # DMAs a small (THp, Wp, Cin) block.
    # TODO(synk): fetch the halo in-kernel via manual DMA to avoid the
    # (TH+2)/TH duplicated HBM copy for very large feature maps.
    x_tiles = jnp.stack([x_pad[:, i * TH:i * TH + THp] for i in range(nH)],
                        axis=1)                        # (N, nH, THp, Wp, Cin)

    w = jnp.transpose(weight_oihw, (2, 3, 1, 0))       # (KH, KW, Cin, Cout)
    w = w.reshape(KH * KW, Cin, Cout)                  # k index = kh*KW + kw
    w = jnp.pad(w, ((0, 0), (0, 0), (0, CO_P - Cout))).astype(compute_dtype)

    # ---- pallas call --------------------------------------------------------
    flops = 2 * N * H * W * KH * KW * Cin * CO_P
    bytes_accessed = (x_tiles.size * x_tiles.dtype.itemsize
                      + w.size * w.dtype.itemsize
                      + N * H * W * CO_P * jnp.dtype(out_dtype).itemsize)

    out_nhwc = pl.pallas_call(
        _conv_relu_kernel,
        out_shape=jax.ShapeDtypeStruct((N, H, W, CO_P), out_dtype),
        grid_spec=pltpu.PrefetchScalarGridSpec(
            num_scalar_prefetch=0,
            grid=(N, nCo, nH),   # h innermost -> weight tile stays resident
            in_specs=[
                pl.BlockSpec((1, 1, THp, Wp, Cin),
                             lambda n, co, h: (n, h, 0, 0, 0)),
                pl.BlockSpec((KH * KW, Cin, co_tile),
                             lambda n, co, h: (0, 0, co)),
            ],
            out_specs=pl.BlockSpec((1, TH, W, co_tile),
                                   lambda n, co, h: (n, h, 0, co)),
            scratch_shapes=[pltpu.VMEM((TH * W, co_tile), jnp.float32)],
        ),
        compiler_params=pltpu.CompilerParams(
            dimension_semantics=("parallel", "parallel", "parallel"),
            vmem_limit_bytes=32 * 1024 * 1024,  # explicit; fits v7x 64 MiB/TC
        ),
        cost_estimate=pl.CostEstimate(flops=flops, transcendentals=0,
                                      bytes_accessed=bytes_accessed),
    )(x_tiles, w)

    # Strip channel padding, back to PyTorch NCHW layout.
    return jnp.transpose(out_nhwc[..., :Cout], (0, 3, 1, 2))


# TODO(synk): optional BatchNorm / GroupNorm branches (is_bn / BatchNorm flags)
# are disabled in the module's default config; only the conv+ReLU path is
# implemented here.


if __name__ == "__main__":
    key = jax.random.PRNGKey(0)
    k_x, k_w = jax.random.split(key)

    N, Cin, Cout, H, W = 2, 4, 8, 16, 16
    x = jax.random.normal(k_x, (N, Cin, H, W), dtype=jnp.float32)
    weight = jax.random.normal(k_w, (Cout, Cin, KH, KW), dtype=jnp.float32) * 0.1

    out = conv_bn_relu_2d(x, weight, row_tile=8)   # row_tile=8 -> 2 H-tiles
    out = jax.block_until_ready(out)
    assert out.shape == (N, Cout, H, W)

    # Sanity check vs XLA conv (same semantics as torch Conv2d(bias=False)+ReLU).
    ref = lax.conv_general_dilated(
        x, weight, window_strides=(1, 1), padding=((PAD, PAD), (PAD, PAD)),
        dimension_numbers=("NCHW", "OIHW", "NCHW"))
    ref = jnp.maximum(ref, 0.0)
    # bf16 matmul inputs with f32 accumulation -> loose tolerance.
    max_err = float(jnp.max(jnp.abs(out - ref)))
    assert max_err < 5e-2, f"max abs err {max_err}"

    print("KERNEL_OK")
</pallas_src>

<mosaic_0001>
module attributes {stable_mosaic.version = 11 : i64} {
  func.func @_conv_relu_kernel(%arg0: i32, %arg1: i32, %arg2: i32, %arg3: memref<1x1x10x18x4xbf16, #tpu.memory_space<vmem>>, %arg4: memref<9x4x128xbf16, #tpu.memory_space<vmem>>, %arg5: memref<1x8x16x128xf32, #tpu.memory_space<vmem>>, %arg6: memref<128x128xf32, #tpu.memory_space<vmem>>) attributes {dimension_semantics = [#tpu.dimension_semantics<parallel>, #tpu.dimension_semantics<parallel>, #tpu.dimension_semantics<parallel>], iteration_bounds = array<i64: 2, 1, 2>, scalar_prefetch = 0 : i64, scratch_operands = 1 : i64, tpu.core_type = #tpu.core_type<tc>, window_params = [{transform_indices = @transform_0, window_bounds = array<i64: 1, 1, 10, 18, 4>}, {transform_indices = @transform_1, window_bounds = array<i64: 9, 4, 128>}, {transform_indices = @transform_2, window_bounds = array<i64: 1, 8, 16, 128>}]} {
    %cst = arith.constant 0.000000e+00 : f32
    %0 = vector.broadcast %cst : f32 to vector<128x128xf32>
    %c0 = arith.constant 0 : index
    %c0_0 = arith.constant 0 : index
    %1 = vector.load %arg6[%c0, %c0_0] : memref<128x128xf32, #tpu.memory_space<vmem>>, vector<128x128xf32>
    tpu.vector_store %arg6[%c0, %c0_0], %0 {strides = array<i32>} : memref<128x128xf32, #tpu.memory_space<vmem>>, vector<128x128xf32>,
    %c0_1 = arith.constant 0 : index
    %c0_2 = arith.constant 0 : index
    %c0_3 = arith.constant 0 : index
    %c0_4 = arith.constant 0 : index
    %c0_5 = arith.constant 0 : index
    %2 = vector.load %arg3[%c0_1, %c0_2, %c0_3, %c0_4, %c0_5] : memref<1x1x10x18x4xbf16, #tpu.memory_space<vmem>>, vector<1x1x8x16x4xbf16>
    %3 = vector.shape_cast %2 : vector<1x1x8x16x4xbf16> to vector<8x16x4xbf16>
    %4 = vector.shape_cast %3 : vector<8x16x4xbf16> to vector<128x4xbf16>
    %c0_6 = arith.constant 0 : index
    %c0_7 = arith.constant 0 : index
    %5 = vector.load %arg6[%c0_6, %c0_7] : memref<128x128xf32, #tpu.memory_space<vmem>>, vector<128x128xf32>
    %c0_8 = arith.constant 0 : index
    %c0_9 = arith.constant 0 : index
    %c0_10 = arith.constant 0 : index
    %6 = vector.load %arg4[%c0_8, %c0_9, %c0_10] : memref<9x4x128xbf16, #tpu.memory_space<vmem>>, vector<1x4x128xbf16>
    %7 = vector.shape_cast %6 : vector<1x4x128xbf16> to vector<4x128xbf16>
    %cst_11 = arith.constant dense<0.000000e+00> : vector<128x128xf32>
    %8 = tpu.matmul %4, %7, %cst_11 {dimension_numbers = #tpu.dot_dimension_numbers<[1], [0], [0], [1], [0, 0, 1, 1], [], []>} : vector<128x4xbf16>, vector<4x128xbf16>, vector<128x128xf32> -> vector<128x128xf32>
    %9 = arith.addf %5, %8 : vector<128x128xf32>
    %c0_12 = arith.constant 0 : index
    %c0_13 = arith.constant 0 : index
    %10 = vector.load %arg6[%c0_12, %c0_13] : memref<128x128xf32, #tpu.memory_space<vmem>>, vector<128x128xf32>
    tpu.vector_store %arg6[%c0_12, %c0_13], %9 {strides = array<i32>} : memref<128x128xf32, #tpu.memory_space<vmem>>, vector<128x128xf32>,
    %c0_14 = arith.constant 0 : index
    %c0_15 = arith.constant 0 : index
    %c0_16 = arith.constant 0 : index
    %c1 = arith.constant 1 : index
    %c0_17 = arith.constant 0 : index
    %11 = vector.load %arg3[%c0_14, %c0_15, %c0_16, %c1, %c0_17] : memref<1x1x10x18x4xbf16, #tpu.memory_space<vmem>>, vector<1x1x8x16x4xbf16>
    %12 = vector.shape_cast %11 : vector<1x1x8x16x4xbf16> to vector<8x16x4xbf16>
    %13 = vector.shape_cast %12 : vector<8x16x4xbf16> to vector<128x4xbf16>
    %c0_18 = arith.constant 0 : index
    %c0_19 = arith.constant 0 : index
    %14 = vector.load %arg6[%c0_18, %c0_19] : memref<128x128xf32, #tpu.memory_space<vmem>>, vector<128x128xf32>
    %c1_20 = arith.constant 1 : index
    %c0_21 = arith.constant 0 : index
    %c0_22 = arith.constant 0 : index
    %15 = vector.load %arg4[%c1_20, %c0_21, %c0_22] : memref<9x4x128xbf16, #tpu.memory_space<vmem>>, vector<1x4x128xbf16>
    %16 = vector.shape_cast %15 : vector<1x4x128xbf16> to vector<4x128xbf16>
    %cst_23 = arith.constant dense<0.000000e+00> : vector<128x128xf32>
    %17 = tpu.matmul %13, %16, %cst_23 {dimension_numbers = #tpu.dot_dimension_numbers<[1], [0], [0], [1], [0, 0, 1, 1], [], []>} : vector<128x4xbf16>, vector<4x128xbf16>, vector<128x128xf32> -> vector<128x128xf32>
    %18 = arith.addf %14, %17 : vector<128x128xf32>
    %c0_24 = arith.constant 0 : index
    %c0_25 = arith.constant 0 : index
    %19 = vector.load %arg6[%c0_24, %c0_25] : memref<128x128xf32, #tpu.memory_space<vmem>>, vector<128x128xf32>
    tpu.vector_store %arg6[%c0_24, %c0_25], %18 {strides = array<i32>} : memref<128x128xf32, #tpu.memory_space<vmem>>, vector<128x128xf32>,
    %c0_26 = arith.constant 0 : index
    %c0_27 = arith.constant 0 : index
    %c0_28 = arith.constant 0 : index
    %c2 = arith.constant 2 : index
    %c0_29 = arith.constant 0 : index
    %20 = vector.load %arg3[%c0_26, %c0_27, %c0_28, %c2, %c0_29] : memref<1x1x10x18x4xbf16, #tpu.memory_space<vmem>>, vector<1x1x8x16x4xbf16>
    %21 = vector.shape_cast %20 : vector<1x1x8x16x4xbf16> to vector<8x16x4xbf16>
    %22 = vector.shape_cast %21 : vector<8x16x4xbf16> to vector<128x4xbf16>
    %c0_30 = arith.constant 0 : index
    %c0_31 = arith.constant 0 : index
    %23 = vector.load %arg6[%c0_30, %c0_31] : memref<128x128xf32, #tpu.memory_space<vmem>>, vector<128x128xf32>
    %c2_32 = arith.constant 2 : index
    %c0_33 = arith.constant 0 : index
    %c0_34 = arith.constant 0 : index
    %24 = vector.load %arg4[%c2_32, %c0_33, %c0_34] : memref<9x4x128xbf16, #tpu.memory_space<vmem>>, vector<1x4x128xbf16>
    %25 = vector.shape_cast %24 : vector<1x4x128xbf16> to vector<4x128xbf16>
    %cst_35 = arith.constant dense<0.000000e+00> : vector<128x128xf32>
    %26 = tpu.matmul %22, %25, %cst_35 {dimension_numbers = #tpu.dot_dimension_numbers<[1], [0], [0], [1], [0, 0, 1, 1], [], []>} : vector<128x4xbf16>, vector<4x128xbf16>, vector<128x128xf32> -> vector<128x128xf32>
    %27 = arith.addf %23, %26 : vector<128x128xf32>
    %c0_36 = arith.constant 0 : index
    %c0_37 = arith.constant 0 : index
    %28 = vector.load %arg6[%c0_36, %c0_37] : memref<128x128xf32, #tpu.memory_space<vmem>>, vector<128x128xf32>
    tpu.vector_store %arg6[%c0_36, %c0_37], %27 {strides = array<i32>} : memref<128x128xf32, #tpu.memory_space<vmem>>, vector<128x128xf32>,
    %c0_38 = arith.constant 0 : index
    %c0_39 = arith.constant 0 : index
    %c1_40 = arith.constant 1 : index
    %c0_41 = arith.constant 0 : index
    %c0_42 = arith.constant 0 : index
    %29 = vector.load %arg3[%c0_38, %c0_39, %c1_40, %c0_41, %c0_42] : memref<1x1x10x18x4xbf16, #tpu.memory_space<vmem>>, vector<1x1x8x16x4xbf16>
    %30 = vector.shape_cast %29 : vector<1x1x8x16x4xbf16> to vector<8x16x4xbf16>
    %31 = vector.shape_cast %30 : vector<8x16x4xbf16> to vector<128x4xbf16>
    %c0_43 = arith.constant 0 : index
    %c0_44 = arith.constant 0 : index
    %32 = vector.load %arg6[%c0_43, %c0_44] : memref<128x128xf32, #tpu.memory_space<vmem>>, vector<128x128xf32>
    %c3 = arith.constant 3 : index
    %c0_45 = arith.constant 0 : index
    %c0_46 = arith.constant 0 : index
    %33 = vector.load %arg4[%c3, %c0_45, %c0_46] : memref<9x4x128xbf16, #tpu.memory_space<vmem>>, vector<1x4x128xbf16>
    %34 = vector.shape_cast %33 : vector<1x4x128xbf16> to vector<4x128xbf16>
    %cst_47 = arith.constant dense<0.000000e+00> : vector<128x128xf32>
    %35 = tpu.matmul %31, %34, %cst_47 {dimension_numbers = #tpu.dot_dimension_numbers<[1], [0], [0], [1], [0, 0, 1, 1], [], []>} : vector<128x4xbf16>, vector<4x128xbf16>, vector<128x128xf32> -> vector<128x128xf32>
    %36 = arith.addf %32, %35 : vector<128x128xf32>
    %c0_48 = arith.constant 0 : index
    %c0_49 = arith.constant 0 : index
    %37 = vector.load %arg6[%c0_48, %c0_49] : memref<128x128xf32, #tpu.memory_space<vmem>>, vector<128x128xf32>
    tpu.vector_store %arg6[%c0_48, %c0_49], %36 {strides = array<i32>} : memref<128x128xf32, #tpu.memory_space<vmem>>, vector<128x128xf32>,
    %c0_50 = arith.constant 0 : index
    %c0_51 = arith.constant 0 : index
    %c1_52 = arith.constant 1 : index
    %c1_53 = arith.constant 1 : index
    %c0_54 = arith.constant 0 : index
    %38 = vector.load %arg3[%c0_50, %c0_51, %c1_52, %c1_53, %c0_54] : memref<1x1x10x18x4xbf16, #tpu.memory_space<vmem>>, vector<1x1x8x16x4xbf16>
    %39 = vector.shape_cast %38 : vector<1x1x8x16x4xbf16> to vector<8x16x4xbf16>
    %40 = vector.shape_cast %39 : vector<8x16x4xbf16> to vector<128x4xbf16>
    %c0_55 = arith.constant 0 : index
    %c0_56 = arith.constant 0 : index
    %41 = vector.load %arg6[%c0_55, %c0_56] : memref<128x128xf32, #tpu.memory_space<vmem>>, vector<128x128xf32>
    %c4 = arith.constant 4 : index
    %c0_57 = arith.constant 0 : index
    %c0_58 = arith.constant 0 : index
    %42 = vector.load %arg4[%c4, %c0_57, %c0_58] : memref<9x4x128xbf16, #tpu.memory_space<vmem>>, vector<1x4x128xbf16>
    %43 = vector.shape_cast %42 : vector<1x4x128xbf16> to vector<4x128xbf16>
    %cst_59 = arith.constant dense<0.000000e+00> : vector<128x128xf32>
    %44 = tpu.matmul %40, %43, %cst_59 {dimension_numbers = #tpu.dot_dimension_numbers<[1], [0], [0], [1], [0, 0, 1, 1], [], []>} : vector<128x4xbf16>, vector<4x128xbf16>, vector<128x128xf32> -> vector<128x128xf32>
    %45 = arith.addf %41, %44 : vector<128x128xf32>
    %c0_60 = arith.constant 0 : index
    %c0_61 = arith.constant 0 : index
    %46 = vector.load %arg6[%c0_60, %c0_61] : memref<128x128xf32, #tpu.memory_space<vmem>>, vector<128x128xf32>
    tpu.vector_store %arg6[%c0_60, %c0_61], %45 {strides = array<i32>} : memref<128x128xf32, #tpu.memory_space<vmem>>, vector<128x128xf32>,
    %c0_62 = arith.constant 0 : index
    %c0_63 = arith.constant 0 : index
    %c1_64 = arith.constant 1 : index
    %c2_65 = arith.constant 2 : index
    %c0_66 = arith.constant 0 : index
    %47 = vector.load %arg3[%c0_62, %c0_63, %c1_64, %c2_65, %c0_66] : memref<1x1x10x18x4xbf16, #tpu.memory_space<vmem>>, vector<1x1x8x16x4xbf16>
    %48 = vector.shape_cast %47 : vector<1x1x8x16x4xbf16> to vector<8x16x4xbf16>
    %49 = vector.shape_cast %48 : vector<8x16x4xbf16> to vector<128x4xbf16>
    %c0_67 = arith.constant 0 : index
    %c0_68 = arith.constant 0 : index
    %50 = vector.load %arg6[%c0_67, %c0_68] : memref<128x128xf32, #tpu.memory_space<vmem>>, vector<128x128xf32>
    %c5 = arith.constant 5 : index
    %c0_69 = arith.constant 0 : index
    %c0_70 = arith.constant 0 : index
    %51 = vector.load %arg4[%c5, %c0_69, %c0_70] : memref<9x4x128xbf16, #tpu.memory_space<vmem>>, vector<1x4x128xbf16>
    %52 = vector.shape_cast %51 : vector<1x4x128xbf16> to vector<4x128xbf16>
    %cst_71 = arith.constant dense<0.000000e+00> : vector<128x128xf32>
    %53 = tpu.matmul %49, %52, %cst_71 {dimension_numbers = #tpu.dot_dimension_numbers<[1], [0], [0], [1], [0, 0, 1, 1], [], []>} : vector<128x4xbf16>, vector<4x128xbf16>, vector<128x128xf32> -> vector<128x128xf32>
    %54 = arith.addf %50, %53 : vector<128x128xf32>
    %c0_72 = arith.constant 0 : index
    %c0_73 = arith.constant 0 : index
    %55 = vector.load %arg6[%c0_72, %c0_73] : memref<128x128xf32, #tpu.memory_space<vmem>>, vector<128x128xf32>
    tpu.vector_store %arg6[%c0_72, %c0_73], %54 {strides = array<i32>} : memref<128x128xf32, #tpu.memory_space<vmem>>, vector<128x128xf32>,
    %c0_74 = arith.constant 0 : index
    %c0_75 = arith.constant 0 : index
    %c2_76 = arith.constant 2 : index
    %c0_77 = arith.constant 0 : index
    %c0_78 = arith.constant 0 : index
    %56 = vector.load %arg3[%c0_74, %c0_75, %c2_76, %c0_77, %c0_78] : memref<1x1x10x18x4xbf16, #tpu.memory_space<vmem>>, vector<1x1x8x16x4xbf16>
    %57 = vector.shape_cast %56 : vector<1x1x8x16x4xbf16> to vector<8x16x4xbf16>
    %58 = vector.shape_cast %57 : vector<8x16x4xbf16> to vector<128x4xbf16>
    %c0_79 = arith.constant 0 : index
    %c0_80 = arith.constant 0 : index
    %59 = vector.load %arg6[%c0_79, %c0_80] : memref<128x128xf32, #tpu.memory_space<vmem>>, vector<128x128xf32>
    %c6 = arith.constant 6 : index
    %c0_81 = arith.constant 0 : index
    %c0_82 = arith.constant 0 : index
    %60 = vector.load %arg4[%c6, %c0_81, %c0_82] : memref<9x4x128xbf16, #tpu.memory_space<vmem>>, vector<1x4x128xbf16>
    %61 = vector.shape_cast %60 : vector<1x4x128xbf16> to vector<4x128xbf16>
    %cst_83 = arith.constant dense<0.000000e+00> : vector<128x128xf32>
    %62 = tpu.matmul %58, %61, %cst_83 {dimension_numbers = #tpu.dot_dimension_numbers<[1], [0], [0], [1], [0, 0, 1, 1], [], []>} : vector<128x4xbf16>, vector<4x128xbf16>, vector<128x128xf32> -> vector<128x128xf32>
    %63 = arith.addf %59, %62 : vector<128x128xf32>
    %c0_84 = arith.constant 0 : index
    %c0_85 = arith.constant 0 : index
    %64 = vector.load %arg6[%c0_84, %c0_85] : memref<128x128xf32, #tpu.memory_space<vmem>>, vector<128x128xf32>
    tpu.vector_store %arg6[%c0_84, %c0_85], %63 {strides = array<i32>} : memref<128x128xf32, #tpu.memory_space<vmem>>, vector<128x128xf32>,
    %c0_86 = arith.constant 0 : index
    %c0_87 = arith.constant 0 : index
    %c2_88 = arith.constant 2 : index
    %c1_89 = arith.constant 1 : index
    %c0_90 = arith.constant 0 : index
    %65 = vector.load %arg3[%c0_86, %c0_87, %c2_88, %c1_89, %c0_90] : memref<1x1x10x18x4xbf16, #tpu.memory_space<vmem>>, vector<1x1x8x16x4xbf16>
    %66 = vector.shape_cast %65 : vector<1x1x8x16x4xbf16> to vector<8x16x4xbf16>
    %67 = vector.shape_cast %66 : vector<8x16x4xbf16> to vector<128x4xbf16>
    %c0_91 = arith.constant 0 : index
    %c0_92 = arith.constant 0 : index
    %68 = vector.load %arg6[%c0_91, %c0_92] : memref<128x128xf32, #tpu.memory_space<vmem>>, vector<128x128xf32>
    %c7 = arith.constant 7 : index
    %c0_93 = arith.constant 0 : index
    %c0_94 = arith.constant 0 : index
    %69 = vector.load %arg4[%c7, %c0_93, %c0_94] : memref<9x4x128xbf16, #tpu.memory_space<vmem>>, vector<1x4x128xbf16>
    %70 = vector.shape_cast %69 : vector<1x4x128xbf16> to vector<4x128xbf16>
    %cst_95 = arith.constant dense<0.000000e+00> : vector<128x128xf32>
    %71 = tpu.matmul %67, %70, %cst_95 {dimension_numbers = #tpu.dot_dimension_numbers<[1], [0], [0], [1], [0, 0, 1, 1], [], []>} : vector<128x4xbf16>, vector<4x128xbf16>, vector<128x128xf32> -> vector<128x128xf32>
    %72 = arith.addf %68, %71 : vector<128x128xf32>
    %c0_96 = arith.constant 0 : index
    %c0_97 = arith.constant 0 : index
    %73 = vector.load %arg6[%c0_96, %c0_97] : memref<128x128xf32, #tpu.memory_space<vmem>>, vector<128x128xf32>
    tpu.vector_store %arg6[%c0_96, %c0_97], %72 {strides = array<i32>} : memref<128x128xf32, #tpu.memory_space<vmem>>, vector<128x128xf32>,
    %c0_98 = arith.constant 0 : index
    %c0_99 = arith.constant 0 : index
    %c2_100 = arith.constant 2 : index
    %c2_101 = arith.constant 2 : index
    %c0_102 = arith.constant 0 : index
    %74 = vector.load %arg3[%c0_98, %c0_99, %c2_100, %c2_101, %c0_102] : memref<1x1x10x18x4xbf16, #tpu.memory_space<vmem>>, vector<1x1x8x16x4xbf16>
    %75 = vector.shape_cast %74 : vector<1x1x8x16x4xbf16> to vector<8x16x4xbf16>
    %76 = vector.shape_cast %75 : vector<8x16x4xbf16> to vector<128x4xbf16>
    %c0_103 = arith.constant 0 : index
    %c0_104 = arith.constant 0 : index
    %77 = vector.load %arg6[%c0_103, %c0_104] : memref<128x128xf32, #tpu.memory_space<vmem>>, vector<128x128xf32>
    %c8 = arith.constant 8 : index
    %c0_105 = arith.constant 0 : index
    %c0_106 = arith.constant 0 : index
    %78 = vector.load %arg4[%c8, %c0_105, %c0_106] : memref<9x4x128xbf16, #tpu.memory_space<vmem>>, vector<1x4x128xbf16>
    %79 = vector.shape_cast %78 : vector<1x4x128xbf16> to vector<4x128xbf16>
    %cst_107 = arith.constant dense<0.000000e+00> : vector<128x128xf32>
    %80 = tpu.matmul %76, %79, %cst_107 {dimension_numbers = #tpu.dot_dimension_numbers<[1], [0], [0], [1], [0, 0, 1, 1], [], []>} : vector<128x4xbf16>, vector<4x128xbf16>, vector<128x128xf32> -> vector<128x128xf32>
    %81 = arith.addf %77, %80 : vector<128x128xf32>
    %c0_108 = arith.constant 0 : index
    %c0_109 = arith.constant 0 : index
    %82 = vector.load %arg6[%c0_108, %c0_109] : memref<128x128xf32, #tpu.memory_space<vmem>>, vector<128x128xf32>
    tpu.vector_store %arg6[%c0_108, %c0_109], %81 {strides = array<i32>} : memref<128x128xf32, #tpu.memory_space<vmem>>, vector<128x128xf32>,
    %c0_110 = arith.constant 0 : index
    %c0_111 = arith.constant 0 : index
    %83 = vector.load %arg6[%c0_110, %c0_111] : memref<128x128xf32, #tpu.memory_space<vmem>>, vector<128x128xf32>
    %cst_112 = arith.constant 0.000000e+00 : f32
    %84 = vector.broadcast %cst_112 : f32 to vector<128x128xf32>
    %85 = arith.maximumf %83, %84 : vector<128x128xf32>
    %86 = vector.shape_cast %85 : vector<128x128xf32> to vector<1x8x16x128xf32>
    %c0_113 = arith.constant 0 : index
    %c0_114 = arith.constant 0 : index
    %c0_115 = arith.constant 0 : index
    %c0_116 = arith.constant 0 : index
    %87 = vector.load %arg5[%c0_113, %c0_114, %c0_115, %c0_116] : memref<1x8x16x128xf32, #tpu.memory_space<vmem>>, vector<1x8x16x128xf32>
    tpu.vector_store %arg5[%c0_113, %c0_114, %c0_115, %c0_116], %86 {strides = array<i32>} : memref<1x8x16x128xf32, #tpu.memory_space<vmem>>, vector<1x8x16x128xf32>,
    return
  }
  func.func @transform_0(%arg0: i32, %arg1: i32, %arg2: i32) -> (i32, i32, i32, i32, i32) {
    %c0_i32 = arith.constant 0 : i32
    %c0_i32_0 = arith.constant 0 : i32
    %c0_i32_1 = arith.constant 0 : i32
    %c0_i32_2 = arith.constant 0 : i32
    return %arg0, %arg2, %c0_i32, %c0_i32_0, %c0_i32_1 : i32, i32, i32, i32, i32
  }
  func.func @transform_1(%arg0: i32, %arg1: i32, %arg2: i32) -> (i32, i32, i32) {
    %c0_i32 = arith.constant 0 : i32
    %c0_i32_0 = arith.constant 0 : i32
    %c0_i32_1 = arith.constant 0 : i32
    return %c0_i32, %c0_i32_0, %arg1 : i32, i32, i32
  }
  func.func @transform_2(%arg0: i32, %arg1: i32, %arg2: i32) -> (i32, i32, i32, i32) {
    %c0_i32 = arith.constant 0 : i32
    %c0_i32_0 = arith.constant 0 : i32
    return %arg0, %arg2, %c0_i32, %arg1 : i32, i32, i32, i32
  }
}

</mosaic_0001>

<llo_original>
// kernel: conv_bn_relu_2d.1
$region0: #{conv_bn_relu_2d.1}
  #allocation0 [shape = 'u32[]', space=smem, size = 0x4, offset = 0x4, fixed_abs, tag = 'smem constant byte address 0x4 - core index']
  #allocation1 [shape = 'u32[144,128]{1,0:T(1,128)}', space=vmem, size = 0x12000, scoped, tag = 'internal scratch']
  #allocation2 [shape = 'f32[128,128]{1,0:T(8,128)}', space=vmem, size = 0x10000, scoped, tag = 'scratch operand']
  %s0 = inlined_call_operand.vmem [shape: bf16[2,2,10,18,4], index: 0, kind: input, shape index: {}]
  %s1 = inlined_call_operand.vmem [shape: bf16[9,4,128], index: 1, kind: input, shape index: {}]
  %s2 = inlined_call_operand.vmem [shape: f32[2,16,16,128], index: 2, kind: output, shape index: {}]
  %s3 = sld [smem:[#allocation0]]
  $region41: #{conv_bn_relu_2d.1} parent=0
    _
  %s5 = ssub.s32 1, %s3
  %s6 = scalar_select 0, %s5, %s3
  loop: start=0, step=1, limit=6
  $region2: #{conv_bn_relu_2d.1} parent=0 // loop_pre_header
    _
  $region3: #{conv_bn_relu_2d.1} parent=0 // loop_header
    %s8 = sphi 0, %s12
    %p9 = scmp.ge.s32.totalorder %s8, 6
    %s15 = sphi 0, %s34
    %s16 = sphi 0, %s30
    %s17 = sphi 0, %s26
    %s18 = sphi 0, %s15
    %s19 = sphi 0, %s16
    %s20 = sphi 0, %s17
    %s21 = sphi 0, %s18
    %s22 = sphi 0, %s19
    %s23 = sphi 0, %s20
    %s39 = sphi 0, %s41
    %s42 = sphi 0, %s39
    %s43 = sphi 0, %s42
    %s59 = sphi 0, %s43
    %s65 = sphi 0, %s67
    %s68 = sphi 0, %s65
    %s69 = sphi 0, %s68
    %s85 = sphi 0, %s69
    %s95 = sphi 0, %s97
    %s98 = sphi 0, %s95
    %s99 = sphi 0, %s98
    %s115 = sphi 0, %s99
  $region4: #{conv_bn_relu_2d.1} parent=0 // loop_header_branch
    %11 = sbr.rel (%p9) target = $region8
  $region5: #{conv_bn_relu_2d.1} parent=0 // loop_body
    %s13 = ssub.s32 %s8, 1
    %s14 = ssub.s32 %s8, 2
    %s24 = sadd.s32 1, %s17
    %p25 = scmp.ge.s32.totalorder %s24, 2
    %s26 = scalar_select %p25, 0, %s24
    %s27 = sadd.s32 1, %s16
    %s28 = scalar_select %p25, %s27, %s16
    %p29 = scmp.ge.s32.totalorder %s28, 1
    %s30 = scalar_select %p29, 0, %s28
    %s31 = sadd.s32 1, %s15
    %s32 = scalar_select %p29, %s31, %s15
    %p33 = scmp.ge.s32.totalorder %s32, 2
    %s34 = scalar_select %p33, 0, %s32
    %s35 = ssub.s32 %s15, %s34
    %s36 = ssub.s32 %s17, %s26
    %s37 = sor.u32 %s35, %s36
    %p38 = scmp.eq.s32.totalorder %s37, 0
    %s40 = sadd.s32 %s39, 1
    %s41 = scalar_select %p38, %s39, %s40
    %p44 = pneg %p38
    %p45 = scmp.eq.s32.totalorder %s8, 3
    %p46 = por %p44, %p45
    %p47 = scmp.ne.s32.totalorder %s39, %s42
    %p48 = scmp.eq.s32.totalorder %s8, 0
    %p49 = por %p47, %p48
    %p50 = scmp.ne.s32.totalorder %s39, %s42
    %p51 = scmp.eq.s32.totalorder %s13, 3
    %p52 = por %p50, %p51
    %p53 = scmp.ne.s32.totalorder %s42, %s43
    %p54 = scmp.eq.s32.totalorder %s13, 0
    %p55 = por %p53, %p54
    %p56 = scmp.ne.s32.totalorder %s42, %s43
    %p57 = scmp.eq.s32.totalorder %s14, 3
    %p58 = por %p56, %p57
    %p60 = scmp.ne.s32.totalorder %s43, %s59
    %p61 = scmp.eq.s32.totalorder %s14, 0
    %p62 = por %p60, %p61
    %s63 = ssub.s32 %s16, %s30
    %p64 = scmp.eq.s32.totalorder %s63, 0
    %s66 = sadd.s32 %s65, 1
    %s67 = scalar_select %p64, %s65, %s66
    %p70 = pneg %p64
    %p71 = scmp.eq.s32.totalorder %s8, 3
    %p72 = por %p70, %p71
    %p73 = scmp.ne.s32.totalorder %s65, %s68
    %p74 = scmp.eq.s32.totalorder %s8, 0
    %p75 = por %p73, %p74
    %p76 = scmp.ne.s32.totalorder %s65, %s68
    %p77 = scmp.eq.s32.totalorder %s13, 3
    %p78 = por %p76, %p77
    %p79 = scmp.ne.s32.totalorder %s68, %s69
    %p80 = scmp.eq.s32.totalorder %s13, 0
    %p81 = por %p79, %p80
    %p82 = scmp.ne.s32.totalorder %s68, %s69
    %p83 = scmp.eq.s32.totalorder %s14, 3
    %p84 = por %p82, %p83
    %p86 = scmp.ne.s32.totalorder %s69, %s85
    %p87 = scmp.eq.s32.totalorder %s14, 0
    %p88 = por %p86, %p87
    %s89 = ssub.s32 %s15, %s34
    %s90 = ssub.s32 %s17, %s26
    %s91 = sor.u32 %s89, %s90
    %s92 = ssub.s32 %s16, %s30
    %s93 = sor.u32 %s91, %s92
    %p94 = scmp.eq.s32.totalorder %s93, 0
    %s96 = sadd.s32 %s95, 1
    %s97 = scalar_select %p94, %s95, %s96
    %p100 = pneg %p94
    %p101 = scmp.eq.s32.totalorder %s8, 3
    %p102 = por %p100, %p101
    %p103 = scmp.ne.s32.totalorder %s95, %s98
    %p104 = scmp.eq.s32.totalorder %s8, 0
    %p105 = por %p103, %p104
    %p106 = scmp.ne.s32.totalorder %s95, %s98
    %p107 = scmp.eq.s32.totalorder %s13, 3
    %p108 = por %p106, %p107
    %p109 = scmp.ne.s32.totalorder %s98, %s99
    %p110 = scmp.eq.s32.totalorder %s13, 0
    %p111 = por %p109, %p110
    %p112 = scmp.ne.s32.totalorder %s98, %s99
    %p113 = scmp.eq.s32.totalorder %s14, 3
    %p114 = por %p112, %p113
    %p116 = scmp.ne.s32.totalorder %s99, %s115
    %p117 = scmp.eq.s32.totalorder %s14, 0
    %p118 = por %p116, %p117
    %p119 = scmp.le.s32.totalorder 1, %s8
    %p120 = scmp.lt.s32.totalorder %s8, 5
    %p121 = pnand %p119, %p120
    %p122 = pneg %p121
    // Predicated region
    $region9: #{conv_bn_relu_2d.1} parent=5 // pred_check
      _
    $region10: #{conv_bn_relu_2d.1} parent=5 // pred_check_branch
      %124 = sbr.rel (%p121) target = $region12
    $region11: #{conv_bn_relu_2d.1} parent=5 // pred_region
      %s125 = ssub.s32 %s8, 1
      // Predicated region
      $region13: #{conv_bn_relu_2d.1} parent=11 // pred_check
        %p126 = pneg %p81
      $region14: #{conv_bn_relu_2d.1} parent=11 // pred_check_branch
        %128 = sbr.rel (%p126) target = $region16
      $region15: #{conv_bn_relu_2d.1} parent=11 // pred_region
        %p129 = scmp.lt.s32.totalorder %s19, 0
        %s130 = scalar_select %p129, %s19, 0
        %s131 = smul.addr %s130, 2
        %s132 = scalar_lea.vmem %s1, %s131
      $region16: #{conv_bn_relu_2d.1} parent=11 // pred_fallthru
        _
    $region12: #{conv_bn_relu_2d.1} parent=5 // pred_fallthru
      _
    %p133 = scmp.lt.s32.totalorder %s8, 4
    // Predicated region
    $region17: #{conv_bn_relu_2d.1} parent=5 // pred_check
      %p134 = pneg %p133
    $region18: #{conv_bn_relu_2d.1} parent=5 // pred_check_branch
      %136 = sbr.rel (%p134) target = $region20
    $region19: #{conv_bn_relu_2d.1} parent=5 // pred_region
      // Predicated region
      $region21: #{conv_bn_relu_2d.1} parent=19 // pred_check
        %p137 = pneg %p49
      $region22: #{conv_bn_relu_2d.1} parent=19 // pred_check_branch
        %139 = sbr.rel (%p137) target = $region24
      $region23: #{conv_bn_relu_2d.1} parent=19 // pred_region
        %p140 = scmp.lt.s32.totalorder %s15, 1
        %s141 = scalar_select %p140, %s15, 1
        %p142 = scmp.lt.s32.totalorder %s17, 1
        %s143 = scalar_select %p142, %s17, 1
        %s144 = smul.addr %s143, 30
        %s145 = smul.addr %s141, 60
        %s146 = sadd.s32 %s144, %s145
        %s147 = smul.addr %s146, 4
        %s148 = scalar_lea.vmem %s0, %s147
      $region24: #{conv_bn_relu_2d.1} parent=19 // pred_fallthru
        _
    $region20: #{conv_bn_relu_2d.1} parent=5 // pred_fallthru
      _
    %p149 = scmp.le.s32.totalorder 1, %s8
    %p150 = scmp.lt.s32.totalorder %s8, 5
    %p151 = pnand %p149, %p150
    %p152 = pneg %p151
    // Predicated region
    $region25: #{conv_bn_relu_2d.1} parent=5 // pred_check
      _
    $region26: #{conv_bn_relu_2d.1} parent=5 // pred_check_branch
      %154 = sbr.rel (%p151) target = $region28
    $region27: #{conv_bn_relu_2d.1} parent=5 // pred_region
      %s155 = ssub.s32 %s8, 1
      %p156 = scmp.lt.s32.totalorder %s18, 1
      %s157 = scalar_select %p156, %s18, 1
      %p158 = scmp.lt.s32.totalorder %s20, 1
      %s159 = scalar_select %p158, %s20, 1
      %s160 = smul.addr %s159, 30
      %s161 = smul.addr %s157, 60
      %s162 = sadd.s32 %s160, %s161
      %s163 = smul.addr %s162, 4
      %s164 = scalar_lea.vmem %s0, %s163
      %p165 = pneg %p55
      %p166 = pneg %p52
      %p167 = scmp.lt.s32.totalorder %s19, 0
      %s168 = scalar_select %p167, %s19, 0
      %s169 = smul.addr %s168, 2
      %s170 = scalar_lea.vmem %s1, %s169
      %p171 = pneg %p81
      %p172 = pneg %p78
      %p173 = pneg %p111
      %p174 = pneg %p108
      %s175 = smul.u32 8, %s20
      %p176 = scmp.lt.s32.totalorder %s18, 1
      %s177 = scalar_select %p176, %s18, 1
      %p178 = scmp.lt.s32.totalorder %s175, 15
      %s179 = scalar_select %p178, %s175, 15
      %p180 = scmp.lt.s32.totalorder %s19, 0
      %s181 = scalar_select %p180, %s19, 0
      %s182 = smul.addr %s179, 2
      %s183 = sadd.s32 %s181, %s182
      %s184 = smul.addr %s177, 32
      %s185 = sadd.s32 %s183, %s184
      %s186 = smul.addr %s185, 8
      %s187 = scalar_lea.vmem %s2, %s186
      %p188 = scmp.lt.s32.totalorder %s18, 1
      %s189 = scalar_select %p188, %s18, 1
      %p190 = scmp.lt.s32.totalorder %s20, 1
      %s191 = scalar_select %p190, %s20, 1
      %s192 = smul.addr %s191, 30
      %s193 = smul.addr %s189, 60
      %s194 = sadd.s32 %s192, %s193
      %s195 = smul.addr %s194, 4
      %s196 = scalar_lea.vmem %s0, %s195
      %p197 = scmp.lt.s32.totalorder %s19, 0
      %s198 = scalar_select %p197, %s19, 0
      %s199 = smul.addr %s198, 2
      %s200 = scalar_lea.vmem %s1, %s199
      %s201 = smul.u32 8, %s20
      %p202 = scmp.lt.s32.totalorder %s18, 1
      %s203 = scalar_select %p202, %s18, 1
      %p204 = scmp.lt.s32.totalorder %s201, 15
      %s205 = scalar_select %p204, %s201, 15
      %p206 = scmp.lt.s32.totalorder %s19, 0
      %s207 = scalar_select %p206, %s19, 0
      %s208 = smul.addr %s205, 2
      %s209 = sadd.s32 %s207, %s208
      %s210 = smul.addr %s203, 32
      %s211 = sadd.s32 %s209, %s210
      %s212 = smul.addr %s211, 8
      %s213 = scalar_lea.vmem %s2, %s212
      %s214 = smul.u32 8, %s20
      %216 = vst [vmem:[#allocation2] sm:$0xff] 0.0
      %217 = vst [vmem:[#allocation2 + $0x8] sm:$0xff] 0.0
      %218 = vst [vmem:[#allocation2 + $0x10] sm:$0xff] 0.0
      %219 = vst [vmem:[#allocation2 + $0x18] sm:$0xff] 0.0
      %220 = vst [vmem:[#allocation2 + $0x20] sm:$0xff] 0.0
      %221 = vst [vmem:[#allocation2 + $0x28] sm:$0xff] 0.0
      %222 = vst [vmem:[#allocation2 + $0x30] sm:$0xff] 0.0
      %223 = vst [vmem:[#allocation2 + $0x38] sm:$0xff] 0.0
      %224 = vst [vmem:[#allocation2 + $0x40] sm:$0xff] 0.0
      %225 = vst [vmem:[#allocation2 + $0x48] sm:$0xff] 0.0
      %226 = vst [vmem:[#allocation2 + $0x50] sm:$0xff] 0.0
      %227 = vst [vmem:[#allocation2 + $0x58] sm:$0xff] 0.0
      %228 = vst [vmem:[#allocation2 + $0x60] sm:$0xff] 0.0
      %229 = vst [vmem:[#allocation2 + $0x68] sm:$0xff] 0.0
      %230 = vst [vmem:[#allocation2 + $0x70] sm:$0xff] 0.0
      %231 = vst [vmem:[#allocation2 + $0x78] sm:$0xff] 0.0
      %v232 = vld [vmem:[%s196] sm:$0xf]
      %v233 = vld [vmem:[%s196 + $0x4] sm:$0xf]
      %v234 = vld [vmem:[%s196 + $0xc] sm:$0xf]
      %v235 = vld [vmem:[%s196 + $0x10] sm:$0xf]
      %v236 = vld [vmem:[%s196 + $0x18] sm:$0xf]
      %v237 = vld [vmem:[%s196 + $0x1c] sm:$0xf]
      %v238 = vld [vmem:[%s196 + $0x24] sm:$0xf]
      %v239 = vld [vmem:[%s196 + $0x28] sm:$0xf]
      %v240 = vld [vmem:[%s196 + $0x30] sm:$0xf]
      %v241 = vld [vmem:[%s196 + $0x34] sm:$0xf]
      %v242 = vld [vmem:[%s196 + $0x3c] sm:$0xf]
      %v243 = vld [vmem:[%s196 + $0x40] sm:$0xf]
      %v244 = vld [vmem:[%s196 + $0x48] sm:$0xf]
      %v245 = vld [vmem:[%s196 + $0x4c] sm:$0xf]
      %v246 = vld [vmem:[%s196 + $0x54] sm:$0xf]
      %v247 = vld [vmem:[%s196 + $0x58] sm:$0xf]
      %v248 = vld [vmem:[#allocation2] sm:$0xff]
      %v249 = vld [vmem:[#allocation2 + $0x8] sm:$0xff]
      %v250 = vld [vmem:[#allocation2 + $0x10] sm:$0xff]
      %v251 = vld [vmem:[#allocation2 + $0x18] sm:$0xff]
      %v252 = vld [vmem:[#allocation2 + $0x20] sm:$0xff]
      %v253 = vld [vmem:[#allocation2 + $0x28] sm:$0xff]
      %v254 = vld [vmem:[#allocation2 + $0x30] sm:$0xff]
      %v255 = vld [vmem:[#allocation2 + $0x38] sm:$0xff]
      %v256 = vld [vmem:[#allocation2 + $0x40] sm:$0xff]
      %v257 = vld [vmem:[#allocation2 + $0x48] sm:$0xff]
      %v258 = vld [vmem:[#allocation2 + $0x50] sm:$0xff]
      %v259 = vld [vmem:[#allocation2 + $0x58] sm:$0xff]
      %v260 = vld [vmem:[#allocation2 + $0x60] sm:$0xff]
      %v261 = vld [vmem:[#allocation2 + $0x68] sm:$0xff]
      %v262 = vld [vmem:[#allocation2 + $0x70] sm:$0xff]
      %v263 = vld [vmem:[#allocation2 + $0x78] sm:$0xff]
      %v264 = vld [vmem:[%s200] sm:$0x3]
      %v281 = vunpack.c.l.b16 %v232
      %v282 = vunpack.c.l.b16 %v233
      %v283 = vunpack.c.l.b16 %v234
      %v284 = vunpack.c.l.b16 %v235
      %v285 = vunpack.c.l.b16 %v236
      %v286 = vunpack.c.l.b16 %v237
      %v287 = vunpack.c.l.b16 %v238
      %v288 = vunpack.c.l.b16 %v239
      %v289 = vunpack.c.l.b16 %v240
      %v290 = vunpack.c.l.b16 %v241
      %v291 = vunpack.c.l.b16 %v242
      %v292 = vunpack.c.l.b16 %v243
      %v293 = vunpack.c.l.b16 %v244
      %v294 = vunpack.c.l.b16 %v245
      %v295 = vunpack.c.l.b16 %v246
      %v296 = vunpack.c.l.b16 %v247
      %v297 = vpack.c.b16 %v282, %v281
      %v298 = vpack.c.b16 %v284, %v283
      %v299 = vpack.c.b16 %v286, %v285
      %v300 = vpack.c.b16 %v288, %v287
      %v301 = vpack.c.b16 %v290, %v289
      %v302 = vpack.c.b16 %v292, %v291
      %v303 = vpack.c.b16 %v294, %v293
      %v304 = vpack.c.b16 %v296, %v295
      %vm305 = vcmask 31744
      %v307 = vsel %vm305, %v297, 0
      %v310 = vsel %vm305, %v298, 0
      %v313 = vsel %vm305, %v299, 0
      %v316 = vsel %vm305, %v300, 0
      %v319 = vsel %vm305, %v301, 0
      %v322 = vsel %vm305, %v302, 0
      %v325 = vsel %vm305, %v303, 0
      %v328 = vsel %vm305, %v304, 0
      %vm330 = vcmask 1041408
      %v332 = vsel %vm330, %v264, 0
      %334 = vmatprep.subr.bf16.mxu0 0
      %335 = vmatpush1.bf16.msra.mxu0 %v332
      %336 = vmatprep.subr.bf16.mxu0 0
      %337 = vmatpush1.bf16.msra.mxu0 0
      %338 = vmatprep.subr.bf16.mxu0 0
      %339 = vmatpush1.bf16.msra.mxu0 0
      %340 = vmatprep.subr.bf16.mxu0 0
      %341 = vmatpush1.bf16.msra.mxu0 0
      %342 = vmatprep.subr.bf16.mxu0 0
      %343 = vmatpush1.bf16.msra.mxu0 0
      %344 = vmatprep.subr.bf16.mxu0 0
      %345 = vmatpush1.bf16.msra.mxu0 0
      %346 = vmatprep.subr.bf16.mxu0 0
      %347 = vmatpush1.bf16.msra.mxu0 0
      %348 = vmatprep.subr.bf16.mxu0 0
      %349 = vmatpush1.bf16.msra.mxu0 0
      %350 = vmatprep.subr.bf16.mxu0 0
      %351 = vmatpush1.bf16.msra.mxu0 0
      %352 = vmatprep.subr.bf16.mxu0 0
      %353 = vmatpush1.bf16.msra.mxu0 0
      %354 = vmatprep.subr.bf16.mxu0 0
      %355 = vmatpush1.bf16.msra.mxu0 0
      %356 = vmatprep.subr.bf16.mxu0 0
      %357 = vmatpush1.bf16.msra.mxu0 0
      %358 = vmatprep.subr.bf16.mxu0 0
      %359 = vmatpush1.bf16.msra.mxu0 0
      %360 = vmatprep.subr.bf16.mxu0 0
      %361 = vmatpush1.bf16.msra.mxu0 0
      %362 = vmatprep.subr.bf16.mxu0 0
      %363 = vmatpush1.bf16.msra.mxu0 0
      %364 = vmatprep.subr.bf16.mxu0 0
      %365 = vmatpush1.bf16.msra.mxu0 0
      %366 = vmatprep.mubr.bf16.mxu0 0
      %367 = vmatmul.mubr.bf16.gmra.mrb[0].mxu0 %v307
      %v368 = vpop.f32.mrb[0].mxu0
      %v369 = vadd.f32 0.0, %v368
      %v370 = vpop.f32.mrb[0].mxu0
      %v371 = vpop.f32.mrb[0].mxu0
      %v372 = vadd.f32 0.0, %v371
      %v373 = vpop.f32.mrb[0].mxu0
      %374 = vmatprep.mubr.bf16.mxu0 0
      %375 = vmatmul.mubr.bf16.gmra.mrb[0].mxu0 %v310
      %v376 = vpop.f32.mrb[0].mxu0
      %v377 = vadd.f32 0.0, %v376
      %v378 = vpop.f32.mrb[0].mxu0
      %v379 = vpop.f32.mrb[0].mxu0
      %v380 = vadd.f32 0.0, %v379
      %v381 = vpop.f32.mrb[0].mxu0
      %382 = vmatprep.mubr.bf16.mxu0 0
      %383 = vmatmul.mubr.bf16.gmra.mrb[0].mxu0 %v313
      %v384 = vpop.f32.mrb[0].mxu0
      %v385 = vadd.f32 0.0, %v384
      %v386 = vpop.f32.mrb[0].mxu0
      %v387 = vpop.f32.mrb[0].mxu0
      %v388 = vadd.f32 0.0, %v387
      %v389 = vpop.f32.mrb[0].mxu0
      %390 = vmatprep.mubr.bf16.mxu0 0
      %391 = vmatmul.mubr.bf16.gmra.mrb[0].mxu0 %v316
      %v392 = vpop.f32.mrb[0].mxu0
      %v393 = vadd.f32 0.0, %v392
      %v394 = vpop.f32.mrb[0].mxu0
      %v395 = vpop.f32.mrb[0].mxu0
      %v396 = vadd.f32 0.0, %v395
      %v397 = vpop.f32.mrb[0].mxu0
      %398 = vmatprep.mubr.bf16.mxu0 0
      %399 = vmatmul.mubr.bf16.gmra.mrb[0].mxu0 %v319
      %v400 = vpop.f32.mrb[0].mxu0
      %v401 = vadd.f32 0.0, %v400
      %v402 = vpop.f32.mrb[0].mxu0
      %v403 = vpop.f32.mrb[0].mxu0
      %v404 = vadd.f32 0.0, %v403
      %v405 = vpop.f32.mrb[0].mxu0
      %406 = vmatprep.mubr.bf16.mxu0 0
      %407 = vmatmul.mubr.bf16.gmra.mrb[0].mxu0 %v322
      %v408 = vpop.f32.mrb[0].mxu0
      %v409 = vadd.f32 0.0, %v408
      %v410 = vpop.f32.mrb[0].mxu0
      %v411 = vpop.f32.mrb[0].mxu0
      %v412 = vadd.f32 0.0, %v411
      %v413 = vpop.f32.mrb[0].mxu0
      %414 = vmatprep.mubr.bf16.mxu0 0
      %415 = vmatmul.mubr.bf16.gmra.mrb[0].mxu0 %v325
      %v416 = vpop.f32.mrb[0].mxu0
      %v417 = vadd.f32 0.0, %v416
      %v418 = vpop.f32.mrb[0].mxu0
      %v419 = vpop.f32.mrb[0].mxu0
      %v420 = vadd.f32 0.0, %v419
      %v421 = vpop.f32.mrb[0].mxu0
      %422 = vmatprep.mubr.bf16.mxu0 0
      %423 = vmatmul.mubr.bf16.gmra.mrb[0].mxu0 %v328
      %v424 = vpop.f32.mrb[0].mxu0
      %v425 = vadd.f32 0.0, %v424
      %v426 = vpop.f32.mrb[0].mxu0
      %v427 = vpop.f32.mrb[0].mxu0
      %v428 = vadd.f32 0.0, %v427
      %v429 = vpop.f32.mrb[0].mxu0
      %430 = vdwg.mxu0
      %v431 = vadd.f32 %v248, %v369
      %v432 = vadd.f32 %v249, %v372
      %v433 = vadd.f32 %v250, %v377
      %v434 = vadd.f32 %v251, %v380
      %v435 = vadd.f32 %v252, %v385
      %v436 = vadd.f32 %v253, %v388
      %v437 = vadd.f32 %v254, %v393
      %v438 = vadd.f32 %v255, %v396
      %v439 = vadd.f32 %v256, %v401
      %v440 = vadd.f32 %v257, %v404
      %v441 = vadd.f32 %v258, %v409
      %v442 = vadd.f32 %v259, %v412
      %v443 = vadd.f32 %v260, %v417
      %v444 = vadd.f32 %v261, %v420
      %v445 = vadd.f32 %v262, %v425
      %v446 = vadd.f32 %v263, %v428
      %447 = vst [vmem:[#allocation2] sm:$0xff] %v431
      %448 = vst [vmem:[#allocation2 + $0x8] sm:$0xff] %v432
      %449 = vst [vmem:[#allocation2 + $0x10] sm:$0xff] %v433
      %450 = vst [vmem:[#allocation2 + $0x18] sm:$0xff] %v434
      %451 = vst [vmem:[#allocation2 + $0x20] sm:$0xff] %v435
      %452 = vst [vmem:[#allocation2 + $0x28] sm:$0xff] %v436
      %453 = vst [vmem:[#allocation2 + $0x30] sm:$0xff] %v437
      %454 = vst [vmem:[#allocation2 + $0x38] sm:$0xff] %v438
      %455 = vst [vmem:[#allocation2 + $0x40] sm:$0xff] %v439
      %456 = vst [vmem:[#allocation2 + $0x48] sm:$0xff] %v440
      %457 = vst [vmem:[#allocation2 + $0x50] sm:$0xff] %v441
      %458 = vst [vmem:[#allocation2 + $0x58] sm:$0xff] %v442
      %459 = vst [vmem:[#allocation2 + $0x60] sm:$0xff] %v443
      %460 = vst [vmem:[#allocation2 + $0x68] sm:$0xff] %v444
      %461 = vst [vmem:[#allocation2 + $0x70] sm:$0xff] %v445
      %462 = vst [vmem:[#allocation2 + $0x78] sm:$0xff] %v446
      %v463 = vld [vmem:[%s196] sm:$0xf]
      %v464 = vld [vmem:[%s196 + $0x4] sm:$0xf]
      %v465 = vld [vmem:[%s196 + $0x8] sm:$0x1]
      %v466 = vld [vmem:[%s196 + $0xc] sm:$0xf]
      %v467 = vld [vmem:[%s196 + $0x10] sm:$0xf]
      %v468 = vld [vmem:[%s196 + $0x14] sm:$0x1]
      %v469 = vld [vmem:[%s196 + $0x18] sm:$0xf]
      %v470 = vld [vmem:[%s196 + $0x1c] sm:$0xf]
      %v471 = vld [vmem:[%s196 + $0x20] sm:$0x1]
      %v472 = vld [vmem:[%s196 + $0x24] sm:$0xf]
      %v473 = vld [vmem:[%s196 + $0x28] sm:$0xf]
      %v474 = vld [vmem:[%s196 + $0x2c] sm:$0x1]
      %v475 = vld [vmem:[%s196 + $0x30] sm:$0xf]
      %v476 = vld [vmem:[%s196 + $0x34] sm:$0xf]
      %v477 = vld [vmem:[%s196 + $0x38] sm:$0x1]
      %v478 = vld [vmem:[%s196 + $0x3c] sm:$0xf]
      %v479 = vld [vmem:[%s196 + $0x40] sm:$0xf]
      %v480 = vld [vmem:[%s196 + $0x44] sm:$0x1]
      %v481 = vld [vmem:[%s196 + $0x48] sm:$0xf]
      %v482 = vld [vmem:[%s196 + $0x4c] sm:$0xf]
      %v483 = vld [vmem:[%s196 + $0x50] sm:$0x1]
      %v484 = vld [vmem:[%s196 + $0x54] sm:$0xf]
      %v485 = vld [vmem:[%s196 + $0x58] sm:$0xf]
      %v486 = vld [vmem:[%s196 + $0x5c] sm:$0x1]
      %vm487 = vsmask.f32 3328
      %vm488 = vsmask.f32 7440
      %vm489 = vmor %vm487, %vm488
      %v491 = vshrl.u32 %v463, 16
      %v493 = vrot.slane %v491, 4
      %v494 = vshll.u32 %v463, 16
      %v496 = vrot.slane %v494, 5
      %v497 = vor.u32 %v493, %v496
      %v498 = vrot.slane %v497, 4
      %v500 = vshll.u32 %v464, 16
      %v502 = vrot.slane %v500, 5
      %v503 = vsel %vm489, %v498, %v502
      %v504 = vshrl.u32 %v464, 16
      %v506 = vrot.slane %v504, 4
      %v507 = vor.u32 %v506, %v502
      %v508 = vrot.slane %v507, 4
      %v510 = vshll.u32 %v465, 16
      %v512 = vrot.slane %v510, 5
      %v513 = vsel %vm489, %v508, %v512
      %v515 = vshrl.u32 %v466, 16
      %v517 = vrot.slane %v515, 4
      %v518 = vshll.u32 %v466, 16
      %v520 = vrot.slane %v518, 5
      %v521 = vor.u32 %v517, %v520
      %v522 = vrot.slane %v521, 4
      %v524 = vshll.u32 %v467, 16
      %v526 = vrot.slane %v524, 5
      %v527 = vsel %vm489, %v522, %v526
      %v528 = vshrl.u32 %v467, 16
      %v530 = vrot.slane %v528, 4
      %v531 = vor.u32 %v530, %v526
      %v532 = vrot.slane %v531, 4
      %v534 = vshll.u32 %v468, 16
      %v536 = vrot.slane %v534, 5
      %v537 = vsel %vm489, %v532, %v536
      %v539 = vshrl.u32 %v469, 16
      %v541 = vrot.slane %v539, 4
      %v542 = vshll.u32 %v469, 16
      %v544 = vrot.slane %v542, 5
      %v545 = vor.u32 %v541, %v544
      %v546 = vrot.slane %v545, 4
      %v548 = vshll.u32 %v470, 16
      %v550 = vrot.slane %v548, 5
      %v551 = vsel %vm489, %v546, %v550
      %v552 = vshrl.u32 %v470, 16
      %v554 = vrot.slane %v552, 4
      %v555 = vor.u32 %v554, %v550
      %v556 = vrot.slane %v555, 4
      %v558 = vshll.u32 %v471, 16
      %v560 = vrot.slane %v558, 5
      %v561 = vsel %vm489, %v556, %v560
      %v563 = vshrl.u32 %v472, 16
      %v565 = vrot.slane %v563, 4
      %v566 = vshll.u32 %v472, 16
      %v568 = vrot.slane %v566, 5
      %v569 = vor.u32 %v565, %v568
      %v570 = vrot.slane %v569, 4
      %v572 = vshll.u32 %v473, 16
      %v574 = vrot.slane %v572, 5
      %v575 = vsel %vm489, %v570, %v574
      %v576 = vshrl.u32 %v473, 16
      %v578 = vrot.slane %v576, 4
      %v579 = vor.u32 %v578, %v574
      %v580 = vrot.slane %v579, 4
      %v582 = vshll.u32 %v474, 16
      %v584 = vrot.slane %v582, 5
      %v585 = vsel %vm489, %v580, %v584
      %v587 = vshrl.u32 %v475, 16
      %v589 = vrot.slane %v587, 4
      %v590 = vshll.u32 %v475, 16
      %v592 = vrot.slane %v590, 5
      %v593 = vor.u32 %v589, %v592
      %v594 = vrot.slane %v593, 4
      %v596 = vshll.u32 %v476, 16
      %v598 = vrot.slane %v596, 5
      %v599 = vsel %vm489, %v594, %v598
      %v600 = vshrl.u32 %v476, 16
      %v602 = vrot.slane %v600, 4
      %v603 = vor.u32 %v602, %v598
      %v604 = vrot.slane %v603, 4
      %v606 = vshll.u32 %v477, 16
      %v608 = vrot.slane %v606, 5
      %v609 = vsel %vm489, %v604, %v608
      %v611 = vshrl.u32 %v478, 16
      %v613 = vrot.slane %v611, 4
      %v614 = vshll.u32 %v478, 16
      %v616 = vrot.slane %v614, 5
      %v617 = vor.u32 %v613, %v616
      %v618 = vrot.slane %v617, 4
      %v620 = vshll.u32 %v479, 16
      %v622 = vrot.slane %v620, 5
      %v623 = vsel %vm489, %v618, %v622
      %v624 = vshrl.u32 %v479, 16
      %v626 = vrot.slane %v624, 4
      %v627 = vor.u32 %v626, %v622
      %v628 = vrot.slane %v627, 4
      %v630 = vshll.u32 %v480, 16
      %v632 = vrot.slane %v630, 5
      %v633 = vsel %vm489, %v628, %v632
      %v635 = vshrl.u32 %v481, 16
      %v637 = vrot.slane %v635, 4
      %v638 = vshll.u32 %v481, 16
      %v640 = vrot.slane %v638, 5
      %v641 = vor.u32 %v637, %v640
      %v642 = vrot.slane %v641, 4
      %v644 = vshll.u32 %v482, 16
      %v646 = vrot.slane %v644, 5
      %v647 = vsel %vm489, %v642, %v646
      %v648 = vshrl.u32 %v482, 16
      %v650 = vrot.slane %v648, 4
      %v651 = vor.u32 %v650, %v646
      %v652 = vrot.slane %v651, 4
      %v654 = vshll.u32 %v483, 16
      %v656 = vrot.slane %v654, 5
      %v657 = vsel %vm489, %v652, %v656
      %v659 = vshrl.u32 %v484, 16
      %v661 = vrot.slane %v659, 4
      %v662 = vshll.u32 %v484, 16
      %v664 = vrot.slane %v662, 5
      %v665 = vor.u32 %v661, %v664
      %v666 = vrot.slane %v665, 4
      %v668 = vshll.u32 %v485, 16
      %v670 = vrot.slane %v668, 5
      %v671 = vsel %vm489, %v666, %v670
      %v672 = vshrl.u32 %v485, 16
      %v674 = vrot.slane %v672, 4
      %v675 = vor.u32 %v674, %v670
      %v676 = vrot.slane %v675, 4
      %v678 = vshll.u32 %v486, 16
      %v680 = vrot.slane %v678, 5
      %v681 = vsel %vm489, %v676, %v680
      %v682 = vld [vmem:[#allocation2] sm:$0xff]
      %v683 = vld [vmem:[#allocation2 + $0x8] sm:$0xff]
      %v684 = vld [vmem:[#allocation2 + $0x10] sm:$0xff]
      %v685 = vld [vmem:[#allocation2 + $0x18] sm:$0xff]
      %v686 = vld [vmem:[#allocation2 + $0x20] sm:$0xff]
      %v687 = vld [vmem:[#allocation2 + $0x28] sm:$0xff]
      %v688 = vld [vmem:[#allocation2 + $0x30] sm:$0xff]
      %v689 = vld [vmem:[#allocation2 + $0x38] sm:$0xff]
      %v690 = vld [vmem:[#allocation2 + $0x40] sm:$0xff]
      %v691 = vld [vmem:[#allocation2 + $0x48] sm:$0xff]
      %v692 = vld [vmem:[#allocation2 + $0x50] sm:$0xff]
      %v693 = vld [vmem:[#allocation2 + $0x58] sm:$0xff]
      %v694 = vld [vmem:[#allocation2 + $0x60] sm:$0xff]
      %v695 = vld [vmem:[#allocation2 + $0x68] sm:$0xff]
      %v696 = vld [vmem:[#allocation2 + $0x70] sm:$0xff]
      %v697 = vld [vmem:[#allocation2 + $0x78] sm:$0xff]
      %s698 = scalar_lea.vmem %s200, 2
      %v699 = vld [vmem:[%s698] sm:$0x3]
      %v700 = vunpack.c.l.b16 %v503
      %v701 = vunpack.c.l.b16 %v513
      %v702 = vunpack.c.l.b16 %v527
      %v703 = vunpack.c.l.b16 %v537
      %v704 = vunpack.c.l.b16 %v551
      %v705 = vunpack.c.l.b16 %v561
      %v706 = vunpack.c.l.b16 %v575
      %v707 = vunpack.c.l.b16 %v585
      %v708 = vunpack.c.l.b16 %v599
      %v709 = vunpack.c.l.b16 %v609
      %v710 = vunpack.c.l.b16 %v623
      %v711 = vunpack.c.l.b16 %v633
      %v712 = vunpack.c.l.b16 %v647
      %v713 = vunpack.c.l.b16 %v657
      %v714 = vunpack.c.l.b16 %v671
      %v715 = vunpack.c.l.b16 %v681
      %v716 = vpack.c.b16 %v701, %v700
      %v717 = vpack.c.b16 %v703, %v702
      %v718 = vpack.c.b16 %v705, %v704
      %v719 = vpack.c.b16 %v707, %v706
      %v720 = vpack.c.b16 %v709, %v708
      %v721 = vpack.c.b16 %v711, %v710
      %v722 = vpack.c.b16 %v713, %v712
      %v723 = vpack.c.b16 %v715, %v714
      %v725 = vsel %vm305, %v716, 0
      %v728 = vsel %vm305, %v717, 0
      %v731 = vsel %vm305, %v718, 0
      %v734 = vsel %vm305, %v719, 0
      %v737 = vsel %vm305, %v720, 0
      %v740 = vsel %vm305, %v721, 0
      %v743 = vsel %vm305, %v722, 0
      %v746 = vsel %vm305, %v723, 0
      %v749 = vsel %vm330, %v699, 0
      %751 = vmatprep.subr.bf16.mxu0 0
      %752 = vmatpush1.bf16.msra.mxu0 %v749
      %753 = vmatprep.subr.bf16.mxu0 0
      %754 = vmatpush1.bf16.msra.mxu0 0
      %755 = vmatprep.subr.bf16.mxu0 0
      %756 = vmatpush1.bf16.msra.mxu0 0
      %757 = vmatprep.subr.bf16.mxu0 0
      %758 = vmatpush1.bf16.msra.mxu0 0
      %759 = vmatprep.subr.bf16.mxu0 0
      %760 = vmatpush1.bf16.msra.mxu0 0
      %761 = vmatprep.subr.bf16.mxu0 0
      %762 = vmatpush1.bf16.msra.mxu0 0
      %763 = vmatprep.subr.bf16.mxu0 0
      %764 = vmatpush1.bf16.msra.mxu0 0
      %765 = vmatprep.subr.bf16.mxu0 0
      %766 = vmatpush1.bf16.msra.mxu0 0
      %767 = vmatprep.subr.bf16.mxu0 0
      %768 = vmatpush1.bf16.msra.mxu0 0
      %769 = vmatprep.subr.bf16.mxu0 0
      %770 = vmatpush1.bf16.msra.mxu0 0
      %771 = vmatprep.subr.bf16.mxu0 0
      %772 = vmatpush1.bf16.msra.mxu0 0
      %773 = vmatprep.subr.bf16.mxu0 0
      %774 = vmatpush1.bf16.msra.mxu0 0
      %775 = vmatprep.subr.bf16.mxu0 0
      %776 = vmatpush1.bf16.msra.mxu0 0
      %777 = vmatprep.subr.bf16.mxu0 0
      %778 = vmatpush1.bf16.msra.mxu0 0
      %779 = vmatprep.subr.bf16.mxu0 0
      %780 = vmatpush1.bf16.msra.mxu0 0
      %781 = vmatprep.subr.bf16.mxu0 0
      %782 = vmatpush1.bf16.msra.mxu0 0
      %783 = vmatprep.mubr.bf16.mxu0 0
      %784 = vmatmul.mubr.bf16.gmra.mrb[0].mxu0 %v725
      %v785 = vpop.f32.mrb[0].mxu0
      %v786 = vadd.f32 0.0, %v785
      %v787 = vpop.f32.mrb[0].mxu0
      %v788 = vpop.f32.mrb[0].mxu0
      %v789 = vadd.f32 0.0, %v788
      %v790 = vpop.f32.mrb[0].mxu0
      %791 = vmatprep.mubr.bf16.mxu0 0
      %792 = vmatmul.mubr.bf16.gmra.mrb[0].mxu0 %v728
      %v793 = vpop.f32.mrb[0].mxu0
      %v794 = vadd.f32 0.0, %v793
      %v795 = vpop.f32.mrb[0].mxu0
      %v796 = vpop.f32.mrb[0].mxu0
      %v797 = vadd.f32 0.0, %v796
      %v798 = vpop.f32.mrb[0].mxu0
      %799 = vmatprep.mubr.bf16.mxu0 0
      %800 = vmatmul.mubr.bf16.gmra.mrb[0].mxu0 %v731
      %v801 = vpop.f32.mrb[0].mxu0
      %v802 = vadd.f32 0.0, %v801
      %v803 = vpop.f32.mrb[0].mxu0
      %v804 = vpop.f32.mrb[0].mxu0
      %v805 = vadd.f32 0.0, %v804
      %v806 = vpop.f32.mrb[0].mxu0
      %807 = vmatprep.mubr.bf16.mxu0 0
      %808 = vmatmul.mubr.bf16.gmra.mrb[0].mxu0 %v734
      %v809 = vpop.f32.mrb[0].mxu0
      %v810 = vadd.f32 0.0, %v809
      %v811 = vpop.f32.mrb[0].mxu0
      %v812 = vpop.f32.mrb[0].mxu0
      %v813 = vadd.f32 0.0, %v812
      %v814 = vpop.f32.mrb[0].mxu0
      %815 = vmatprep.mubr.bf16.mxu0 0
      %816 = vmatmul.mubr.bf16.gmra.mrb[0].mxu0 %v737
      %v817 = vpop.f32.mrb[0].mxu0
      %v818 = vadd.f32 0.0, %v817
      %v819 = vpop.f32.mrb[0].mxu0
      %v820 = vpop.f32.mrb[0].mxu0
      %v821 = vadd.f32 0.0, %v820
      %v822 = vpop.f32.mrb[0].mxu0
      %823 = vmatprep.mubr.bf16.mxu0 0
      %824 = vmatmul.mubr.bf16.gmra.mrb[0].mxu0 %v740
      %v825 = vpop.f32.mrb[0].mxu0
      %v826 = vadd.f32 0.0, %v825
      %v827 = vpop.f32.mrb[0].mxu0
      %v828 = vpop.f32.mrb[0].mxu0
      %v829 = vadd.f32 0.0, %v828
      %v830 = vpop.f32.mrb[0].mxu0
      %831 = vmatprep.mubr.bf16.mxu0 0
      %832 = vmatmul.mubr.bf16.gmra.mrb[0].mxu0 %v743
      %v833 = vpop.f32.mrb[0].mxu0
      %v834 = vadd.f32 0.0, %v833
      %v835 = vpop.f32.mrb[0].mxu0
      %v836 = vpop.f32.mrb[0].mxu0
      %v837 = vadd.f32 0.0, %v836
      %v838 = vpop.f32.mrb[0].mxu0
      %839 = vmatprep.mubr.bf16.mxu0 0
      %840 = vmatmul.mubr.bf16.gmra.mrb[0].mxu0 %v746
      %v841 = vpop.f32.mrb[0].mxu0
      %v842 = vadd.f32 0.0, %v841
      %v843 = vpop.f32.mrb[0].mxu0
      %v844 = vpop.f32.mrb[0].mxu0
      %v845 = vadd.f32 0.0, %v844
      %v846 = vpop.f32.mrb[0].mxu0
      %847 = vdwg.mxu0
      %v848 = vadd.f32 %v682, %v786
      %v849 = vadd.f32 %v683, %v789
      %v850 = vadd.f32 %v684, %v794
      %v851 = vadd.f32 %v685, %v797
      %v852 = vadd.f32 %v686, %v802
      %v853 = vadd.f32 %v687, %v805
      %v854 = vadd.f32 %v688, %v810
      %v855 = vadd.f32 %v689, %v813
      %v856 = vadd.f32 %v690, %v818
      %v857 = vadd.f32 %v691, %v821
      %v858 = vadd.f32 %v692, %v826
      %v859 = vadd.f32 %v693, %v829
      %v860 = vadd.f32 %v694, %v834
      %v861 = vadd.f32 %v695, %v837
      %v862 = vadd.f32 %v696, %v842
      %v863 = vadd.f32 %v697, %v845
      %864 = vst [vmem:[#allocation2] sm:$0xff] %v848
      %865 = vst [vmem:[#allocation2 + $0x8] sm:$0xff] %v849
      %866 = vst [vmem:[#allocation2 + $0x10] sm:$0xff] %v850
      %867 = vst [vmem:[#allocation2 + $0x18] sm:$0xff] %v851
      %868 = vst [vmem:[#allocation2 + $0x20] sm:$0xff] %v852
      %869 = vst [vmem:[#allocation2 + $0x28] sm:$0xff] %v853
      %870 = vst [vmem:[#allocation2 + $0x30] sm:$0xff] %v854
      %871 = vst [vmem:[#allocation2 + $0x38] sm:$0xff] %v855
      %872 = vst [vmem:[#allocation2 + $0x40] sm:$0xff] %v856
      %873 = vst [vmem:[#allocation2 + $0x48] sm:$0xff] %v857
      %874 = vst [vmem:[#allocation2 + $0x50] sm:$0xff] %v858
      %875 = vst [vmem:[#allocation2 + $0x58] sm:$0xff] %v859
      %876 = vst [vmem:[#allocation2 + $0x60] sm:$0xff] %v860
      %877 = vst [vmem:[#allocation2 + $0x68] sm:$0xff] %v861
      %878 = vst [vmem:[#allocation2 + $0x70] sm:$0xff] %v862
      %879 = vst [vmem:[#allocation2 + $0x78] sm:$0xff] %v863
      %v880 = vld [vmem:[%s196] sm:$0xe]
      %v881 = vld [vmem:[%s196 + $0x4] sm:$0xf]
      %v882 = vld [vmem:[%s196 + $0x8] sm:$0x1]
      %v883 = vld [vmem:[%s196 + $0xc] sm:$0xe]
      %v884 = vld [vmem:[%s196 + $0x10] sm:$0xf]
      %v885 = vld [vmem:[%s196 + $0x14] sm:$0x1]
      %v886 = vld [vmem:[%s196 + $0x18] sm:$0xe]
      %v887 = vld [vmem:[%s196 + $0x1c] sm:$0xf]
      %v888 = vld [vmem:[%s196 + $0x20] sm:$0x1]
      %v889 = vld [vmem:[%s196 + $0x24] sm:$0xe]
      %v890 = vld [vmem:[%s196 + $0x28] sm:$0xf]
      %v891 = vld [vmem:[%s196 + $0x2c] sm:$0x1]
      %v892 = vld [vmem:[%s196 + $0x30] sm:$0xe]
      %v893 = vld [vmem:[%s196 + $0x34] sm:$0xf]
      %v894 = vld [vmem:[%s196 + $0x38] sm:$0x1]
      %v895 = vld [vmem:[%s196 + $0x3c] sm:$0xe]
      %v896 = vld [vmem:[%s196 + $0x40] sm:$0xf]
      %v897 = vld [vmem:[%s196 + $0x44] sm:$0x1]
      %v898 = vld [vmem:[%s196 + $0x48] sm:$0xe]
      %v899 = vld [vmem:[%s196 + $0x4c] sm:$0xf]
      %v900 = vld [vmem:[%s196 + $0x50] sm:$0x1]
      %v901 = vld [vmem:[%s196 + $0x54] sm:$0xe]
      %v902 = vld [vmem:[%s196 + $0x58] sm:$0xf]
      %v903 = vld [vmem:[%s196 + $0x5c] sm:$0x1]
      %vm928 = vcmask 1042432
      %vm929 = vcmask 1046532
      %vm930 = vmor %vm928, %vm929
      %v931 = vrot.slane %v880, 5
      %v932 = vrot.slane %v931, 4
      %v933 = vrot.slane %v881, 5
      %v934 = vsel %vm930, %v932, %v933
      %v935 = vrot.slane %v933, 4
      %v936 = vrot.slane %v882, 5
      %v937 = vsel %vm930, %v935, %v936
      %v938 = vrot.slane %v883, 5
      %v939 = vrot.slane %v938, 4
      %v940 = vrot.slane %v884, 5
      %v941 = vsel %vm930, %v939, %v940
      %v942 = vrot.slane %v940, 4
      %v943 = vrot.slane %v885, 5
      %v944 = vsel %vm930, %v942, %v943
      %v945 = vrot.slane %v886, 5
      %v946 = vrot.slane %v945, 4
      %v947 = vrot.slane %v887, 5
      %v948 = vsel %vm930, %v946, %v947
      %v949 = vrot.slane %v947, 4
      %v950 = vrot.slane %v888, 5
      %v951 = vsel %vm930, %v949, %v950
      %v952 = vrot.slane %v889, 5
      %v953 = vrot.slane %v952, 4
      %v954 = vrot.slane %v890, 5
      %v955 = vsel %vm930, %v953, %v954
      %v956 = vrot.slane %v954, 4
      %v957 = vrot.slane %v891, 5
      %v958 = vsel %vm930, %v956, %v957
      %v959 = vrot.slane %v892, 5
      %v960 = vrot.slane %v959, 4
      %v961 = vrot.slane %v893, 5
      %v962 = vsel %vm930, %v960, %v961
      %v963 = vrot.slane %v961, 4
      %v964 = vrot.slane %v894, 5
      %v965 = vsel %vm930, %v963, %v964
      %v966 = vrot.slane %v895, 5
      %v967 = vrot.slane %v966, 4
      %v968 = vrot.slane %v896, 5
      %v969 = vsel %vm930, %v967, %v968
      %v970 = vrot.slane %v968, 4
      %v971 = vrot.slane %v897, 5
      %v972 = vsel %vm930, %v970, %v971
      %v973 = vrot.slane %v898, 5
      %v974 = vrot.slane %v973, 4
      %v975 = vrot.slane %v899, 5
      %v976 = vsel %vm930, %v974, %v975
      %v977 = vrot.slane %v975, 4
      %v978 = vrot.slane %v900, 5
      %v979 = vsel %vm930, %v977, %v978
      %v980 = vrot.slane %v901, 5
      %v981 = vrot.slane %v980, 4
      %v982 = vrot.slane %v902, 5
      %v983 = vsel %vm930, %v981, %v982
      %v984 = vrot.slane %v982, 4
      %v985 = vrot.slane %v903, 5
      %v986 = vsel %vm930, %v984, %v985
      %v987 = vld [vmem:[#allocation2] sm:$0xff]
      %v988 = vld [vmem:[#allocation2 + $0x8] sm:$0xff]
      %v989 = vld [vmem:[#allocation2 + $0x10] sm:$0xff]
      %v990 = vld [vmem:[#allocation2 + $0x18] sm:$0xff]
      %v991 = vld [vmem:[#allocation2 + $0x20] sm:$0xff]
      %v992 = vld [vmem:[#allocation2 + $0x28] sm:$0xff]
      %v993 = vld [vmem:[#allocation2 + $0x30] sm:$0xff]
      %v994 = vld [vmem:[#allocation2 + $0x38] sm:$0xff]
      %v995 = vld [vmem:[#allocation2 + $0x40] sm:$0xff]
      %v996 = vld [vmem:[#allocation2 + $0x48] sm:$0xff]
      %v997 = vld [vmem:[#allocation2 + $0x50] sm:$0xff]
      %v998 = vld [vmem:[#allocation2 + $0x58] sm:$0xff]
      %v999 = vld [vmem:[#allocation2 + $0x60] sm:$0xff]
      %v1000 = vld [vmem:[#allocation2 + $0x68] sm:$0xff]
      %v1001 = vld [vmem:[#allocation2 + $0x70] sm:$0xff]
      %v1002 = vld [vmem:[#allocation2 + $0x78] sm:$0xff]
      %s1003 = scalar_lea.vmem %s200, 4
      %v1004 = vld [vmem:[%s1003] sm:$0x3]
      %v1005 = vunpack.c.l.b16 %v934
      %v1006 = vunpack.c.l.b16 %v937
      %v1007 = vunpack.c.l.b16 %v941
      %v1008 = vunpack.c.l.b16 %v944
      %v1009 = vunpack.c.l.b16 %v948
      %v1010 = vunpack.c.l.b16 %v951
      %v1011 = vunpack.c.l.b16 %v955
      %v1012 = vunpack.c.l.b16 %v958
      %v1013 = vunpack.c.l.b16 %v962
      %v1014 = vunpack.c.l.b16 %v965
      %v1015 = vunpack.c.l.b16 %v969
      %v1016 = vunpack.c.l.b16 %v972
      %v1017 = vunpack.c.l.b16 %v976
      %v1018 = vunpack.c.l.b16 %v979
      %v1019 = vunpack.c.l.b16 %v983
      %v1020 = vunpack.c.l.b16 %v986
      %v1021 = vpack.c.b16 %v1006, %v1005
      %v1022 = vpack.c.b16 %v1008, %v1007
      %v1023 = vpack.c.b16 %v1010, %v1009
      %v1024 = vpack.c.b16 %v1012, %v1011
      %v1025 = vpack.c.b16 %v1014, %v1013
      %v1026 = vpack.c.b16 %v1016, %v1015
      %v1027 = vpack.c.b16 %v1018, %v1017
      %v1028 = vpack.c.b16 %v1020, %v1019
      %v1030 = vsel %vm305, %v1021, 0
      %v1033 = vsel %vm305, %v1022, 0
      %v1036 = vsel %vm305, %v1023, 0
      %v1039 = vsel %vm305, %v1024, 0
      %v1042 = vsel %vm305, %v1025, 0
      %v1045 = vsel %vm305, %v1026, 0
      %v1048 = vsel %vm305, %v1027, 0
      %v1051 = vsel %vm305, %v1028, 0
      %v1054 = vsel %vm330, %v1004, 0
      %1056 = vmatprep.subr.bf16.mxu0 0
      %1057 = vmatpush1.bf16.msra.mxu0 %v1054
      %1058 = vmatprep.subr.bf16.mxu0 0
      %1059 = vmatpush1.bf16.msra.mxu0 0
      %1060 = vmatprep.subr.bf16.mxu0 0
      %1061 = vmatpush1.bf16.msra.mxu0 0
      %1062 = vmatprep.subr.bf16.mxu0 0
      %1063 = vmatpush1.bf16.msra.mxu0 0
      %1064 = vmatprep.subr.bf16.mxu0 0
      %1065 = vmatpush1.bf16.msra.mxu0 0
      %1066 = vmatprep.subr.bf16.mxu0 0
      %1067 = vmatpush1.bf16.msra.mxu0 0
      %1068 = vmatprep.subr.bf16.mxu0 0
      %1069 = vmatpush1.bf16.msra.mxu0 0
      %1070 = vmatprep.subr.bf16.mxu0 0
      %1071 = vmatpush1.bf16.msra.mxu0 0
      %1072 = vmatprep.subr.bf16.mxu0 0
      %1073 = vmatpush1.bf16.msra.mxu0 0
      %1074 = vmatprep.subr.bf16.mxu0 0
      %1075 = vmatpush1.bf16.msra.mxu0 0
      %1076 = vmatprep.subr.bf16.mxu0 0
      %1077 = vmatpush1.bf16.msra.mxu0 0
      %1078 = vmatprep.subr.bf16.mxu0 0
      %1079 = vmatpush1.bf16.msra.mxu0 0
      %1080 = vmatprep.subr.bf16.mxu0 0
      %1081 = vmatpush1.bf16.msra.mxu0 0
      %1082 = vmatprep.subr.bf16.mxu0 0
      %1083 = vmatpush1.bf16.msra.mxu0 0
      %1084 = vmatprep.subr.bf16.mxu0 0
      %1085 = vmatpush1.bf16.msra.mxu0 0
      %1086 = vmatprep.subr.bf16.mxu0 0
      %1087 = vmatpush1.bf16.msra.mxu0 0
      %1088 = vmatprep.mubr.bf16.mxu0 0
      %1089 = vmatmul.mubr.bf16.gmra.mrb[0].mxu0 %v1030
      %v1090 = vpop.f32.mrb[0].mxu0
      %v1091 = vadd.f32 0.0, %v1090
      %v1092 = vpop.f32.mrb[0].mxu0
      %v1093 = vpop.f32.mrb[0].mxu0
      %v1094 = vadd.f32 0.0, %v1093
      %v1095 = vpop.f32.mrb[0].mxu0
      %1096 = vmatprep.mubr.bf16.mxu0 0
      %1097 = vmatmul.mubr.bf16.gmra.mrb[0].mxu0 %v1033
      %v1098 = vpop.f32.mrb[0].mxu0
      %v1099 = vadd.f32 0.0, %v1098
      %v1100 = vpop.f32.mrb[0].mxu0
      %v1101 = vpop.f32.mrb[0].mxu0
      %v1102 = vadd.f32 0.0, %v1101
      %v1103 = vpop.f32.mrb[0].mxu0
      %1104 = vmatprep.mubr.bf16.mxu0 0
      %1105 = vmatmul.mubr.bf16.gmra.mrb[0].mxu0 %v1036
      %v1106 = vpop.f32.mrb[0].mxu0
      %v1107 = vadd.f32 0.0, %v1106
      %v1108 = vpop.f32.mrb[0].mxu0
      %v1109 = vpop.f32.mrb[0].mxu0
      %v1110 = vadd.f32 0.0, %v1109
      %v1111 = vpop.f32.mrb[0].mxu0
      %1112 = vmatprep.mubr.bf16.mxu0 0
      %1113 = vmatmul.mubr.bf16.gmra.mrb[0].mxu0 %v1039
      %v1114 = vpop.f32.mrb[0].mxu0
      %v1115 = vadd.f32 0.0, %v1114
      %v1116 = vpop.f32.mrb[0].mxu0
      %v1117 = vpop.f32.mrb[0].mxu0
      %v1118 = vadd.f32 0.0, %v1117
      %v1119 = vpop.f32.mrb[0].mxu0
      %1120 = vmatprep.mubr.bf16.mxu0 0
      %1121 = vmatmul.mubr.bf16.gmra.mrb[0].mxu0 %v1042
      %v1122 = vpop.f32.mrb[0].mxu0
      %v1123 = vadd.f32 0.0, %v1122
      %v1124 = vpop.f32.mrb[0].mxu0
      %v1125 = vpop.f32.mrb[0].mxu0
      %v1126 = vadd.f32 0.0, %v1125
      %v1127 = vpop.f32.mrb[0].mxu0
      %1128 = vmatprep.mubr.bf16.mxu0 0
      %1129 = vmatmul.mubr.bf16.gmra.mrb[0].mxu0 %v1045
      %v1130 = vpop.f32.mrb[0].mxu0
      %v1131 = vadd.f32 0.0, %v1130
      %v1132 = vpop.f32.mrb[0].mxu0
      %v1133 = vpop.f32.mrb[0].mxu0
      %v1134 = vadd.f32 0.0, %v1133
      %v1135 = vpop.f32.mrb[0].mxu0
      %1136 = vmatprep.mubr.bf16.mxu0 0
      %1137 = vmatmul.mubr.bf16.gmra.mrb[0].mxu0 %v1048
      %v1138 = vpop.f32.mrb[0].mxu0
      %v1139 = vadd.f32 0.0, %v1138
      %v1140 = vpop.f32.mrb[0].mxu0
      %v1141 = vpop.f32.mrb[0].mxu0
      %v1142 = vadd.f32 0.0, %v1141
      %v1143 = vpop.f32.mrb[0].mxu0
      %1144 = vmatprep.mubr.bf16.mxu0 0
      %1145 = vmatmul.mubr.bf16.gmra.mrb[0].mxu0 %v1051
      %v1146 = vpop.f32.mrb[0].mxu0
      %v1147 = vadd.f32 0.0, %v1146
      %v1148 = vpop.f32.mrb[0].mxu0
      %v1149 = vpop.f32.mrb[0].mxu0
      %v1150 = vadd.f32 0.0, %v1149
      %v1151 = vpop.f32.mrb[0].mxu0
      %1152 = vdwg.mxu0
      %v1153 = vadd.f32 %v987, %v1091
      %v1154 = vadd.f32 %v988, %v1094
      %v1155 = vadd.f32 %v989, %v1099
      %v1156 = vadd.f32 %v990, %v1102
      %v1157 = vadd.f32 %v991, %v1107
      %v1158 = vadd.f32 %v992, %v1110
      %v1159 = vadd.f32 %v993, %v1115
      %v1160 = vadd.f32 %v994, %v1118
      %v1161 = vadd.f32 %v995, %v1123
      %v1162 = vadd.f32 %v996, %v1126
      %v1163 = vadd.f32 %v997, %v1131
      %v1164 = vadd.f32 %v998, %v1134
      %v1165 = vadd.f32 %v999, %v1139
      %v1166 = vadd.f32 %v1000, %v1142
      %v1167 = vadd.f32 %v1001, %v1147
      %v1168 = vadd.f32 %v1002, %v1150
      %1169 = vst [vmem:[#allocation2] sm:$0xff] %v1153
      %1170 = vst [vmem:[#allocation2 + $0x8] sm:$0xff] %v1154
      %1171 = vst [vmem:[#allocation2 + $0x10] sm:$0xff] %v1155
      %1172 = vst [vmem:[#allocation2 + $0x18] sm:$0xff] %v1156
      %1173 = vst [vmem:[#allocation2 + $0x20] sm:$0xff] %v1157
      %1174 = vst [vmem:[#allocation2 + $0x28] sm:$0xff] %v1158
      %1175 = vst [vmem:[#allocation2 + $0x30] sm:$0xff] %v1159
      %1176 = vst [vmem:[#allocation2 + $0x38] sm:$0xff] %v1160
      %1177 = vst [vmem:[#allocation2 + $0x40] sm:$0xff] %v1161
      %1178 = vst [vmem:[#allocation2 + $0x48] sm:$0xff] %v1162
      %1179 = vst [vmem:[#allocation2 + $0x50] sm:$0xff] %v1163
      %1180 = vst [vmem:[#allocation2 + $0x58] sm:$0xff] %v1164
      %1181 = vst [vmem:[#allocation2 + $0x60] sm:$0xff] %v1165
      %1182 = vst [vmem:[#allocation2 + $0x68] sm:$0xff] %v1166
      %1183 = vst [vmem:[#allocation2 + $0x70] sm:$0xff] %v1167
      %1184 = vst [vmem:[#allocation2 + $0x78] sm:$0xff] %v1168
      %s1185 = scalar_lea.vmem %s196, 12
      %v1186 = vld [vmem:[%s1185] sm:$0xf]
      %v1187 = vld [vmem:[%s1185 + $0x4] sm:$0xf]
      %v1188 = vld [vmem:[%s1185 + $0xc] sm:$0xf]
      %v1189 = vld [vmem:[%s1185 + $0x10] sm:$0xf]
      %v1190 = vld [vmem:[%s1185 + $0x18] sm:$0xf]
      %v1191 = vld [vmem:[%s1185 + $0x1c] sm:$0xf]
      %v1192 = vld [vmem:[%s1185 + $0x24] sm:$0xf]
      %v1193 = vld [vmem:[%s1185 + $0x28] sm:$0xf]
      %v1194 = vld [vmem:[%s1185 + $0x30] sm:$0xf]
      %v1195 = vld [vmem:[%s1185 + $0x34] sm:$0xf]
      %v1196 = vld [vmem:[%s1185 + $0x3c] sm:$0xf]
      %v1197 = vld [vmem:[%s1185 + $0x40] sm:$0xf]
      %v1198 = vld [vmem:[%s1185 + $0x48] sm:$0xf]
      %v1199 = vld [vmem:[%s1185 + $0x4c] sm:$0xf]
      %v1200 = vld [vmem:[%s1185 + $0x54] sm:$0xf]
      %v1201 = vld [vmem:[%s1185 + $0x58] sm:$0xf]
      %v1202 = vld [vmem:[#allocation2] sm:$0xff]
      %v1203 = vld [vmem:[#allocation2 + $0x8] sm:$0xff]
      %v1204 = vld [vmem:[#allocation2 + $0x10] sm:$0xff]
      %v1205 = vld [vmem:[#allocation2 + $0x18] sm:$0xff]
      %v1206 = vld [vmem:[#allocation2 + $0x20] sm:$0xff]
      %v1207 = vld [vmem:[#allocation2 + $0x28] sm:$0xff]
      %v1208 = vld [vmem:[#allocation2 + $0x30] sm:$0xff]
      %v1209 = vld [vmem:[#allocation2 + $0x38] sm:$0xff]
      %v1210 = vld [vmem:[#allocation2 + $0x40] sm:$0xff]
      %v1211 = vld [vmem:[#allocation2 + $0x48] sm:$0xff]
      %v1212 = vld [vmem:[#allocation2 + $0x50] sm:$0xff]
      %v1213 = vld [vmem:[#allocation2 + $0x58] sm:$0xff]
      %v1214 = vld [vmem:[#allocation2 + $0x60] sm:$0xff]
      %v1215 = vld [vmem:[#allocation2 + $0x68] sm:$0xff]
      %v1216 = vld [vmem:[#allocation2 + $0x70] sm:$0xff]
      %v1217 = vld [vmem:[#allocation2 + $0x78] sm:$0xff]
      %s1218 = scalar_lea.vmem %s200, 6
      %v1219 = vld [vmem:[%s1218] sm:$0x3]
      %v1236 = vunpack.c.l.b16 %v1186
      %v1237 = vunpack.c.l.b16 %v1187
      %v1238 = vunpack.c.l.b16 %v1188
      %v1239 = vunpack.c.l.b16 %v1189
      %v1240 = vunpack.c.l.b16 %v1190
      %v1241 = vunpack.c.l.b16 %v1191
      %v1242 = vunpack.c.l.b16 %v1192
      %v1243 = vunpack.c.l.b16 %v1193
      %v1244 = vunpack.c.l.b16 %v1194
      %v1245 = vunpack.c.l.b16 %v1195
      %v1246 = vunpack.c.l.b16 %v1196
      %v1247 = vunpack.c.l.b16 %v1197
      %v1248 = vunpack.c.l.b16 %v1198
      %v1249 = vunpack.c.l.b16 %v1199
      %v1250 = vunpack.c.l.b16 %v1200
      %v1251 = vunpack.c.l.b16 %v1201
      %v1252 = vpack.c.b16 %v1237, %v1236
      %v1253 = vpack.c.b16 %v1239, %v1238
      %v1254 = vpack.c.b16 %v1241, %v1240
      %v1255 = vpack.c.b16 %v1243, %v1242
      %v1256 = vpack.c.b16 %v1245, %v1244
      %v1257 = vpack.c.b16 %v1247, %v1246
      %v1258 = vpack.c.b16 %v1249, %v1248
      %v1259 = vpack.c.b16 %v1251, %v1250
      %v1261 = vsel %vm305, %v1252, 0
      %v1264 = vsel %vm305, %v1253, 0
      %v1267 = vsel %vm305, %v1254, 0
      %v1270 = vsel %vm305, %v1255, 0
      %v1273 = vsel %vm305, %v1256, 0
      %v1276 = vsel %vm305, %v1257, 0
      %v1279 = vsel %vm305, %v1258, 0
      %v1282 = vsel %vm305, %v1259, 0
      %v1285 = vsel %vm330, %v1219, 0
      %1287 = vmatprep.subr.bf16.mxu0 0
      %1288 = vmatpush1.bf16.msra.mxu0 %v1285
      %1289 = vmatprep.subr.bf16.mxu0 0
      %1290 = vmatpush1.bf16.msra.mxu0 0
      %1291 = vmatprep.subr.bf16.mxu0 0
      %1292 = vmatpush1.bf16.msra.mxu0 0
      %1293 = vmatprep.subr.bf16.mxu0 0
      %1294 = vmatpush1.bf16.msra.mxu0 0
      %1295 = vmatprep.subr.bf16.mxu0 0
      %1296 = vmatpush1.bf16.msra.mxu0 0
      %1297 = vmatprep.subr.bf16.mxu0 0
      %1298 = vmatpush1.bf16.msra.mxu0 0
      %1299 = vmatprep.subr.bf16.mxu0 0
      %1300 = vmatpush1.bf16.msra.mxu0 0
      %1301 = vmatprep.subr.bf16.mxu0 0
      %1302 = vmatpush1.bf16.msra.mxu0 0
      %1303 = vmatprep.subr.bf16.mxu0 0
      %1304 = vmatpush1.bf16.msra.mxu0 0
      %1305 = vmatprep.subr.bf16.mxu0 0
      %1306 = vmatpush1.bf16.msra.mxu0 0
      %1307 = vmatprep.subr.bf16.mxu0 0
      %1308 = vmatpush1.bf16.msra.mxu0 0
      %1309 = vmatprep.subr.bf16.mxu0 0
      %1310 = vmatpush1.bf16.msra.mxu0 0
      %1311 = vmatprep.subr.bf16.mxu0 0
      %1312 = vmatpush1.bf16.msra.mxu0 0
      %1313 = vmatprep.subr.bf16.mxu0 0
      %1314 = vmatpush1.bf16.msra.mxu0 0
      %1315 = vmatprep.subr.bf16.mxu0 0
      %1316 = vmatpush1.bf16.msra.mxu0 0
      %1317 = vmatprep.subr.bf16.mxu0 0
      %1318 = vmatpush1.bf16.msra.mxu0 0
      %1319 = vmatprep.mubr.bf16.mxu0 0
      %1320 = vmatmul.mubr.bf16.gmra.mrb[0].mxu0 %v1261
      %v1321 = vpop.f32.mrb[0].mxu0
      %v1322 = vadd.f32 0.0, %v1321
      %v1323 = vpop.f32.mrb[0].mxu0
      %v1324 = vpop.f32.mrb[0].mxu0
      %v1325 = vadd.f32 0.0, %v1324
      %v1326 = vpop.f32.mrb[0].mxu0
      %1327 = vmatprep.mubr.bf16.mxu0 0
      %1328 = vmatmul.mubr.bf16.gmra.mrb[0].mxu0 %v1264
      %v1329 = vpop.f32.mrb[0].mxu0
      %v1330 = vadd.f32 0.0, %v1329
      %v1331 = vpop.f32.mrb[0].mxu0
      %v1332 = vpop.f32.mrb[0].mxu0
      %v1333 = vadd.f32 0.0, %v1332
      %v1334 = vpop.f32.mrb[0].mxu0
      %1335 = vmatprep.mubr.bf16.mxu0 0
      %1336 = vmatmul.mubr.bf16.gmra.mrb[0].mxu0 %v1267
      %v1337 = vpop.f32.mrb[0].mxu0
      %v1338 = vadd.f32 0.0, %v1337
      %v1339 = vpop.f32.mrb[0].mxu0
      %v1340 = vpop.f32.mrb[0].mxu0
      %v1341 = vadd.f32 0.0, %v1340
      %v1342 = vpop.f32.mrb[0].mxu0
      %1343 = vmatprep.mubr.bf16.mxu0 0
      %1344 = vmatmul.mubr.bf16.gmra.mrb[0].mxu0 %v1270
      %v1345 = vpop.f32.mrb[0].mxu0
      %v1346 = vadd.f32 0.0, %v1345
      %v1347 = vpop.f32.mrb[0].mxu0
      %v1348 = vpop.f32.mrb[0].mxu0
      %v1349 = vadd.f32 0.0, %v1348
      %v1350 = vpop.f32.mrb[0].mxu0
      %1351 = vmatprep.mubr.bf16.mxu0 0
      %1352 = vmatmul.mubr.bf16.gmra.mrb[0].mxu0 %v1273
      %v1353 = vpop.f32.mrb[0].mxu0
      %v1354 = vadd.f32 0.0, %v1353
      %v1355 = vpop.f32.mrb[0].mxu0
      %v1356 = vpop.f32.mrb[0].mxu0
      %v1357 = vadd.f32 0.0, %v1356
      %v1358 = vpop.f32.mrb[0].mxu0
      %1359 = vmatprep.mubr.bf16.mxu0 0
      %1360 = vmatmul.mubr.bf16.gmra.mrb[0].mxu0 %v1276
      %v1361 = vpop.f32.mrb[0].mxu0
      %v1362 = vadd.f32 0.0, %v1361
      %v1363 = vpop.f32.mrb[0].mxu0
      %v1364 = vpop.f32.mrb[0].mxu0
      %v1365 = vadd.f32 0.0, %v1364
      %v1366 = vpop.f32.mrb[0].mxu0
      %1367 = vmatprep.mubr.bf16.mxu0 0
      %1368 = vmatmul.mubr.bf16.gmra.mrb[0].mxu0 %v1279
      %v1369 = vpop.f32.mrb[0].mxu0
      %v1370 = vadd.f32 0.0, %v1369
      %v1371 = vpop.f32.mrb[0].mxu0
      %v1372 = vpop.f32.mrb[0].mxu0
      %v1373 = vadd.f32 0.0, %v1372
      %v1374 = vpop.f32.mrb[0].mxu0
      %1375 = vmatprep.mubr.bf16.mxu0 0
      %1376 = vmatmul.mubr.bf16.gmra.mrb[0].mxu0 %v1282
      %v1377 = vpop.f32.mrb[0].mxu0
      %v1378 = vadd.f32 0.0, %v1377
      %v1379 = vpop.f32.mrb[0].mxu0
      %v1380 = vpop.f32.mrb[0].mxu0
      %v1381 = vadd.f32 0.0, %v1380
      %v1382 = vpop.f32.mrb[0].mxu0
      %1383 = vdwg.mxu0
      %v1384 = vadd.f32 %v1202, %v1322
      %v1385 = vadd.f32 %v1203, %v1325
      %v1386 = vadd.f32 %v1204, %v1330
      %v1387 = vadd.f32 %v1205, %v1333
      %v1388 = vadd.f32 %v1206, %v1338
      %v1389 = vadd.f32 %v1207, %v1341
      %v1390 = vadd.f32 %v1208, %v1346
      %v1391 = vadd.f32 %v1209, %v1349
      %v1392 = vadd.f32 %v1210, %v1354
      %v1393 = vadd.f32 %v1211, %v1357
      %v1394 = vadd.f32 %v1212, %v1362
      %v1395 = vadd.f32 %v1213, %v1365
      %v1396 = vadd.f32 %v1214, %v1370
      %v1397 = vadd.f32 %v1215, %v1373
      %v1398 = vadd.f32 %v1216, %v1378
      %v1399 = vadd.f32 %v1217, %v1381
      %1400 = vst [vmem:[#allocation2] sm:$0xff] %v1384
      %1401 = vst [vmem:[#allocation2 + $0x8] sm:$0xff] %v1385
      %1402 = vst [vmem:[#allocation2 + $0x10] sm:$0xff] %v1386
      %1403 = vst [vmem:[#allocation2 + $0x18] sm:$0xff] %v1387
      %1404 = vst [vmem:[#allocation2 + $0x20] sm:$0xff] %v1388
      %1405 = vst [vmem:[#allocation2 + $0x28] sm:$0xff] %v1389
      %1406 = vst [vmem:[#allocation2 + $0x30] sm:$0xff] %v1390
      %1407 = vst [vmem:[#allocation2 + $0x38] sm:$0xff] %v1391
      %1408 = vst [vmem:[#allocation2 + $0x40] sm:$0xff] %v1392
      %1409 = vst [vmem:[#allocation2 + $0x48] sm:$0xff] %v1393
      %1410 = vst [vmem:[#allocation2 + $0x50] sm:$0xff] %v1394
      %1411 = vst [vmem:[#allocation2 + $0x58] sm:$0xff] %v1395
      %1412 = vst [vmem:[#allocation2 + $0x60] sm:$0xff] %v1396
      %1413 = vst [vmem:[#allocation2 + $0x68] sm:$0xff] %v1397
      %1414 = vst [vmem:[#allocation2 + $0x70] sm:$0xff] %v1398
      %1415 = vst [vmem:[#allocation2 + $0x78] sm:$0xff] %v1399
      %v1416 = vld [vmem:[%s1185] sm:$0xf]
      %v1417 = vld [vmem:[%s1185 + $0x4] sm:$0xf]
      %v1418 = vld [vmem:[%s1185 + $0x8] sm:$0x1]
      %v1419 = vld [vmem:[%s1185 + $0xc] sm:$0xf]
      %v1420 = vld [vmem:[%s1185 + $0x10] sm:$0xf]
      %v1421 = vld [vmem:[%s1185 + $0x14] sm:$0x1]
      %v1422 = vld [vmem:[%s1185 + $0x18] sm:$0xf]
      %v1423 = vld [vmem:[%s1185 + $0x1c] sm:$0xf]
      %v1424 = vld [vmem:[%s1185 + $0x20] sm:$0x1]
      %v1425 = vld [vmem:[%s1185 + $0x24] sm:$0xf]
      %v1426 = vld [vmem:[%s1185 + $0x28] sm:$0xf]
      %v1427 = vld [vmem:[%s1185 + $0x2c] sm:$0x1]
      %v1428 = vld [vmem:[%s1185 + $0x30] sm:$0xf]
      %v1429 = vld [vmem:[%s1185 + $0x34] sm:$0xf]
      %v1430 = vld [vmem:[%s1185 + $0x38] sm:$0x1]
      %v1431 = vld [vmem:[%s1185 + $0x3c] sm:$0xf]
      %v1432 = vld [vmem:[%s1185 + $0x40] sm:$0xf]
      %v1433 = vld [vmem:[%s1185 + $0x44] sm:$0x1]
      %v1434 = vld [vmem:[%s1185 + $0x48] sm:$0xf]
      %v1435 = vld [vmem:[%s1185 + $0x4c] sm:$0xf]
      %v1436 = vld [vmem:[%s1185 + $0x50] sm:$0x1]
      %v1437 = vld [vmem:[%s1185 + $0x54] sm:$0xf]
      %v1438 = vld [vmem:[%s1185 + $0x58] sm:$0xf]
      %v1439 = vld [vmem:[%s1185 + $0x5c] sm:$0x1]
      %v1441 = vshrl.u32 %v1416, 16
      %v1443 = vrot.slane %v1441, 4
      %v1444 = vshll.u32 %v1416, 16
      %v1446 = vrot.slane %v1444, 5
      %v1447 = vor.u32 %v1443, %v1446
      %v1448 = vrot.slane %v1447, 4
      %v1450 = vshll.u32 %v1417, 16
      %v1452 = vrot.slane %v1450, 5
      %v1453 = vsel %vm489, %v1448, %v1452
      %v1454 = vshrl.u32 %v1417, 16
      %v1456 = vrot.slane %v1454, 4
      %v1457 = vor.u32 %v1456, %v1452
      %v1458 = vrot.slane %v1457, 4
      %v1460 = vshll.u32 %v1418, 16
      %v1462 = vrot.slane %v1460, 5
      %v1463 = vsel %vm489, %v1458, %v1462
      %v1465 = vshrl.u32 %v1419, 16
      %v1467 = vrot.slane %v1465, 4
      %v1468 = vshll.u32 %v1419, 16
      %v1470 = vrot.slane %v1468, 5
      %v1471 = vor.u32 %v1467, %v1470
      %v1472 = vrot.slane %v1471, 4
      %v1474 = vshll.u32 %v1420, 16
      %v1476 = vrot.slane %v1474, 5
      %v1477 = vsel %vm489, %v1472, %v1476
      %v1478 = vshrl.u32 %v1420, 16
      %v1480 = vrot.slane %v1478, 4
      %v1481 = vor.u32 %v1480, %v1476
      %v1482 = vrot.slane %v1481, 4
      %v1484 = vshll.u32 %v1421, 16
      %v1486 = vrot.slane %v1484, 5
      %v1487 = vsel %vm489, %v1482, %v1486
      %v1489 = vshrl.u32 %v1422, 16
      %v1491 = vrot.slane %v1489, 4
      %v1492 = vshll.u32 %v1422, 16
      %v1494 = vrot.slane %v1492, 5
      %v1495 = vor.u32 %v1491, %v1494
      %v1496 = vrot.slane %v1495, 4
      %v1498 = vshll.u32 %v1423, 16
      %v1500 = vrot.slane %v1498, 5
      %v1501 = vsel %vm489, %v1496, %v1500
      %v1502 = vshrl.u32 %v1423, 16
      %v1504 = vrot.slane %v1502, 4
      %v1505 = vor.u32 %v1504, %v1500
      %v1506 = vrot.slane %v1505, 4
      %v1508 = vshll.u32 %v1424, 16
      %v1510 = vrot.slane %v1508, 5
      %v1511 = vsel %vm489, %v1506, %v1510
      %v1513 = vshrl.u32 %v1425, 16
      %v1515 = vrot.slane %v1513, 4
      %v1516 = vshll.u32 %v1425, 16
      %v1518 = vrot.slane %v1516, 5
      %v1519 = vor.u32 %v1515, %v1518
      %v1520 = vrot.slane %v1519, 4
      %v1522 = vshll.u32 %v1426, 16
      %v1524 = vrot.slane %v1522, 5
      %v1525 = vsel %vm489, %v1520, %v1524
      %v1526 = vshrl.u32 %v1426, 16
      %v1528 = vrot.slane %v1526, 4
      %v1529 = vor.u32 %v1528, %v1524
      %v1530 = vrot.slane %v1529, 4
      %v1532 = vshll.u32 %v1427, 16
      %v1534 = vrot.slane %v1532, 5
      %v1535 = vsel %vm489, %v1530, %v1534
      %v1537 = vshrl.u32 %v1428, 16
      %v1539 = vrot.slane %v1537, 4
      %v1540 = vshll.u32 %v1428, 16
      %v1542 = vrot.slane %v1540, 5
      %v1543 = vor.u32 %v1539, %v1542
      %v1544 = vrot.slane %v1543, 4
      %v1546 = vshll.u32 %v1429, 16
      %v1548 = vrot.slane %v1546, 5
      %v1549 = vsel %vm489, %v1544, %v1548
      %v1550 = vshrl.u32 %v1429, 16
      %v1552 = vrot.slane %v1550, 4
      %v1553 = vor.u32 %v1552, %v1548
      %v1554 = vrot.slane %v1553, 4
      %v1556 = vshll.u32 %v1430, 16
      %v1558 = vrot.slane %v1556, 5
      %v1559 = vsel %vm489, %v1554, %v1558
      %v1561 = vshrl.u32 %v1431, 16
      %v1563 = vrot.slane %v1561, 4
      %v1564 = vshll.u32 %v1431, 16
      %v1566 = vrot.slane %v1564, 5
      %v1567 = vor.u32 %v1563, %v1566
      %v1568 = vrot.slane %v1567, 4
      %v1570 = vshll.u32 %v1432, 16
      %v1572 = vrot.slane %v1570, 5
      %v1573 = vsel %vm489, %v1568, %v1572
      %v1574 = vshrl.u32 %v1432, 16
      %v1576 = vrot.slane %v1574, 4
      %v1577 = vor.u32 %v1576, %v1572
      %v1578 = vrot.slane %v1577, 4
      %v1580 = vshll.u32 %v1433, 16
      %v1582 = vrot.slane %v1580, 5
      %v1583 = vsel %vm489, %v1578, %v1582
      %v1585 = vshrl.u32 %v1434, 16
      %v1587 = vrot.slane %v1585, 4
      %v1588 = vshll.u32 %v1434, 16
      %v1590 = vrot.slane %v1588, 5
      %v1591 = vor.u32 %v1587, %v1590
      %v1592 = vrot.slane %v1591, 4
      %v1594 = vshll.u32 %v1435, 16
      %v1596 = vrot.slane %v1594, 5
      %v1597 = vsel %vm489, %v1592, %v1596
      %v1598 = vshrl.u32 %v1435, 16
      %v1600 = vrot.slane %v1598, 4
      %v1601 = vor.u32 %v1600, %v1596
      %v1602 = vrot.slane %v1601, 4
      %v1604 = vshll.u32 %v1436, 16
      %v1606 = vrot.slane %v1604, 5
      %v1607 = vsel %vm489, %v1602, %v1606
      %v1609 = vshrl.u32 %v1437, 16
      %v1611 = vrot.slane %v1609, 4
      %v1612 = vshll.u32 %v1437, 16
      %v1614 = vrot.slane %v1612, 5
      %v1615 = vor.u32 %v1611, %v1614
      %v1616 = vrot.slane %v1615, 4
      %v1618 = vshll.u32 %v1438, 16
      %v1620 = vrot.slane %v1618, 5
      %v1621 = vsel %vm489, %v1616, %v1620
      %v1622 = vshrl.u32 %v1438, 16
      %v1624 = vrot.slane %v1622, 4
      %v1625 = vor.u32 %v1624, %v1620
      %v1626 = vrot.slane %v1625, 4
      %v1628 = vshll.u32 %v1439, 16
      %v1630 = vrot.slane %v1628, 5
      %v1631 = vsel %vm489, %v1626, %v1630
      %v1632 = vld [vmem:[#allocation2] sm:$0xff]
      %v1633 = vld [vmem:[#allocation2 + $0x8] sm:$0xff]
      %v1634 = vld [vmem:[#allocation2 + $0x10] sm:$0xff]
      %v1635 = vld [vmem:[#allocation2 + $0x18] sm:$0xff]
      %v1636 = vld [vmem:[#allocation2 + $0x20] sm:$0xff]
      %v1637 = vld [vmem:[#allocation2 + $0x28] sm:$0xff]
      %v1638 = vld [vmem:[#allocation2 + $0x30] sm:$0xff]
      %v1639 = vld [vmem:[#allocation2 + $0x38] sm:$0xff]
      %v1640 = vld [vmem:[#allocation2 + $0x40] sm:$0xff]
      %v1641 = vld [vmem:[#allocation2 + $0x48] sm:$0xff]
      %v1642 = vld [vmem:[#allocation2 + $0x50] sm:$0xff]
      %v1643 = vld [vmem:[#allocation2 + $0x58] sm:$0xff]
      %v1644 = vld [vmem:[#allocation2 + $0x60] sm:$0xff]
      %v1645 = vld [vmem:[#allocation2 + $0x68] sm:$0xff]
      %v1646 = vld [vmem:[#allocation2 + $0x70] sm:$0xff]
      %v1647 = vld [vmem:[#allocation2 + $0x78] sm:$0xff]
      %s1648 = scalar_lea.vmem %s200, 8
      %v1649 = vld [vmem:[%s1648] sm:$0x3]
      %v1650 = vunpack.c.l.b16 %v1453
      %v1651 = vunpack.c.l.b16 %v1463
      %v1652 = vunpack.c.l.b16 %v1477
      %v1653 = vunpack.c.l.b16 %v1487
      %v1654 = vunpack.c.l.b16 %v1501
      %v1655 = vunpack.c.l.b16 %v1511
      %v1656 = vunpack.c.l.b16 %v1525
      %v1657 = vunpack.c.l.b16 %v1535
      %v1658 = vunpack.c.l.b16 %v1549
      %v1659 = vunpack.c.l.b16 %v1559
      %v1660 = vunpack.c.l.b16 %v1573
      %v1661 = vunpack.c.l.b16 %v1583
      %v1662 = vunpack.c.l.b16 %v1597
      %v1663 = vunpack.c.l.b16 %v1607
      %v1664 = vunpack.c.l.b16 %v1621
      %v1665 = vunpack.c.l.b16 %v1631
      %v1666 = vpack.c.b16 %v1651, %v1650
      %v1667 = vpack.c.b16 %v1653, %v1652
      %v1668 = vpack.c.b16 %v1655, %v1654
      %v1669 = vpack.c.b16 %v1657, %v1656
      %v1670 = vpack.c.b16 %v1659, %v1658
      %v1671 = vpack.c.b16 %v1661, %v1660
      %v1672 = vpack.c.b16 %v1663, %v1662
      %v1673 = vpack.c.b16 %v1665, %v1664
      %v1675 = vsel %vm305, %v1666, 0
      %v1678 = vsel %vm305, %v1667, 0
      %v1681 = vsel %vm305, %v1668, 0
      %v1684 = vsel %vm305, %v1669, 0
      %v1687 = vsel %vm305, %v1670, 0
      %v1690 = vsel %vm305, %v1671, 0
      %v1693 = vsel %vm305, %v1672, 0
      %v1696 = vsel %vm305, %v1673, 0
      %v1699 = vsel %vm330, %v1649, 0
      %1701 = vmatprep.subr.bf16.mxu0 0
      %1702 = vmatpush1.bf16.msra.mxu0 %v1699
      %1703 = vmatprep.subr.bf16.mxu0 0
      %1704 = vmatpush1.bf16.msra.mxu0 0
      %1705 = vmatprep.subr.bf16.mxu0 0
      %1706 = vmatpush1.bf16.msra.mxu0 0
      %1707 = vmatprep.subr.bf16.mxu0 0
      %1708 = vmatpush1.bf16.msra.mxu0 0
      %1709 = vmatprep.subr.bf16.mxu0 0
      %1710 = vmatpush1.bf16.msra.mxu0 0
      %1711 = vmatprep.subr.bf16.mxu0 0
      %1712 = vmatpush1.bf16.msra.mxu0 0
      %1713 = vmatprep.subr.bf16.mxu0 0
      %1714 = vmatpush1.bf16.msra.mxu0 0
      %1715 = vmatprep.subr.bf16.mxu0 0
      %1716 = vmatpush1.bf16.msra.mxu0 0
      %1717 = vmatprep.subr.bf16.mxu0 0
      %1718 = vmatpush1.bf16.msra.mxu0 0
      %1719 = vmatprep.subr.bf16.mxu0 0
      %1720 = vmatpush1.bf16.msra.mxu0 0
      %1721 = vmatprep.subr.bf16.mxu0 0
      %1722 = vmatpush1.bf16.msra.mxu0 0
      %1723 = vmatprep.subr.bf16.mxu0 0
      %1724 = vmatpush1.bf16.msra.mxu0 0
      %1725 = vmatprep.subr.bf16.mxu0 0
      %1726 = vmatpush1.bf16.msra.mxu0 0
      %1727 = vmatprep.subr.bf16.mxu0 0
      %1728 = vmatpush1.bf16.msra.mxu0 0
      %1729 = vmatprep.subr.bf16.mxu0 0
      %1730 = vmatpush1.bf16.msra.mxu0 0
      %1731 = vmatprep.subr.bf16.mxu0 0
      %1732 = vmatpush1.bf16.msra.mxu0 0
      %1733 = vmatprep.mubr.bf16.mxu0 0
      %1734 = vmatmul.mubr.bf16.gmra.mrb[0].mxu0 %v1675
      %v1735 = vpop.f32.mrb[0].mxu0
      %v1736 = vadd.f32 0.0, %v1735
      %v1737 = vpop.f32.mrb[0].mxu0
      %v1738 = vpop.f32.mrb[0].mxu0
      %v1739 = vadd.f32 0.0, %v1738
      %v1740 = vpop.f32.mrb[0].mxu0
      %1741 = vmatprep.mubr.bf16.mxu0 0
      %1742 = vmatmul.mubr.bf16.gmra.mrb[0].mxu0 %v1678
      %v1743 = vpop.f32.mrb[0].mxu0
      %v1744 = vadd.f32 0.0, %v1743
      %v1745 = vpop.f32.mrb[0].mxu0
      %v1746 = vpop.f32.mrb[0].mxu0
      %v1747 = vadd.f32 0.0, %v1746
      %v1748 = vpop.f32.mrb[0].mxu0
      %1749 = vmatprep.mubr.bf16.mxu0 0
      %1750 = vmatmul.mubr.bf16.gmra.mrb[0].mxu0 %v1681
      %v1751 = vpop.f32.mrb[0].mxu0
      %v1752 = vadd.f32 0.0, %v1751
      %v1753 = vpop.f32.mrb[0].mxu0
      %v1754 = vpop.f32.mrb[0].mxu0
      %v1755 = vadd.f32 0.0, %v1754
      %v1756 = vpop.f32.mrb[0].mxu0
      %1757 = vmatprep.mubr.bf16.mxu0 0
      %1758 = vmatmul.mubr.bf16.gmra.mrb[0].mxu0 %v1684
      %v1759 = vpop.f32.mrb[0].mxu0
      %v1760 = vadd.f32 0.0, %v1759
      %v1761 = vpop.f32.mrb[0].mxu0
      %v1762 = vpop.f32.mrb[0].mxu0
      %v1763 = vadd.f32 0.0, %v1762
      %v1764 = vpop.f32.mrb[0].mxu0
      %1765 = vmatprep.mubr.bf16.mxu0 0
      %1766 = vmatmul.mubr.bf16.gmra.mrb[0].mxu0 %v1687
      %v1767 = vpop.f32.mrb[0].mxu0
      %v1768 = vadd.f32 0.0, %v1767
      %v1769 = vpop.f32.mrb[0].mxu0
      %v1770 = vpop.f32.mrb[0].mxu0
      %v1771 = vadd.f32 0.0, %v1770
      %v1772 = vpop.f32.mrb[0].mxu0
      %1773 = vmatprep.mubr.bf16.mxu0 0
      %1774 = vmatmul.mubr.bf16.gmra.mrb[0].mxu0 %v1690
      %v1775 = vpop.f32.mrb[0].mxu0
      %v1776 = vadd.f32 0.0, %v1775
      %v1777 = vpop.f32.mrb[0].mxu0
      %v1778 = vpop.f32.mrb[0].mxu0
      %v1779 = vadd.f32 0.0, %v1778
      %v1780 = vpop.f32.mrb[0].mxu0
      %1781 = vmatprep.mubr.bf16.mxu0 0
      %1782 = vmatmul.mubr.bf16.gmra.mrb[0].mxu0 %v1693
      %v1783 = vpop.f32.mrb[0].mxu0
      %v1784 = vadd.f32 0.0, %v1783
      %v1785 = vpop.f32.mrb[0].mxu0
      %v1786 = vpop.f32.mrb[0].mxu0
      %v1787 = vadd.f32 0.0, %v1786
      %v1788 = vpop.f32.mrb[0].mxu0
      %1789 = vmatprep.mubr.bf16.mxu0 0
      %1790 = vmatmul.mubr.bf16.gmra.mrb[0].mxu0 %v1696
      %v1791 = vpop.f32.mrb[0].mxu0
      %v1792 = vadd.f32 0.0, %v1791
      %v1793 = vpop.f32.mrb[0].mxu0
      %v1794 = vpop.f32.mrb[0].mxu0
      %v1795 = vadd.f32 0.0, %v1794
      %v1796 = vpop.f32.mrb[0].mxu0
      %1797 = vdwg.mxu0
      %v1798 = vadd.f32 %v1632, %v1736
      %v1799 = vadd.f32 %v1633, %v1739
      %v1800 = vadd.f32 %v1634, %v1744
      %v1801 = vadd.f32 %v1635, %v1747
      %v1802 = vadd.f32 %v1636, %v1752
      %v1803 = vadd.f32 %v1637, %v1755
      %v1804 = vadd.f32 %v1638, %v1760
      %v1805 = vadd.f32 %v1639, %v1763
      %v1806 = vadd.f32 %v1640, %v1768
      %v1807 = vadd.f32 %v1641, %v1771
      %v1808 = vadd.f32 %v1642, %v1776
      %v1809 = vadd.f32 %v1643, %v1779
      %v1810 = vadd.f32 %v1644, %v1784
      %v1811 = vadd.f32 %v1645, %v1787
      %v1812 = vadd.f32 %v1646, %v1792
      %v1813 = vadd.f32 %v1647, %v1795
      %1814 = vst [vmem:[#allocation2] sm:$0xff] %v1798
      %1815 = vst [vmem:[#allocation2 + $0x8] sm:$0xff] %v1799
      %1816 = vst [vmem:[#allocation2 + $0x10] sm:$0xff] %v1800
      %1817 = vst [vmem:[#allocation2 + $0x18] sm:$0xff] %v1801
      %1818 = vst [vmem:[#allocation2 + $0x20] sm:$0xff] %v1802
      %1819 = vst [vmem:[#allocation2 + $0x28] sm:$0xff] %v1803
      %1820 = vst [vmem:[#allocation2 + $0x30] sm:$0xff] %v1804
      %1821 = vst [vmem:[#allocation2 + $0x38] sm:$0xff] %v1805
      %1822 = vst [vmem:[#allocation2 + $0x40] sm:$0xff] %v1806
      %1823 = vst [vmem:[#allocation2 + $0x48] sm:$0xff] %v1807
      %1824 = vst [vmem:[#allocation2 + $0x50] sm:$0xff] %v1808
      %1825 = vst [vmem:[#allocation2 + $0x58] sm:$0xff] %v1809
      %1826 = vst [vmem:[#allocation2 + $0x60] sm:$0xff] %v1810
      %1827 = vst [vmem:[#allocation2 + $0x68] sm:$0xff] %v1811
      %1828 = vst [vmem:[#allocation2 + $0x70] sm:$0xff] %v1812
      %1829 = vst [vmem:[#allocation2 + $0x78] sm:$0xff] %v1813
      %v1830 = vld [vmem:[%s1185] sm:$0xe]
      %v1831 = vld [vmem:[%s1185 + $0x4] sm:$0xf]
      %v1832 = vld [vmem:[%s1185 + $0x8] sm:$0x1]
      %v1833 = vld [vmem:[%s1185 + $0xc] sm:$0xe]
      %v1834 = vld [vmem:[%s1185 + $0x10] sm:$0xf]
      %v1835 = vld [vmem:[%s1185 + $0x14] sm:$0x1]
      %v1836 = vld [vmem:[%s1185 + $0x18] sm:$0xe]
      %v1837 = vld [vmem:[%s1185 + $0x1c] sm:$0xf]
      %v1838 = vld [vmem:[%s1185 + $0x20] sm:$0x1]
      %v1839 = vld [vmem:[%s1185 + $0x24] sm:$0xe]
      %v1840 = vld [vmem:[%s1185 + $0x28] sm:$0xf]
      %v1841 = vld [vmem:[%s1185 + $0x2c] sm:$0x1]
      %v1842 = vld [vmem:[%s1185 + $0x30] sm:$0xe]
      %v1843 = vld [vmem:[%s1185 + $0x34] sm:$0xf]
      %v1844 = vld [vmem:[%s1185 + $0x38] sm:$0x1]
      %v1845 = vld [vmem:[%s1185 + $0x3c] sm:$0xe]
      %v1846 = vld [vmem:[%s1185 + $0x40] sm:$0xf]
      %v1847 = vld [vmem:[%s1185 + $0x44] sm:$0x1]
      %v1848 = vld [vmem:[%s1185 + $0x48] sm:$0xe]
      %v1849 = vld [vmem:[%s1185 + $0x4c] sm:$0xf]
      %v1850 = vld [vmem:[%s1185 + $0x50] sm:$0x1]
      %v1851 = vld [vmem:[%s1185 + $0x54] sm:$0xe]
      %v1852 = vld [vmem:[%s1185 + $0x58] sm:$0xf]
      %v1853 = vld [vmem:[%s1185 + $0x5c] sm:$0x1]
      %v1878 = vrot.slane %v1830, 5
      %v1879 = vrot.slane %v1878, 4
      %v1880 = vrot.slane %v1831, 5
      %v1881 = vsel %vm930, %v1879, %v1880
      %v1882 = vrot.slane %v1880, 4
      %v1883 = vrot.slane %v1832, 5
      %v1884 = vsel %vm930, %v1882, %v1883
      %v1885 = vrot.slane %v1833, 5
      %v1886 = vrot.slane %v1885, 4
      %v1887 = vrot.slane %v1834, 5
      %v1888 = vsel %vm930, %v1886, %v1887
      %v1889 = vrot.slane %v1887, 4
      %v1890 = vrot.slane %v1835, 5
      %v1891 = vsel %vm930, %v1889, %v1890
      %v1892 = vrot.slane %v1836, 5
      %v1893 = vrot.slane %v1892, 4
      %v1894 = vrot.slane %v1837, 5
      %v1895 = vsel %vm930, %v1893, %v1894
      %v1896 = vrot.slane %v1894, 4
      %v1897 = vrot.slane %v1838, 5
      %v1898 = vsel %vm930, %v1896, %v1897
      %v1899 = vrot.slane %v1839, 5
      %v1900 = vrot.slane %v1899, 4
      %v1901 = vrot.slane %v1840, 5
      %v1902 = vsel %vm930, %v1900, %v1901
      %v1903 = vrot.slane %v1901, 4
      %v1904 = vrot.slane %v1841, 5
      %v1905 = vsel %vm930, %v1903, %v1904
      %v1906 = vrot.slane %v1842, 5
      %v1907 = vrot.slane %v1906, 4
      %v1908 = vrot.slane %v1843, 5
      %v1909 = vsel %vm930, %v1907, %v1908
      %v1910 = vrot.slane %v1908, 4
      %v1911 = vrot.slane %v1844, 5
      %v1912 = vsel %vm930, %v1910, %v1911
      %v1913 = vrot.slane %v1845, 5
      %v1914 = vrot.slane %v1913, 4
      %v1915 = vrot.slane %v1846, 5
      %v1916 = vsel %vm930, %v1914, %v1915
      %v1917 = vrot.slane %v1915, 4
      %v1918 = vrot.slane %v1847, 5
      %v1919 = vsel %vm930, %v1917, %v1918
      %v1920 = vrot.slane %v1848, 5
      %v1921 = vrot.slane %v1920, 4
      %v1922 = vrot.slane %v1849, 5
      %v1923 = vsel %vm930, %v1921, %v1922
      %v1924 = vrot.slane %v1922, 4
      %v1925 = vrot.slane %v1850, 5
      %v1926 = vsel %vm930, %v1924, %v1925
      %v1927 = vrot.slane %v1851, 5
      %v1928 = vrot.slane %v1927, 4
      %v1929 = vrot.slane %v1852, 5
      %v1930 = vsel %vm930, %v1928, %v1929
      %v1931 = vrot.slane %v1929, 4
      %v1932 = vrot.slane %v1853, 5
      %v1933 = vsel %vm930, %v1931, %v1932
      %v1934 = vld [vmem:[#allocation2] sm:$0xff]
      %v1935 = vld [vmem:[#allocation2 + $0x8] sm:$0xff]
      %v1936 = vld [vmem:[#allocation2 + $0x10] sm:$0xff]
      %v1937 = vld [vmem:[#allocation2 + $0x18] sm:$0xff]
      %v1938 = vld [vmem:[#allocation2 + $0x20] sm:$0xff]
      %v1939 = vld [vmem:[#allocation2 + $0x28] sm:$0xff]
      %v1940 = vld [vmem:[#allocation2 + $0x30] sm:$0xff]
      %v1941 = vld [vmem:[#allocation2 + $0x38] sm:$0xff]
      %v1942 = vld [vmem:[#allocation2 + $0x40] sm:$0xff]
      %v1943 = vld [vmem:[#allocation2 + $0x48] sm:$0xff]
      %v1944 = vld [vmem:[#allocation2 + $0x50] sm:$0xff]
      %v1945 = vld [vmem:[#allocation2 + $0x58] sm:$0xff]
      %v1946 = vld [vmem:[#allocation2 + $0x60] sm:$0xff]
      %v1947 = vld [vmem:[#allocation2 + $0x68] sm:$0xff]
      %v1948 = vld [vmem:[#allocation2 + $0x70] sm:$0xff]
      %v1949 = vld [vmem:[#allocation2 + $0x78] sm:$0xff]
      %s1950 = scalar_lea.vmem %s200, 10
      %v1951 = vld [vmem:[%s1950] sm:$0x3]
      %v1952 = vunpack.c.l.b16 %v1881
      %v1953 = vunpack.c.l.b16 %v1884
      %v1954 = vunpack.c.l.b16 %v1888
      %v1955 = vunpack.c.l.b16 %v1891
      %v1956 = vunpack.c.l.b16 %v1895
      %v1957 = vunpack.c.l.b16 %v1898
      %v1958 = vunpack.c.l.b16 %v1902
      %v1959 = vunpack.c.l.b16 %v1905
      %v1960 = vunpack.c.l.b16 %v1909
      %v1961 = vunpack.c.l.b16 %v1912
      %v1962 = vunpack.c.l.b16 %v1916
      %v1963 = vunpack.c.l.b16 %v1919
      %v1964 = vunpack.c.l.b16 %v1923
      %v1965 = vunpack.c.l.b16 %v1926
      %v1966 = vunpack.c.l.b16 %v1930
      %v1967 = vunpack.c.l.b16 %v1933
      %v1968 = vpack.c.b16 %v1953, %v1952
      %v1969 = vpack.c.b16 %v1955, %v1954
      %v1970 = vpack.c.b16 %v1957, %v1956
      %v1971 = vpack.c.b16 %v1959, %v1958
      %v1972 = vpack.c.b16 %v1961, %v1960
      %v1973 = vpack.c.b16 %v1963, %v1962
      %v1974 = vpack.c.b16 %v1965, %v1964
      %v1975 = vpack.c.b16 %v1967, %v1966
      %v1977 = vsel %vm305, %v1968, 0
      %v1980 = vsel %vm305, %v1969, 0
      %v1983 = vsel %vm305, %v1970, 0
      %v1986 = vsel %vm305, %v1971, 0
      %v1989 = vsel %vm305, %v1972, 0
      %v1992 = vsel %vm305, %v1973, 0
      %v1995 = vsel %vm305, %v1974, 0
      %v1998 = vsel %vm305, %v1975, 0
      %v2001 = vsel %vm330, %v1951, 0
      %2003 = vmatprep.subr.bf16.mxu0 0
      %2004 = vmatpush1.bf16.msra.mxu0 %v2001
      %2005 = vmatprep.subr.bf16.mxu0 0
      %2006 = vmatpush1.bf16.msra.mxu0 0
      %2007 = vmatprep.subr.bf16.mxu0 0
      %2008 = vmatpush1.bf16.msra.mxu0 0
      %2009 = vmatprep.subr.bf16.mxu0 0
      %2010 = vmatpush1.bf16.msra.mxu0 0
      %2011 = vmatprep.subr.bf16.mxu0 0
      %2012 = vmatpush1.bf16.msra.mxu0 0
      %2013 = vmatprep.subr.bf16.mxu0 0
      %2014 = vmatpush1.bf16.msra.mxu0 0
      %2015 = vmatprep.subr.bf16.mxu0 0
      %2016 = vmatpush1.bf16.msra.mxu0 0
      %2017 = vmatprep.subr.bf16.mxu0 0
      %2018 = vmatpush1.bf16.msra.mxu0 0
      %2019 = vmatprep.subr.bf16.mxu0 0
      %2020 = vmatpush1.bf16.msra.mxu0 0
      %2021 = vmatprep.subr.bf16.mxu0 0
      %2022 = vmatpush1.bf16.msra.mxu0 0
      %2023 = vmatprep.subr.bf16.mxu0 0
      %2024 = vmatpush1.bf16.msra.mxu0 0
      %2025 = vmatprep.subr.bf16.mxu0 0
      %2026 = vmatpush1.bf16.msra.mxu0 0
      %2027 = vmatprep.subr.bf16.mxu0 0
      %2028 = vmatpush1.bf16.msra.mxu0 0
      %2029 = vmatprep.subr.bf16.mxu0 0
      %2030 = vmatpush1.bf16.msra.mxu0 0
      %2031 = vmatprep.subr.bf16.mxu0 0
      %2032 = vmatpush1.bf16.msra.mxu0 0
      %2033 = vmatprep.subr.bf16.mxu0 0
      %2034 = vmatpush1.bf16.msra.mxu0 0
      %2035 = vmatprep.mubr.bf16.mxu0 0
      %2036 = vmatmul.mubr.bf16.gmra.mrb[0].mxu0 %v1977
      %v2037 = vpop.f32.mrb[0].mxu0
      %v2038 = vadd.f32 0.0, %v2037
      %v2039 = vpop.f32.mrb[0].mxu0
      %v2040 = vpop.f32.mrb[0].mxu0
      %v2041 = vadd.f32 0.0, %v2040
      %v2042 = vpop.f32.mrb[0].mxu0
      %2043 = vmatprep.mubr.bf16.mxu0 0
      %2044 = vmatmul.mubr.bf16.gmra.mrb[0].mxu0 %v1980
      %v2045 = vpop.f32.mrb[0].mxu0
      %v2046 = vadd.f32 0.0, %v2045
      %v2047 = vpop.f32.mrb[0].mxu0
      %v2048 = vpop.f32.mrb[0].mxu0
      %v2049 = vadd.f32 0.0, %v2048
      %v2050 = vpop.f32.mrb[0].mxu0
      %2051 = vmatprep.mubr.bf16.mxu0 0
      %2052 = vmatmul.mubr.bf16.gmra.mrb[0].mxu0 %v1983
      %v2053 = vpop.f32.mrb[0].mxu0
      %v2054 = vadd.f32 0.0, %v2053
      %v2055 = vpop.f32.mrb[0].mxu0
      %v2056 = vpop.f32.mrb[0].mxu0
      %v2057 = vadd.f32 0.0, %v2056
      %v2058 = vpop.f32.mrb[0].mxu0
      %2059 = vmatprep.mubr.bf16.mxu0 0
      %2060 = vmatmul.mubr.bf16.gmra.mrb[0].mxu0 %v1986
      %v2061 = vpop.f32.mrb[0].mxu0
      %v2062 = vadd.f32 0.0, %v2061
      %v2063 = vpop.f32.mrb[0].mxu0
      %v2064 = vpop.f32.mrb[0].mxu0
      %v2065 = vadd.f32 0.0, %v2064
      %v2066 = vpop.f32.mrb[0].mxu0
      %2067 = vmatprep.mubr.bf16.mxu0 0
      %2068 = vmatmul.mubr.bf16.gmra.mrb[0].mxu0 %v1989
      %v2069 = vpop.f32.mrb[0].mxu0
      %v2070 = vadd.f32 0.0, %v2069
      %v2071 = vpop.f32.mrb[0].mxu0
      %v2072 = vpop.f32.mrb[0].mxu0
      %v2073 = vadd.f32 0.0, %v2072
      %v2074 = vpop.f32.mrb[0].mxu0
      %2075 = vmatprep.mubr.bf16.mxu0 0
      %2076 = vmatmul.mubr.bf16.gmra.mrb[0].mxu0 %v1992
      %v2077 = vpop.f32.mrb[0].mxu0
      %v2078 = vadd.f32 0.0, %v2077
      %v2079 = vpop.f32.mrb[0].mxu0
      %v2080 = vpop.f32.mrb[0].mxu0
      %v2081 = vadd.f32 0.0, %v2080
      %v2082 = vpop.f32.mrb[0].mxu0
      %2083 = vmatprep.mubr.bf16.mxu0 0
      %2084 = vmatmul.mubr.bf16.gmra.mrb[0].mxu0 %v1995
      %v2085 = vpop.f32.mrb[0].mxu0
      %v2086 = vadd.f32 0.0, %v2085
      %v2087 = vpop.f32.mrb[0].mxu0
      %v2088 = vpop.f32.mrb[0].mxu0
      %v2089 = vadd.f32 0.0, %v2088
      %v2090 = vpop.f32.mrb[0].mxu0
      %2091 = vmatprep.mubr.bf16.mxu0 0
      %2092 = vmatmul.mubr.bf16.gmra.mrb[0].mxu0 %v1998
      %v2093 = vpop.f32.mrb[0].mxu0
      %v2094 = vadd.f32 0.0, %v2093
      %v2095 = vpop.f32.mrb[0].mxu0
      %v2096 = vpop.f32.mrb[0].mxu0
      %v2097 = vadd.f32 0.0, %v2096
      %v2098 = vpop.f32.mrb[0].mxu0
      %2099 = vdwg.mxu0
      %v2100 = vadd.f32 %v1934, %v2038
      %v2101 = vadd.f32 %v1935, %v2041
      %v2102 = vadd.f32 %v1936, %v2046
      %v2103 = vadd.f32 %v1937, %v2049
      %v2104 = vadd.f32 %v1938, %v2054
      %v2105 = vadd.f32 %v1939, %v2057
      %v2106 = vadd.f32 %v1940, %v2062
      %v2107 = vadd.f32 %v1941, %v2065
      %v2108 = vadd.f32 %v1942, %v2070
      %v2109 = vadd.f32 %v1943, %v2073
      %v2110 = vadd.f32 %v1944, %v2078
      %v2111 = vadd.f32 %v1945, %v2081
      %v2112 = vadd.f32 %v1946, %v2086
      %v2113 = vadd.f32 %v1947, %v2089
      %v2114 = vadd.f32 %v1948, %v2094
      %v2115 = vadd.f32 %v1949, %v2097
      %2116 = vst [vmem:[#allocation2] sm:$0xff] %v2100
      %2117 = vst [vmem:[#allocation2 + $0x8] sm:$0xff] %v2101
      %2118 = vst [vmem:[#allocation2 + $0x10] sm:$0xff] %v2102
      %2119 = vst [vmem:[#allocation2 + $0x18] sm:$0xff] %v2103
      %2120 = vst [vmem:[#allocation2 + $0x20] sm:$0xff] %v2104
      %2121 = vst [vmem:[#allocation2 + $0x28] sm:$0xff] %v2105
      %2122 = vst [vmem:[#allocation2 + $0x30] sm:$0xff] %v2106
      %2123 = vst [vmem:[#allocation2 + $0x38] sm:$0xff] %v2107
      %2124 = vst [vmem:[#allocation2 + $0x40] sm:$0xff] %v2108
      %2125 = vst [vmem:[#allocation2 + $0x48] sm:$0xff] %v2109
      %2126 = vst [vmem:[#allocation2 + $0x50] sm:$0xff] %v2110
      %2127 = vst [vmem:[#allocation2 + $0x58] sm:$0xff] %v2111
      %2128 = vst [vmem:[#allocation2 + $0x60] sm:$0xff] %v2112
      %2129 = vst [vmem:[#allocation2 + $0x68] sm:$0xff] %v2113
      %2130 = vst [vmem:[#allocation2 + $0x70] sm:$0xff] %v2114
      %2131 = vst [vmem:[#allocation2 + $0x78] sm:$0xff] %v2115
      %s2132 = scalar_lea.vmem %s196, 24
      %v2133 = vld [vmem:[%s2132] sm:$0xf]
      %v2134 = vld [vmem:[%s2132 + $0x4] sm:$0xf]
      %v2135 = vld [vmem:[%s2132 + $0xc] sm:$0xf]
      %v2136 = vld [vmem:[%s2132 + $0x10] sm:$0xf]
      %v2137 = vld [vmem:[%s2132 + $0x18] sm:$0xf]
      %v2138 = vld [vmem:[%s2132 + $0x1c] sm:$0xf]
      %v2139 = vld [vmem:[%s2132 + $0x24] sm:$0xf]
      %v2140 = vld [vmem:[%s2132 + $0x28] sm:$0xf]
      %v2141 = vld [vmem:[%s2132 + $0x30] sm:$0xf]
      %v2142 = vld [vmem:[%s2132 + $0x34] sm:$0xf]
      %v2143 = vld [vmem:[%s2132 + $0x3c] sm:$0xf]
      %v2144 = vld [vmem:[%s2132 + $0x40] sm:$0xf]
      %v2145 = vld [vmem:[%s2132 + $0x48] sm:$0xf]
      %v2146 = vld [vmem:[%s2132 + $0x4c] sm:$0xf]
      %v2147 = vld [vmem:[%s2132 + $0x54] sm:$0xf]
      %v2148 = vld [vmem:[%s2132 + $0x58] sm:$0xf]
      %v2149 = vld [vmem:[#allocation2] sm:$0xff]
      %v2150 = vld [vmem:[#allocation2 + $0x8] sm:$0xff]
      %v2151 = vld [vmem:[#allocation2 + $0x10] sm:$0xff]
      %v2152 = vld [vmem:[#allocation2 + $0x18] sm:$0xff]
      %v2153 = vld [vmem:[#allocation2 + $0x20] sm:$0xff]
      %v2154 = vld [vmem:[#allocation2 + $0x28] sm:$0xff]
      %v2155 = vld [vmem:[#allocation2 + $0x30] sm:$0xff]
      %v2156 = vld [vmem:[#allocation2 + $0x38] sm:$0xff]
      %v2157 = vld [vmem:[#allocation2 + $0x40] sm:$0xff]
      %v2158 = vld [vmem:[#allocation2 + $0x48] sm:$0xff]
      %v2159 = vld [vmem:[#allocation2 + $0x50] sm:$0xff]
      %v2160 = vld [vmem:[#allocation2 + $0x58] sm:$0xff]
      %v2161 = vld [vmem:[#allocation2 + $0x60] sm:$0xff]
      %v2162 = vld [vmem:[#allocation2 + $0x68] sm:$0xff]
      %v2163 = vld [vmem:[#allocation2 + $0x70] sm:$0xff]
      %v2164 = vld [vmem:[#allocation2 + $0x78] sm:$0xff]
      %s2165 = scalar_lea.vmem %s200, 12
      %v2166 = vld [vmem:[%s2165] sm:$0x3]
      %v2183 = vunpack.c.l.b16 %v2133
      %v2184 = vunpack.c.l.b16 %v2134
      %v2185 = vunpack.c.l.b16 %v2135
      %v2186 = vunpack.c.l.b16 %v2136
      %v2187 = vunpack.c.l.b16 %v2137
      %v2188 = vunpack.c.l.b16 %v2138
      %v2189 = vunpack.c.l.b16 %v2139
      %v2190 = vunpack.c.l.b16 %v2140
      %v2191 = vunpack.c.l.b16 %v2141
      %v2192 = vunpack.c.l.b16 %v2142
      %v2193 = vunpack.c.l.b16 %v2143
      %v2194 = vunpack.c.l.b16 %v2144
      %v2195 = vunpack.c.l.b16 %v2145
      %v2196 = vunpack.c.l.b16 %v2146
      %v2197 = vunpack.c.l.b16 %v2147
      %v2198 = vunpack.c.l.b16 %v2148
      %v2199 = vpack.c.b16 %v2184, %v2183
      %v2200 = vpack.c.b16 %v2186, %v2185
      %v2201 = vpack.c.b16 %v2188, %v2187
      %v2202 = vpack.c.b16 %v2190, %v2189
      %v2203 = vpack.c.b16 %v2192, %v2191
      %v2204 = vpack.c.b16 %v2194, %v2193
      %v2205 = vpack.c.b16 %v2196, %v2195
      %v2206 = vpack.c.b16 %v2198, %v2197
      %v2208 = vsel %vm305, %v2199, 0
      %v2211 = vsel %vm305, %v2200, 0
      %v2214 = vsel %vm305, %v2201, 0
      %v2217 = vsel %vm305, %v2202, 0
      %v2220 = vsel %vm305, %v2203, 0
      %v2223 = vsel %vm305, %v2204, 0
      %v2226 = vsel %vm305, %v2205, 0
      %v2229 = vsel %vm305, %v2206, 0
      %v2232 = vsel %vm330, %v2166, 0
      %2234 = vmatprep.subr.bf16.mxu0 0
      %2235 = vmatpush1.bf16.msra.mxu0 %v2232
      %2236 = vmatprep.subr.bf16.mxu0 0
      %2237 = vmatpush1.bf16.msra.mxu0 0
      %2238 = vmatprep.subr.bf16.mxu0 0
      %2239 = vmatpush1.bf16.msra.mxu0 0
      %2240 = vmatprep.subr.bf16.mxu0 0
      %2241 = vmatpush1.bf16.msra.mxu0 0
      %2242 = vmatprep.subr.bf16.mxu0 0
      %2243 = vmatpush1.bf16.msra.mxu0 0
      %2244 = vmatprep.subr.bf16.mxu0 0
      %2245 = vmatpush1.bf16.msra.mxu0 0
      %2246 = vmatprep.subr.bf16.mxu0 0
      %2247 = vmatpush1.bf16.msra.mxu0 0
      %2248 = vmatprep.subr.bf16.mxu0 0
      %2249 = vmatpush1.bf16.msra.mxu0 0
      %2250 = vmatprep.subr.bf16.mxu0 0
      %2251 = vmatpush1.bf16.msra.mxu0 0
      %2252 = vmatprep.subr.bf16.mxu0 0
      %2253 = vmatpush1.bf16.msra.mxu0 0
      %2254 = vmatprep.subr.bf16.mxu0 0
      %2255 = vmatpush1.bf16.msra.mxu0 0
      %2256 = vmatprep.subr.bf16.mxu0 0
      %2257 = vmatpush1.bf16.msra.mxu0 0
      %2258 = vmatprep.subr.bf16.mxu0 0
      %2259 = vmatpush1.bf16.msra.mxu0 0
      %2260 = vmatprep.subr.bf16.mxu0 0
      %2261 = vmatpush1.bf16.msra.mxu0 0
      %2262 = vmatprep.subr.bf16.mxu0 0
      %2263 = vmatpush1.bf16.msra.mxu0 0
      %2264 = vmatprep.subr.bf16.mxu0 0
      %2265 = vmatpush1.bf16.msra.mxu0 0
      %2266 = vmatprep.mubr.bf16.mxu0 0
      %2267 = vmatmul.mubr.bf16.gmra.mrb[0].mxu0 %v2208
      %v2268 = vpop.f32.mrb[0].mxu0
      %v2269 = vadd.f32 0.0, %v2268
      %v2270 = vpop.f32.mrb[0].mxu0
      %v2271 = vpop.f32.mrb[0].mxu0
      %v2272 = vadd.f32 0.0, %v2271
      %v2273 = vpop.f32.mrb[0].mxu0
      %2274 = vmatprep.mubr.bf16.mxu0 0
      %2275 = vmatmul.mubr.bf16.gmra.mrb[0].mxu0 %v2211
      %v2276 = vpop.f32.mrb[0].mxu0
      %v2277 = vadd.f32 0.0, %v2276
      %v2278 = vpop.f32.mrb[0].mxu0
      %v2279 = vpop.f32.mrb[0].mxu0
      %v2280 = vadd.f32 0.0, %v2279
      %v2281 = vpop.f32.mrb[0].mxu0
      %2282 = vmatprep.mubr.bf16.mxu0 0
      %2283 = vmatmul.mubr.bf16.gmra.mrb[0].mxu0 %v2214
      %v2284 = vpop.f32.mrb[0].mxu0
      %v2285 = vadd.f32 0.0, %v2284
      %v2286 = vpop.f32.mrb[0].mxu0
      %v2287 = vpop.f32.mrb[0].mxu0
      %v2288 = vadd.f32 0.0, %v2287
      %v2289 = vpop.f32.mrb[0].mxu0
      %2290 = vmatprep.mubr.bf16.mxu0 0
      %2291 = vmatmul.mubr.bf16.gmra.mrb[0].mxu0 %v2217
      %v2292 = vpop.f32.mrb[0].mxu0
      %v2293 = vadd.f32 0.0, %v2292
      %v2294 = vpop.f32.mrb[0].mxu0
      %v2295 = vpop.f32.mrb[0].mxu0
      %v2296 = vadd.f32 0.0, %v2295
      %v2297 = vpop.f32.mrb[0].mxu0
      %2298 = vmatprep.mubr.bf16.mxu0 0
      %2299 = vmatmul.mubr.bf16.gmra.mrb[0].mxu0 %v2220
      %v2300 = vpop.f32.mrb[0].mxu0
      %v2301 = vadd.f32 0.0, %v2300
      %v2302 = vpop.f32.mrb[0].mxu0
      %v2303 = vpop.f32.mrb[0].mxu0
      %v2304 = vadd.f32 0.0, %v2303
      %v2305 = vpop.f32.mrb[0].mxu0
      %2306 = vmatprep.mubr.bf16.mxu0 0
      %2307 = vmatmul.mubr.bf16.gmra.mrb[0].mxu0 %v2223
      %v2308 = vpop.f32.mrb[0].mxu0
      %v2309 = vadd.f32 0.0, %v2308
      %v2310 = vpop.f32.mrb[0].mxu0
      %v2311 = vpop.f32.mrb[0].mxu0
      %v2312 = vadd.f32 0.0, %v2311
      %v2313 = vpop.f32.mrb[0].mxu0
      %2314 = vmatprep.mubr.bf16.mxu0 0
      %2315 = vmatmul.mubr.bf16.gmra.mrb[0].mxu0 %v2226
      %v2316 = vpop.f32.mrb[0].mxu0
      %v2317 = vadd.f32 0.0, %v2316
      %v2318 = vpop.f32.mrb[0].mxu0
      %v2319 = vpop.f32.mrb[0].mxu0
      %v2320 = vadd.f32 0.0, %v2319
      %v2321 = vpop.f32.mrb[0].mxu0
      %2322 = vmatprep.mubr.bf16.mxu0 0
      %2323 = vmatmul.mubr.bf16.gmra.mrb[0].mxu0 %v2229
      %v2324 = vpop.f32.mrb[0].mxu0
      %v2325 = vadd.f32 0.0, %v2324
      %v2326 = vpop.f32.mrb[0].mxu0
      %v2327 = vpop.f32.mrb[0].mxu0
      %v2328 = vadd.f32 0.0, %v2327
      %v2329 = vpop.f32.mrb[0].mxu0
      %2330 = vdwg.mxu0
      %v2331 = vadd.f32 %v2149, %v2269
      %v2332 = vadd.f32 %v2150, %v2272
      %v2333 = vadd.f32 %v2151, %v2277
      %v2334 = vadd.f32 %v2152, %v2280
      %v2335 = vadd.f32 %v2153, %v2285
      %v2336 = vadd.f32 %v2154, %v2288
      %v2337 = vadd.f32 %v2155, %v2293
      %v2338 = vadd.f32 %v2156, %v2296
      %v2339 = vadd.f32 %v2157, %v2301
      %v2340 = vadd.f32 %v2158, %v2304
      %v2341 = vadd.f32 %v2159, %v2309
      %v2342 = vadd.f32 %v2160, %v2312
      %v2343 = vadd.f32 %v2161, %v2317
      %v2344 = vadd.f32 %v2162, %v2320
      %v2345 = vadd.f32 %v2163, %v2325
      %v2346 = vadd.f32 %v2164, %v2328
      %2347 = vst [vmem:[#allocation2] sm:$0xff] %v2331
      %2348 = vst [vmem:[#allocation2 + $0x8] sm:$0xff] %v2332
      %2349 = vst [vmem:[#allocation2 + $0x10] sm:$0xff] %v2333
      %2350 = vst [vmem:[#allocation2 + $0x18] sm:$0xff] %v2334
      %2351 = vst [vmem:[#allocation2 + $0x20] sm:$0xff] %v2335
      %2352 = vst [vmem:[#allocation2 + $0x28] sm:$0xff] %v2336
      %2353 = vst [vmem:[#allocation2 + $0x30] sm:$0xff] %v2337
      %2354 = vst [vmem:[#allocation2 + $0x38] sm:$0xff] %v2338
      %2355 = vst [vmem:[#allocation2 + $0x40] sm:$0xff] %v2339
      %2356 = vst [vmem:[#allocation2 + $0x48] sm:$0xff] %v2340
      %2357 = vst [vmem:[#allocation2 + $0x50] sm:$0xff] %v2341
      %2358 = vst [vmem:[#allocation2 + $0x58] sm:$0xff] %v2342
      %2359 = vst [vmem:[#allocation2 + $0x60] sm:$0xff] %v2343
      %2360 = vst [vmem:[#allocation2 + $0x68] sm:$0xff] %v2344
      %2361 = vst [vmem:[#allocation2 + $0x70] sm:$0xff] %v2345
      %2362 = vst [vmem:[#allocation2 + $0x78] sm:$0xff] %v2346
      %v2363 = vld [vmem:[%s2132] sm:$0xf]
      %v2364 = vld [vmem:[%s2132 + $0x4] sm:$0xf]
      %v2365 = vld [vmem:[%s2132 + $0x8] sm:$0x1]
      %v2366 = vld [vmem:[%s2132 + $0xc] sm:$0xf]
      %v2367 = vld [vmem:[%s2132 + $0x10] sm:$0xf]
      %v2368 = vld [vmem:[%s2132 + $0x14] sm:$0x1]
      %v2369 = vld [vmem:[%s2132 + $0x18] sm:$0xf]
      %v2370 = vld [vmem:[%s2132 + $0x1c] sm:$0xf]
      %v2371 = vld [vmem:[%s2132 + $0x20] sm:$0x1]
      %v2372 = vld [vmem:[%s2132 + $0x24] sm:$0xf]
      %v2373 = vld [vmem:[%s2132 + $0x28] sm:$0xf]
      %v2374 = vld [vmem:[%s2132 + $0x2c] sm:$0x1]
      %v2375 = vld [vmem:[%s2132 + $0x30] sm:$0xf]
      %v2376 = vld [vmem:[%s2132 + $0x34] sm:$0xf]
      %v2377 = vld [vmem:[%s2132 + $0x38] sm:$0x1]
      %v2378 = vld [vmem:[%s2132 + $0x3c] sm:$0xf]
      %v2379 = vld [vmem:[%s2132 + $0x40] sm:$0xf]
      %v2380 = vld [vmem:[%s2132 + $0x44] sm:$0x1]
      %v2381 = vld [vmem:[%s2132 + $0x48] sm:$0xf]
      %v2382 = vld [vmem:[%s2132 + $0x4c] sm:$0xf]
      %v2383 = vld [vmem:[%s2132 + $0x50] sm:$0x1]
      %v2384 = vld [vmem:[%s2132 + $0x54] sm:$0xf]
      %v2385 = vld [vmem:[%s2132 + $0x58] sm:$0xf]
      %v2386 = vld [vmem:[%s2132 + $0x5c] sm:$0x1]
      %v2388 = vshrl.u32 %v2363, 16
      %v2390 = vrot.slane %v2388, 4
      %v2391 = vshll.u32 %v2363, 16
      %v2393 = vrot.slane %v2391, 5
      %v2394 = vor.u32 %v2390, %v2393
      %v2395 = vrot.slane %v2394, 4
      %v2397 = vshll.u32 %v2364, 16
      %v2399 = vrot.slane %v2397, 5
      %v2400 = vsel %vm489, %v2395, %v2399
      %v2401 = vshrl.u32 %v2364, 16
      %v2403 = vrot.slane %v2401, 4
      %v2404 = vor.u32 %v2403, %v2399
      %v2405 = vrot.slane %v2404, 4
      %v2407 = vshll.u32 %v2365, 16
      %v2409 = vrot.slane %v2407, 5
      %v2410 = vsel %vm489, %v2405, %v2409
      %v2412 = vshrl.u32 %v2366, 16
      %v2414 = vrot.slane %v2412, 4
      %v2415 = vshll.u32 %v2366, 16
      %v2417 = vrot.slane %v2415, 5
      %v2418 = vor.u32 %v2414, %v2417
      %v2419 = vrot.slane %v2418, 4
      %v2421 = vshll.u32 %v2367, 16
      %v2423 = vrot.slane %v2421, 5
      %v2424 = vsel %vm489, %v2419, %v2423
      %v2425 = vshrl.u32 %v2367, 16
      %v2427 = vrot.slane %v2425, 4
      %v2428 = vor.u32 %v2427, %v2423
      %v2429 = vrot.slane %v2428, 4
      %v2431 = vshll.u32 %v2368, 16
      %v2433 = vrot.slane %v2431, 5
      %v2434 = vsel %vm489, %v2429, %v2433
      %v2436 = vshrl.u32 %v2369, 16
      %v2438 = vrot.slane %v2436, 4
      %v2439 = vshll.u32 %v2369, 16
      %v2441 = vrot.slane %v2439, 5
      %v2442 = vor.u32 %v2438, %v2441
      %v2443 = vrot.slane %v2442, 4
      %v2445 = vshll.u32 %v2370, 16
      %v2447 = vrot.slane %v2445, 5
      %v2448 = vsel %vm489, %v2443, %v2447
      %v2449 = vshrl.u32 %v2370, 16
      %v2451 = vrot.slane %v2449, 4
      %v2452 = vor.u32 %v2451, %v2447
      %v2453 = vrot.slane %v2452, 4
      %v2455 = vshll.u32 %v2371, 16
      %v2457 = vrot.slane %v2455, 5
      %v2458 = vsel %vm489, %v2453, %v2457
      %v2460 = vshrl.u32 %v2372, 16
      %v2462 = vrot.slane %v2460, 4
      %v2463 = vshll.u32 %v2372, 16
      %v2465 = vrot.slane %v2463, 5
      %v2466 = vor.u32 %v2462, %v2465
      %v2467 = vrot.slane %v2466, 4
      %v2469 = vshll.u32 %v2373, 16
      %v2471 = vrot.slane %v2469, 5
      %v2472 = vsel %vm489, %v2467, %v2471
      %v2473 = vshrl.u32 %v2373, 16
      %v2475 = vrot.slane %v2473, 4
      %v2476 = vor.u32 %v2475, %v2471
      %v2477 = vrot.slane %v2476, 4
      %v2479 = vshll.u32 %v2374, 16
      %v2481 = vrot.slane %v2479, 5
      %v2482 = vsel %vm489, %v2477, %v2481
      %v2484 = vshrl.u32 %v2375, 16
      %v2486 = vrot.slane %v2484, 4
      %v2487 = vshll.u32 %v2375, 16
      %v2489 = vrot.slane %v2487, 5
      %v2490 = vor.u32 %v2486, %v2489
      %v2491 = vrot.slane %v2490, 4
      %v2493 = vshll.u32 %v2376, 16
      %v2495 = vrot.slane %v2493, 5
      %v2496 = vsel %vm489, %v2491, %v2495
      %v2497 = vshrl.u32 %v2376, 16
      %v2499 = vrot.slane %v2497, 4
      %v2500 = vor.u32 %v2499, %v2495
      %v2501 = vrot.slane %v2500, 4
      %v2503 = vshll.u32 %v2377, 16
      %v2505 = vrot.slane %v2503, 5
      %v2506 = vsel %vm489, %v2501, %v2505
      %v2508 = vshrl.u32 %v2378, 16
      %v2510 = vrot.slane %v2508, 4
      %v2511 = vshll.u32 %v2378, 16
      %v2513 = vrot.slane %v2511, 5
      %v2514 = vor.u32 %v2510, %v2513
      %v2515 = vrot.slane %v2514, 4
      %v2517 = vshll.u32 %v2379, 16
      %v2519 = vrot.slane %v2517, 5
      %v2520 = vsel %vm489, %v2515, %v2519
      %v2521 = vshrl.u32 %v2379, 16
      %v2523 = vrot.slane %v2521, 4
      %v2524 = vor.u32 %v2523, %v2519
      %v2525 = vrot.slane %v2524, 4
      %v2527 = vshll.u32 %v2380, 16
      %v2529 = vrot.slane %v2527, 5
      %v2530 = vsel %vm489, %v2525, %v2529
      %v2532 = vshrl.u32 %v2381, 16
      %v2534 = vrot.slane %v2532, 4
      %v2535 = vshll.u32 %v2381, 16
      %v2537 = vrot.slane %v2535, 5
      %v2538 = vor.u32 %v2534, %v2537
      %v2539 = vrot.slane %v2538, 4
      %v2541 = vshll.u32 %v2382, 16
      %v2543 = vrot.slane %v2541, 5
      %v2544 = vsel %vm489, %v2539, %v2543
      %v2545 = vshrl.u32 %v2382, 16
      %v2547 = vrot.slane %v2545, 4
      %v2548 = vor.u32 %v2547, %v2543
      %v2549 = vrot.slane %v2548, 4
      %v2551 = vshll.u32 %v2383, 16
      %v2553 = vrot.slane %v2551, 5
      %v2554 = vsel %vm489, %v2549, %v2553
      %v2556 = vshrl.u32 %v2384, 16
      %v2558 = vrot.slane %v2556, 4
      %v2559 = vshll.u32 %v2384, 16
      %v2561 = vrot.slane %v2559, 5
      %v2562 = vor.u32 %v2558, %v2561
      %v2563 = vrot.slane %v2562, 4
      %v2565 = vshll.u32 %v2385, 16
      %v2567 = vrot.slane %v2565, 5
      %v2568 = vsel %vm489, %v2563, %v2567
      %v2569 = vshrl.u32 %v2385, 16
      %v2571 = vrot.slane %v2569, 4
      %v2572 = vor.u32 %v2571, %v2567
      %v2573 = vrot.slane %v2572, 4
      %v2575 = vshll.u32 %v2386, 16
      %v2577 = vrot.slane %v2575, 5
      %v2578 = vsel %vm489, %v2573, %v2577
      %v2579 = vld [vmem:[#allocation2] sm:$0xff]
      %v2580 = vld [vmem:[#allocation2 + $0x8] sm:$0xff]
      %v2581 = vld [vmem:[#allocation2 + $0x10] sm:$0xff]
      %v2582 = vld [vmem:[#allocation2 + $0x18] sm:$0xff]
      %v2583 = vld [vmem:[#allocation2 + $0x20] sm:$0xff]
      %v2584 = vld [vmem:[#allocation2 + $0x28] sm:$0xff]
      %v2585 = vld [vmem:[#allocation2 + $0x30] sm:$0xff]
      %v2586 = vld [vmem:[#allocation2 + $0x38] sm:$0xff]
      %v2587 = vld [vmem:[#allocation2 + $0x40] sm:$0xff]
      %v2588 = vld [vmem:[#allocation2 + $0x48] sm:$0xff]
      %v2589 = vld [vmem:[#allocation2 + $0x50] sm:$0xff]
      %v2590 = vld [vmem:[#allocation2 + $0x58] sm:$0xff]
      %v2591 = vld [vmem:[#allocation2 + $0x60] sm:$0xff]
      %v2592 = vld [vmem:[#allocation2 + $0x68] sm:$0xff]
      %v2593 = vld [vmem:[#allocation2 + $0x70] sm:$0xff]
      %v2594 = vld [vmem:[#allocation2 + $0x78] sm:$0xff]
      %s2595 = scalar_lea.vmem %s200, 14
      %v2596 = vld [vmem:[%s2595] sm:$0x3]
      %v2597 = vunpack.c.l.b16 %v2400
      %v2598 = vunpack.c.l.b16 %v2410
      %v2599 = vunpack.c.l.b16 %v2424
      %v2600 = vunpack.c.l.b16 %v2434
      %v2601 = vunpack.c.l.b16 %v2448
      %v2602 = vunpack.c.l.b16 %v2458
      %v2603 = vunpack.c.l.b16 %v2472
      %v2604 = vunpack.c.l.b16 %v2482
      %v2605 = vunpack.c.l.b16 %v2496
      %v2606 = vunpack.c.l.b16 %v2506
      %v2607 = vunpack.c.l.b16 %v2520
      %v2608 = vunpack.c.l.b16 %v2530
      %v2609 = vunpack.c.l.b16 %v2544
      %v2610 = vunpack.c.l.b16 %v2554
      %v2611 = vunpack.c.l.b16 %v2568
      %v2612 = vunpack.c.l.b16 %v2578
      %v2613 = vpack.c.b16 %v2598, %v2597
      %v2614 = vpack.c.b16 %v2600, %v2599
      %v2615 = vpack.c.b16 %v2602, %v2601
      %v2616 = vpack.c.b16 %v2604, %v2603
      %v2617 = vpack.c.b16 %v2606, %v2605
      %v2618 = vpack.c.b16 %v2608, %v2607
      %v2619 = vpack.c.b16 %v2610, %v2609
      %v2620 = vpack.c.b16 %v2612, %v2611
      %v2622 = vsel %vm305, %v2613, 0
      %v2625 = vsel %vm305, %v2614, 0
      %v2628 = vsel %vm305, %v2615, 0
      %v2631 = vsel %vm305, %v2616, 0
      %v2634 = vsel %vm305, %v2617, 0
      %v2637 = vsel %vm305, %v2618, 0
      %v2640 = vsel %vm305, %v2619, 0
      %v2643 = vsel %vm305, %v2620, 0
      %v2646 = vsel %vm330, %v2596, 0
      %2648 = vmatprep.subr.bf16.mxu0 0
      %2649 = vmatpush1.bf16.msra.mxu0 %v2646
      %2650 = vmatprep.subr.bf16.mxu0 0
      %2651 = vmatpush1.bf16.msra.mxu0 0
      %2652 = vmatprep.subr.bf16.mxu0 0
      %2653 = vmatpush1.bf16.msra.mxu0 0
      %2654 = vmatprep.subr.bf16.mxu0 0
      %2655 = vmatpush1.bf16.msra.mxu0 0
      %2656 = vmatprep.subr.bf16.mxu0 0
      %2657 = vmatpush1.bf16.msra.mxu0 0
      %2658 = vmatprep.subr.bf16.mxu0 0
      %2659 = vmatpush1.bf16.msra.mxu0 0
      %2660 = vmatprep.subr.bf16.mxu0 0
      %2661 = vmatpush1.bf16.msra.mxu0 0
      %2662 = vmatprep.subr.bf16.mxu0 0
      %2663 = vmatpush1.bf16.msra.mxu0 0
      %2664 = vmatprep.subr.bf16.mxu0 0
      %2665 = vmatpush1.bf16.msra.mxu0 0
      %2666 = vmatprep.subr.bf16.mxu0 0
      %2667 = vmatpush1.bf16.msra.mxu0 0
      %2668 = vmatprep.subr.bf16.mxu0 0
      %2669 = vmatpush1.bf16.msra.mxu0 0
      %2670 = vmatprep.subr.bf16.mxu0 0
      %2671 = vmatpush1.bf16.msra.mxu0 0
      %2672 = vmatprep.subr.bf16.mxu0 0
      %2673 = vmatpush1.bf16.msra.mxu0 0
      %2674 = vmatprep.subr.bf16.mxu0 0
      %2675 = vmatpush1.bf16.msra.mxu0 0
      %2676 = vmatprep.subr.bf16.mxu0 0
      %2677 = vmatpush1.bf16.msra.mxu0 0
      %2678 = vmatprep.subr.bf16.mxu0 0
      %2679 = vmatpush1.bf16.msra.mxu0 0
      %2680 = vmatprep.mubr.bf16.mxu0 0
      %2681 = vmatmul.mubr.bf16.gmra.mrb[0].mxu0 %v2622
      %v2682 = vpop.f32.mrb[0].mxu0
      %v2683 = vadd.f32 0.0, %v2682
      %v2684 = vpop.f32.mrb[0].mxu0
      %v2685 = vpop.f32.mrb[0].mxu0
      %v2686 = vadd.f32 0.0, %v2685
      %v2687 = vpop.f32.mrb[0].mxu0
      %2688 = vmatprep.mubr.bf16.mxu0 0
      %2689 = vmatmul.mubr.bf16.gmra.mrb[0].mxu0 %v2625
      %v2690 = vpop.f32.mrb[0].mxu0
      %v2691 = vadd.f32 0.0, %v2690
      %v2692 = vpop.f32.mrb[0].mxu0
      %v2693 = vpop.f32.mrb[0].mxu0
      %v2694 = vadd.f32 0.0, %v2693
      %v2695 = vpop.f32.mrb[0].mxu0
      %2696 = vmatprep.mubr.bf16.mxu0 0
      %2697 = vmatmul.mubr.bf16.gmra.mrb[0].mxu0 %v2628
      %v2698 = vpop.f32.mrb[0].mxu0
      %v2699 = vadd.f32 0.0, %v2698
      %v2700 = vpop.f32.mrb[0].mxu0
      %v2701 = vpop.f32.mrb[0].mxu0
      %v2702 = vadd.f32 0.0, %v2701
      %v2703 = vpop.f32.mrb[0].mxu0
      %2704 = vmatprep.mubr.bf16.mxu0 0
      %2705 = vmatmul.mubr.bf16.gmra.mrb[0].mxu0 %v2631
      %v2706 = vpop.f32.mrb[0].mxu0
      %v2707 = vadd.f32 0.0, %v2706
      %v2708 = vpop.f32.mrb[0].mxu0
      %v2709 = vpop.f32.mrb[0].mxu0
      %v2710 = vadd.f32 0.0, %v2709
      %v2711 = vpop.f32.mrb[0].mxu0
      %2712 = vmatprep.mubr.bf16.mxu0 0
      %2713 = vmatmul.mubr.bf16.gmra.mrb[0].mxu0 %v2634
      %v2714 = vpop.f32.mrb[0].mxu0
      %v2715 = vadd.f32 0.0, %v2714
      %v2716 = vpop.f32.mrb[0].mxu0
      %v2717 = vpop.f32.mrb[0].mxu0
      %v2718 = vadd.f32 0.0, %v2717
      %v2719 = vpop.f32.mrb[0].mxu0
      %2720 = vmatprep.mubr.bf16.mxu0 0
      %2721 = vmatmul.mubr.bf16.gmra.mrb[0].mxu0 %v2637
      %v2722 = vpop.f32.mrb[0].mxu0
      %v2723 = vadd.f32 0.0, %v2722
      %v2724 = vpop.f32.mrb[0].mxu0
      %v2725 = vpop.f32.mrb[0].mxu0
      %v2726 = vadd.f32 0.0, %v2725
      %v2727 = vpop.f32.mrb[0].mxu0
      %2728 = vmatprep.mubr.bf16.mxu0 0
      %2729 = vmatmul.mubr.bf16.gmra.mrb[0].mxu0 %v2640
      %v2730 = vpop.f32.mrb[0].mxu0
      %v2731 = vadd.f32 0.0, %v2730
      %v2732 = vpop.f32.mrb[0].mxu0
      %v2733 = vpop.f32.mrb[0].mxu0
      %v2734 = vadd.f32 0.0, %v2733
      %v2735 = vpop.f32.mrb[0].mxu0
      %2736 = vmatprep.mubr.bf16.mxu0 0
      %2737 = vmatmul.mubr.bf16.gmra.mrb[0].mxu0 %v2643
      %v2738 = vpop.f32.mrb[0].mxu0
      %v2739 = vadd.f32 0.0, %v2738
      %v2740 = vpop.f32.mrb[0].mxu0
      %v2741 = vpop.f32.mrb[0].mxu0
      %v2742 = vadd.f32 0.0, %v2741
      %v2743 = vpop.f32.mrb[0].mxu0
      %2744 = vdwg.mxu0
      %v2745 = vadd.f32 %v2579, %v2683
      %v2746 = vadd.f32 %v2580, %v2686
      %v2747 = vadd.f32 %v2581, %v2691
      %v2748 = vadd.f32 %v2582, %v2694
      %v2749 = vadd.f32 %v2583, %v2699
      %v2750 = vadd.f32 %v2584, %v2702
      %v2751 = vadd.f32 %v2585, %v2707
      %v2752 = vadd.f32 %v2586, %v2710
      %v2753 = vadd.f32 %v2587, %v2715
      %v2754 = vadd.f32 %v2588, %v2718
      %v2755 = vadd.f32 %v2589, %v2723
      %v2756 = vadd.f32 %v2590, %v2726
      %v2757 = vadd.f32 %v2591, %v2731
      %v2758 = vadd.f32 %v2592, %v2734
      %v2759 = vadd.f32 %v2593, %v2739
      %v2760 = vadd.f32 %v2594, %v2742
      %2761 = vst [vmem:[#allocation2] sm:$0xff] %v2745
      %2762 = vst [vmem:[#allocation2 + $0x8] sm:$0xff] %v2746
      %2763 = vst [vmem:[#allocation2 + $0x10] sm:$0xff] %v2747
      %2764 = vst [vmem:[#allocation2 + $0x18] sm:$0xff] %v2748
      %2765 = vst [vmem:[#allocation2 + $0x20] sm:$0xff] %v2749
      %2766 = vst [vmem:[#allocation2 + $0x28] sm:$0xff] %v2750
      %2767 = vst [vmem:[#allocation2 + $0x30] sm:$0xff] %v2751
      %2768 = vst [vmem:[#allocation2 + $0x38] sm:$0xff] %v2752
      %2769 = vst [vmem:[#allocation2 + $0x40] sm:$0xff] %v2753
      %2770 = vst [vmem:[#allocation2 + $0x48] sm:$0xff] %v2754
      %2771 = vst [vmem:[#allocation2 + $0x50] sm:$0xff] %v2755
      %2772 = vst [vmem:[#allocation2 + $0x58] sm:$0xff] %v2756
      %2773 = vst [vmem:[#allocation2 + $0x60] sm:$0xff] %v2757
      %2774 = vst [vmem:[#allocation2 + $0x68] sm:$0xff] %v2758
      %2775 = vst [vmem:[#allocation2 + $0x70] sm:$0xff] %v2759
      %2776 = vst [vmem:[#allocation2 + $0x78] sm:$0xff] %v2760
      %v2777 = vld [vmem:[%s2132] sm:$0xe]
      %v2778 = vld [vmem:[%s2132 + $0x4] sm:$0xf]
      %v2779 = vld [vmem:[%s2132 + $0x8] sm:$0x1]
      %v2780 = vld [vmem:[%s2132 + $0xc] sm:$0xe]
      %v2781 = vld [vmem:[%s2132 + $0x10] sm:$0xf]
      %v2782 = vld [vmem:[%s2132 + $0x14] sm:$0x1]
      %v2783 = vld [vmem:[%s2132 + $0x18] sm:$0xe]
      %v2784 = vld [vmem:[%s2132 + $0x1c] sm:$0xf]
      %v2785 = vld [vmem:[%s2132 + $0x20] sm:$0x1]
      %v2786 = vld [vmem:[%s2132 + $0x24] sm:$0xe]
      %v2787 = vld [vmem:[%s2132 + $0x28] sm:$0xf]
      %v2788 = vld [vmem:[%s2132 + $0x2c] sm:$0x1]
      %v2789 = vld [vmem:[%s2132 + $0x30] sm:$0xe]
      %v2790 = vld [vmem:[%s2132 + $0x34] sm:$0xf]
      %v2791 = vld [vmem:[%s2132 + $0x38] sm:$0x1]
      %v2792 = vld [vmem:[%s2132 + $0x3c] sm:$0xe]
      %v2793 = vld [vmem:[%s2132 + $0x40] sm:$0xf]
      %v2794 = vld [vmem:[%s2132 + $0x44] sm:$0x1]
      %v2795 = vld [vmem:[%s2132 + $0x48] sm:$0xe]
      %v2796 = vld [vmem:[%s2132 + $0x4c] sm:$0xf]
      %v2797 = vld [vmem:[%s2132 + $0x50] sm:$0x1]
      %v2798 = vld [vmem:[%s2132 + $0x54] sm:$0xe]
      %v2799 = vld [vmem:[%s2132 + $0x58] sm:$0xf]
      %v2800 = vld [vmem:[%s2132 + $0x5c] sm:$0x1]
      %v2825 = vrot.slane %v2777, 5
      %v2826 = vrot.slane %v2825, 4
      %v2827 = vrot.slane %v2778, 5
      %v2828 = vsel %vm930, %v2826, %v2827
      %v2829 = vrot.slane %v2827, 4
      %v2830 = vrot.slane %v2779, 5
      %v2831 = vsel %vm930, %v2829, %v2830
      %v2832 = vrot.slane %v2780, 5
      %v2833 = vrot.slane %v2832, 4
      %v2834 = vrot.slane %v2781, 5
      %v2835 = vsel %vm930, %v2833, %v2834
      %v2836 = vrot.slane %v2834, 4
      %v2837 = vrot.slane %v2782, 5
      %v2838 = vsel %vm930, %v2836, %v2837
      %v2839 = vrot.slane %v2783, 5
      %v2840 = vrot.slane %v2839, 4
      %v2841 = vrot.slane %v2784, 5
      %v2842 = vsel %vm930, %v2840, %v2841
      %v2843 = vrot.slane %v2841, 4
      %v2844 = vrot.slane %v2785, 5
      %v2845 = vsel %vm930, %v2843, %v2844
      %v2846 = vrot.slane %v2786, 5
      %v2847 = vrot.slane %v2846, 4
      %v2848 = vrot.slane %v2787, 5
      %v2849 = vsel %vm930, %v2847, %v2848
      %v2850 = vrot.slane %v2848, 4
      %v2851 = vrot.slane %v2788, 5
      %v2852 = vsel %vm930, %v2850, %v2851
      %v2853 = vrot.slane %v2789, 5
      %v2854 = vrot.slane %v2853, 4
      %v2855 = vrot.slane %v2790, 5
      %v2856 = vsel %vm930, %v2854, %v2855
      %v2857 = vrot.slane %v2855, 4
      %v2858 = vrot.slane %v2791, 5
      %v2859 = vsel %vm930, %v2857, %v2858
      %v2860 = vrot.slane %v2792, 5
      %v2861 = vrot.slane %v2860, 4
      %v2862 = vrot.slane %v2793, 5
      %v2863 = vsel %vm930, %v2861, %v2862
      %v2864 = vrot.slane %v2862, 4
      %v2865 = vrot.slane %v2794, 5
      %v2866 = vsel %vm930, %v2864, %v2865
      %v2867 = vrot.slane %v2795, 5
      %v2868 = vrot.slane %v2867, 4
      %v2869 = vrot.slane %v2796, 5
      %v2870 = vsel %vm930, %v2868, %v2869
      %v2871 = vrot.slane %v2869, 4
      %v2872 = vrot.slane %v2797, 5
      %v2873 = vsel %vm930, %v2871, %v2872
      %v2874 = vrot.slane %v2798, 5
      %v2875 = vrot.slane %v2874, 4
      %v2876 = vrot.slane %v2799, 5
      %v2877 = vsel %vm930, %v2875, %v2876
      %v2878 = vrot.slane %v2876, 4
      %v2879 = vrot.slane %v2800, 5
      %v2880 = vsel %vm930, %v2878, %v2879
      %v2881 = vld [vmem:[#allocation2] sm:$0xff]
      %v2882 = vld [vmem:[#allocation2 + $0x8] sm:$0xff]
      %v2883 = vld [vmem:[#allocation2 + $0x10] sm:$0xff]
      %v2884 = vld [vmem:[#allocation2 + $0x18] sm:$0xff]
      %v2885 = vld [vmem:[#allocation2 + $0x20] sm:$0xff]
      %v2886 = vld [vmem:[#allocation2 + $0x28] sm:$0xff]
      %v2887 = vld [vmem:[#allocation2 + $0x30] sm:$0xff]
      %v2888 = vld [vmem:[#allocation2 + $0x38] sm:$0xff]
      %v2889 = vld [vmem:[#allocation2 + $0x40] sm:$0xff]
      %v2890 = vld [vmem:[#allocation2 + $0x48] sm:$0xff]
      %v2891 = vld [vmem:[#allocation2 + $0x50] sm:$0xff]
      %v2892 = vld [vmem:[#allocation2 + $0x58] sm:$0xff]
      %v2893 = vld [vmem:[#allocation2 + $0x60] sm:$0xff]
      %v2894 = vld [vmem:[#allocation2 + $0x68] sm:$0xff]
      %v2895 = vld [vmem:[#allocation2 + $0x70] sm:$0xff]
      %v2896 = vld [vmem:[#allocation2 + $0x78] sm:$0xff]
      %s2897 = scalar_lea.vmem %s200, 16
      %v2898 = vld [vmem:[%s2897] sm:$0x3]
      %v2899 = vunpack.c.l.b16 %v2828
      %v2900 = vunpack.c.l.b16 %v2831
      %v2901 = vunpack.c.l.b16 %v2835
      %v2902 = vunpack.c.l.b16 %v2838
      %v2903 = vunpack.c.l.b16 %v2842
      %v2904 = vunpack.c.l.b16 %v2845
      %v2905 = vunpack.c.l.b16 %v2849
      %v2906 = vunpack.c.l.b16 %v2852
      %v2907 = vunpack.c.l.b16 %v2856
      %v2908 = vunpack.c.l.b16 %v2859
      %v2909 = vunpack.c.l.b16 %v2863
      %v2910 = vunpack.c.l.b16 %v2866
      %v2911 = vunpack.c.l.b16 %v2870
      %v2912 = vunpack.c.l.b16 %v2873
      %v2913 = vunpack.c.l.b16 %v2877
      %v2914 = vunpack.c.l.b16 %v2880
      %v2915 = vpack.c.b16 %v2900, %v2899
      %v2916 = vpack.c.b16 %v2902, %v2901
      %v2917 = vpack.c.b16 %v2904, %v2903
      %v2918 = vpack.c.b16 %v2906, %v2905
      %v2919 = vpack.c.b16 %v2908, %v2907
      %v2920 = vpack.c.b16 %v2910, %v2909
      %v2921 = vpack.c.b16 %v2912, %v2911
      %v2922 = vpack.c.b16 %v2914, %v2913
      %v2924 = vsel %vm305, %v2915, 0
      %v2927 = vsel %vm305, %v2916, 0
      %v2930 = vsel %vm305, %v2917, 0
      %v2933 = vsel %vm305, %v2918, 0
      %v2936 = vsel %vm305, %v2919, 0
      %v2939 = vsel %vm305, %v2920, 0
      %v2942 = vsel %vm305, %v2921, 0
      %v2945 = vsel %vm305, %v2922, 0
      %v2948 = vsel %vm330, %v2898, 0
      %2950 = vmatprep.subr.bf16.mxu0 0
      %2951 = vmatpush1.bf16.msra.mxu0 %v2948
      %2952 = vmatprep.subr.bf16.mxu0 0
      %2953 = vmatpush1.bf16.msra.mxu0 0
      %2954 = vmatprep.subr.bf16.mxu0 0
      %2955 = vmatpush1.bf16.msra.mxu0 0
      %2956 = vmatprep.subr.bf16.mxu0 0
      %2957 = vmatpush1.bf16.msra.mxu0 0
      %2958 = vmatprep.subr.bf16.mxu0 0
      %2959 = vmatpush1.bf16.msra.mxu0 0
      %2960 = vmatprep.subr.bf16.mxu0 0
      %2961 = vmatpush1.bf16.msra.mxu0 0
      %2962 = vmatprep.subr.bf16.mxu0 0
      %2963 = vmatpush1.bf16.msra.mxu0 0
      %2964 = vmatprep.subr.bf16.mxu0 0
      %2965 = vmatpush1.bf16.msra.mxu0 0
      %2966 = vmatprep.subr.bf16.mxu0 0
      %2967 = vmatpush1.bf16.msra.mxu0 0
      %2968 = vmatprep.subr.bf16.mxu0 0
      %2969 = vmatpush1.bf16.msra.mxu0 0
      %2970 = vmatprep.subr.bf16.mxu0 0
      %2971 = vmatpush1.bf16.msra.mxu0 0
      %2972 = vmatprep.subr.bf16.mxu0 0
      %2973 = vmatpush1.bf16.msra.mxu0 0
      %2974 = vmatprep.subr.bf16.mxu0 0
      %2975 = vmatpush1.bf16.msra.mxu0 0
      %2976 = vmatprep.subr.bf16.mxu0 0
      %2977 = vmatpush1.bf16.msra.mxu0 0
      %2978 = vmatprep.subr.bf16.mxu0 0
      %2979 = vmatpush1.bf16.msra.mxu0 0
      %2980 = vmatprep.subr.bf16.mxu0 0
      %2981 = vmatpush1.bf16.msra.mxu0 0
      %2982 = vmatprep.mubr.bf16.mxu0 0
      %2983 = vmatmul.mubr.bf16.gmra.mrb[0].mxu0 %v2924
      %v2984 = vpop.f32.mrb[0].mxu0
      %v2985 = vadd.f32 0.0, %v2984
      %v2986 = vpop.f32.mrb[0].mxu0
      %v2987 = vpop.f32.mrb[0].mxu0
      %v2988 = vadd.f32 0.0, %v2987
      %v2989 = vpop.f32.mrb[0].mxu0
      %2990 = vmatprep.mubr.bf16.mxu0 0
      %2991 = vmatmul.mubr.bf16.gmra.mrb[0].mxu0 %v2927
      %v2992 = vpop.f32.mrb[0].mxu0
      %v2993 = vadd.f32 0.0, %v2992
      %v2994 = vpop.f32.mrb[0].mxu0
      %v2995 = vpop.f32.mrb[0].mxu0
      %v2996 = vadd.f32 0.0, %v2995
      %v2997 = vpop.f32.mrb[0].mxu0
      %2998 = vmatprep.mubr.bf16.mxu0 0
      %2999 = vmatmul.mubr.bf16.gmra.mrb[0].mxu0 %v2930
      %v3000 = vpop.f32.mrb[0].mxu0
      %v3001 = vadd.f32 0.0, %v3000
      %v3002 = vpop.f32.mrb[0].mxu0
      %v3003 = vpop.f32.mrb[0].mxu0
      %v3004 = vadd.f32 0.0, %v3003
      %v3005 = vpop.f32.mrb[0].mxu0
      %3006 = vmatprep.mubr.bf16.mxu0 0
      %3007 = vmatmul.mubr.bf16.gmra.mrb[0].mxu0 %v2933
      %v3008 = vpop.f32.mrb[0].mxu0
      %v3009 = vadd.f32 0.0, %v3008
      %v3010 = vpop.f32.mrb[0].mxu0
      %v3011 = vpop.f32.mrb[0].mxu0
      %v3012 = vadd.f32 0.0, %v3011
      %v3013 = vpop.f32.mrb[0].mxu0
      %3014 = vmatprep.mubr.bf16.mxu0 0
      %3015 = vmatmul.mubr.bf16.gmra.mrb[0].mxu0 %v2936
      %v3016 = vpop.f32.mrb[0].mxu0
      %v3017 = vadd.f32 0.0, %v3016
      %v3018 = vpop.f32.mrb[0].mxu0
      %v3019 = vpop.f32.mrb[0].mxu0
      %v3020 = vadd.f32 0.0, %v3019
      %v3021 = vpop.f32.mrb[0].mxu0
      %3022 = vmatprep.mubr.bf16.mxu0 0
      %3023 = vmatmul.mubr.bf16.gmra.mrb[0].mxu0 %v2939
      %v3024 = vpop.f32.mrb[0].mxu0
      %v3025 = vadd.f32 0.0, %v3024
      %v3026 = vpop.f32.mrb[0].mxu0
      %v3027 = vpop.f32.mrb[0].mxu0
      %v3028 = vadd.f32 0.0, %v3027
      %v3029 = vpop.f32.mrb[0].mxu0
      %3030 = vmatprep.mubr.bf16.mxu0 0
      %3031 = vmatmul.mubr.bf16.gmra.mrb[0].mxu0 %v2942
      %v3032 = vpop.f32.mrb[0].mxu0
      %v3033 = vadd.f32 0.0, %v3032
      %v3034 = vpop.f32.mrb[0].mxu0
      %v3035 = vpop.f32.mrb[0].mxu0
      %v3036 = vadd.f32 0.0, %v3035
      %v3037 = vpop.f32.mrb[0].mxu0
      %3038 = vmatprep.mubr.bf16.mxu0 0
      %3039 = vmatmul.mubr.bf16.gmra.mrb[0].mxu0 %v2945
      %v3040 = vpop.f32.mrb[0].mxu0
      %v3041 = vadd.f32 0.0, %v3040
      %v3042 = vpop.f32.mrb[0].mxu0
      %v3043 = vpop.f32.mrb[0].mxu0
      %v3044 = vadd.f32 0.0, %v3043
      %v3045 = vpop.f32.mrb[0].mxu0
      %3046 = vdwg.mxu0
      %v3047 = vadd.f32 %v2881, %v2985
      %v3048 = vadd.f32 %v2882, %v2988
      %v3049 = vadd.f32 %v2883, %v2993
      %v3050 = vadd.f32 %v2884, %v2996
      %v3051 = vadd.f32 %v2885, %v3001
      %v3052 = vadd.f32 %v2886, %v3004
      %v3053 = vadd.f32 %v2887, %v3009
      %v3054 = vadd.f32 %v2888, %v3012
      %v3055 = vadd.f32 %v2889, %v3017
      %v3056 = vadd.f32 %v2890, %v3020
      %v3057 = vadd.f32 %v2891, %v3025
      %v3058 = vadd.f32 %v2892, %v3028
      %v3059 = vadd.f32 %v2893, %v3033
      %v3060 = vadd.f32 %v2894, %v3036
      %v3061 = vadd.f32 %v2895, %v3041
      %v3062 = vadd.f32 %v2896, %v3044
      %3063 = vst [vmem:[#allocation2] sm:$0xff] %v3047
      %3064 = vst [vmem:[#allocation2 + $0x8] sm:$0xff] %v3048
      %3065 = vst [vmem:[#allocation2 + $0x10] sm:$0xff] %v3049
      %3066 = vst [vmem:[#allocation2 + $0x18] sm:$0xff] %v3050
      %3067 = vst [vmem:[#allocation2 + $0x20] sm:$0xff] %v3051
      %3068 = vst [vmem:[#allocation2 + $0x28] sm:$0xff] %v3052
      %3069 = vst [vmem:[#allocation2 + $0x30] sm:$0xff] %v3053
      %3070 = vst [vmem:[#allocation2 + $0x38] sm:$0xff] %v3054
      %3071 = vst [vmem:[#allocation2 + $0x40] sm:$0xff] %v3055
      %3072 = vst [vmem:[#allocation2 + $0x48] sm:$0xff] %v3056
      %3073 = vst [vmem:[#allocation2 + $0x50] sm:$0xff] %v3057
      %3074 = vst [vmem:[#allocation2 + $0x58] sm:$0xff] %v3058
      %3075 = vst [vmem:[#allocation2 + $0x60] sm:$0xff] %v3059
      %3076 = vst [vmem:[#allocation2 + $0x68] sm:$0xff] %v3060
      %3077 = vst [vmem:[#allocation2 + $0x70] sm:$0xff] %v3061
      %3078 = vst [vmem:[#allocation2 + $0x78] sm:$0xff] %v3062
      %v3079 = vld [vmem:[#allocation2] sm:$0xff]
      %v3080 = vld [vmem:[#allocation2 + $0x8] sm:$0xff]
      %v3081 = vld [vmem:[#allocation2 + $0x10] sm:$0xff]
      %v3082 = vld [vmem:[#allocation2 + $0x18] sm:$0xff]
      %v3083 = vld [vmem:[#allocation2 + $0x20] sm:$0xff]
      %v3084 = vld [vmem:[#allocation2 + $0x28] sm:$0xff]
      %v3085 = vld [vmem:[#allocation2 + $0x30] sm:$0xff]
      %v3086 = vld [vmem:[#allocation2 + $0x38] sm:$0xff]
      %v3087 = vld [vmem:[#allocation2 + $0x40] sm:$0xff]
      %v3088 = vld [vmem:[#allocation2 + $0x48] sm:$0xff]
      %v3089 = vld [vmem:[#allocation2 + $0x50] sm:$0xff]
      %v3090 = vld [vmem:[#allocation2 + $0x58] sm:$0xff]
      %v3091 = vld [vmem:[#allocation2 + $0x60] sm:$0xff]
      %v3092 = vld [vmem:[#allocation2 + $0x68] sm:$0xff]
      %v3093 = vld [vmem:[#allocation2 + $0x70] sm:$0xff]
      %v3094 = vld [vmem:[#allocation2 + $0x78] sm:$0xff]
      %v3095 = vmax.f32 %v3079, 0.0
      %v3096 = vmax.f32 %v3080, 0.0
      %v3097 = vmax.f32 %v3081, 0.0
      %v3098 = vmax.f32 %v3082, 0.0
      %v3099 = vmax.f32 %v3083, 0.0
      %v3100 = vmax.f32 %v3084, 0.0
      %v3101 = vmax.f32 %v3085, 0.0
      %v3102 = vmax.f32 %v3086, 0.0
      %v3103 = vmax.f32 %v3087, 0.0
      %v3104 = vmax.f32 %v3088, 0.0
      %v3105 = vmax.f32 %v3089, 0.0
      %v3106 = vmax.f32 %v3090, 0.0
      %v3107 = vmax.f32 %v3091, 0.0
      %v3108 = vmax.f32 %v3092, 0.0
      %v3109 = vmax.f32 %v3093, 0.0
      %v3110 = vmax.f32 %v3094, 0.0
      %3111 = vst [vmem:[%s213] sm:$0xff] %v3095
      %3112 = vst [vmem:[%s213 + $0x8] sm:$0xff] %v3096
      %3113 = vst [vmem:[%s213 + $0x10] sm:$0xff] %v3097
      %3114 = vst [vmem:[%s213 + $0x18] sm:$0xff] %v3098
      %3115 = vst [vmem:[%s213 + $0x20] sm:$0xff] %v3099
      %3116 = vst [vmem:[%s213 + $0x28] sm:$0xff] %v3100
      %3117 = vst [vmem:[%s213 + $0x30] sm:$0xff] %v3101
      %3118 = vst [vmem:[%s213 + $0x38] sm:$0xff] %v3102
      %3119 = vst [vmem:[%s213 + $0x40] sm:$0xff] %v3103
      %3120 = vst [vmem:[%s213 + $0x48] sm:$0xff] %v3104
      %3121 = vst [vmem:[%s213 + $0x50] sm:$0xff] %v3105
      %3122 = vst [vmem:[%s213 + $0x58] sm:$0xff] %v3106
      %3123 = vst [vmem:[%s213 + $0x60] sm:$0xff] %v3107
      %3124 = vst [vmem:[%s213 + $0x68] sm:$0xff] %v3108
      %3125 = vst [vmem:[%s213 + $0x70] sm:$0xff] %v3109
      %3126 = vst [vmem:[%s213 + $0x78] sm:$0xff] %v3110
      %s3127 = smul.u32 8, %s20
      %p3128 = scmp.lt.s32.totalorder %s18, 1
      %s3129 = scalar_select %p3128, %s18, 1
      %p3130 = scmp.lt.s32.totalorder %s3127, 15
      %s3131 = scalar_select %p3130, %s3127, 15
      %p3132 = scmp.lt.s32.totalorder %s19, 0
      %s3133 = scalar_select %p3132, %s19, 0
      %s3134 = smul.addr %s3131, 2
      %s3135 = sadd.s32 %s3133, %s3134
      %s3136 = smul.addr %s3129, 32
      %s3137 = sadd.s32 %s3135, %s3136
      %s3138 = smul.addr %s3137, 8
      %s3139 = scalar_lea.vmem %s2, %s3138
      // Predicated region
      $region29: #{conv_bn_relu_2d.1} parent=27 // pred_check
        %p3140 = pneg %p108
      $region30: #{conv_bn_relu_2d.1} parent=27 // pred_check_branch
        %3142 = sbr.rel (%p3140) target = $region32
      $region31: #{conv_bn_relu_2d.1} parent=27 // pred_region
        %s3143 = smul.u32 8, %s20
      $region32: #{conv_bn_relu_2d.1} parent=27 // pred_fallthru
        _
    $region28: #{conv_bn_relu_2d.1} parent=5 // pred_fallthru
      _
    %p3144 = scmp.le.s32.totalorder 2, %s8
    // Predicated region
    $region33: #{conv_bn_relu_2d.1} parent=5 // pred_check
      %p3145 = pneg %p3144
    $region34: #{conv_bn_relu_2d.1} parent=5 // pred_check_branch
      %3147 = sbr.rel (%p3145) target = $region36
    $region35: #{conv_bn_relu_2d.1} parent=5 // pred_region
      %s3148 = ssub.s32 %s8, 2
      // Predicated region
      $region37: #{conv_bn_relu_2d.1} parent=35 // pred_check
        %p3149 = pneg %p114
      $region38: #{conv_bn_relu_2d.1} parent=35 // pred_check_branch
        %3151 = sbr.rel (%p3149) target = $region40
      $region39: #{conv_bn_relu_2d.1} parent=35 // pred_region
        %s3152 = smul.u32 8, %s23
        %p3153 = scmp.lt.s32.totalorder %s21, 1
        %s3154 = scalar_select %p3153, %s21, 1
        %p3155 = scmp.lt.s32.totalorder %s3152, 15
        %s3156 = scalar_select %p3155, %s3152, 15
        %p3157 = scmp.lt.s32.totalorder %s22, 0
        %s3158 = scalar_select %p3157, %s22, 0
        %s3159 = smul.addr %s3156, 2
        %s3160 = sadd.s32 %s3158, %s3159
        %s3161 = smul.addr %s3154, 32
        %s3162 = sadd.s32 %s3160, %s3161
        %s3163 = smul.addr %s3162, 8
        %s3164 = scalar_lea.vmem %s2, %s3163
      $region40: #{conv_bn_relu_2d.1} parent=35 // pred_fallthru
        _
    $region36: #{conv_bn_relu_2d.1} parent=5 // pred_fallthru
      _
  $region6: #{conv_bn_relu_2d.1} parent=0 // loop_footer
    %s12 = sadd.s32 1, %s8
  $region7: #{conv_bn_relu_2d.1} parent=0 // loop_footer_branch
    %7 = sbr.rel target = $region3
  $region8: #{conv_bn_relu_2d.1} parent=0 // loop_exit
    _

</llo_original>
